<compile_context>
chip_gen: v7x
topology: tpu7x:2x2x1
jax: 0.10.0
libtpu: 0.0.40
codegen_flags: <defaults>
</compile_context>

<pallas_src>
import jax
import jax.numpy as jnp
from jax.experimental import pallas as pl
from jax.experimental.pallas import tpu as pltpu

LANE = 128


def _round_up(x, m):
    return (x + m - 1) // m * m


# ------------------------------ fused Pallas kernel ------------------------------

def _simkd_fused_kernel(x_ref, w1_ref, b1_ref, w2_ref, b2_ref, w3_ref, b3_ref,
                        clsw_ref, clsb_ref,
                        feat_ref, pred_ref,
                        hpad_ref):
    # x_ref   : (Bt, H, W, Cin_p)   bf16  (source features, channel-padded)
    # w1_ref  : (Cin_p, Mid_p)      bf16  (BN1 folded)
    # w2_ref  : (9, Mid_p, Mid_p)   bf16  (BN2 folded, one weight per 3x3 tap)
    # w3_ref  : (Mid_p, Out_p)      bf16  (BN3 folded)
    # clsw_ref: (Out_p, Ncls_p)     bf16  (reused teacher classifier)
    # b*_ref  : (1, C)              f32   biases
    # feat_ref: (Bt, H, W, Out_p)   feat_dtype  trans_feat_s tile
    # pred_ref: (Bt, 1, Ncls_p)     f32   classifier logits tile
    # hpad_ref: (Bt, H+2, W+2, Mid_p) bf16 VMEM scratch (zero-padded h, persistent)
    Bt, H, W, Cin = x_ref.shape
    mid = w1_ref.shape[1]
    Cout = w3_ref.shape[1]
    M = Bt * H * W

    # ---- stage 1: 1x1 conv (BN folded into weights) + bias + ReLU ------------
    x = x_ref[...].reshape(M, Cin)
    h1 = jnp.dot(x, w1_ref[...], preferred_element_type=jnp.float32)
    h1 = jnp.maximum(h1 + b1_ref[...], 0.0)

    # ---- stage 2: 3x3 conv (pad=1) via padded scratch + 9 tap matmuls --------
    # Only the border strips of the persistent scratch are (re)zeroed each step;
    # the interior is fully overwritten below, so no full memset is needed and
    # correctness does not depend on which core ran step 0.
    zrow = jnp.zeros((Bt, 1, W + 2, mid), hpad_ref.dtype)
    zcol = jnp.zeros((Bt, H, 1, mid), hpad_ref.dtype)
    hpad_ref[:, pl.ds(0, 1), :, :] = zrow
    hpad_ref[:, pl.ds(H + 1, 1), :, :] = zrow
    hpad_ref[:, pl.ds(1, H), pl.ds(0, 1), :] = zcol
    hpad_ref[:, pl.ds(1, H), pl.ds(W + 1, 1), :] = zcol
    hpad_ref[:, pl.ds(1, H), pl.ds(1, W), :] = (
        h1.astype(hpad_ref.dtype).reshape(Bt, H, W, mid))

    # Tap-accumulated matmuls (no materialized im2col, no col scratch).
    # K = mid_p per matmul; for realistic SimKD channel counts (mid >= 512) this
    # fully fills the 256-deep MXU on v6e/v7x as well.
    acc = jnp.zeros((M, mid), jnp.float32)
    for ky in range(3):
        for kx in range(3):
            tap = ky * 3 + kx
            lhs = hpad_ref[:, pl.ds(ky, H), pl.ds(kx, W), :].reshape(M, mid)
            acc = acc + jnp.dot(lhs, w2_ref[tap],
                                preferred_element_type=jnp.float32)
    h2 = jnp.maximum(acc + b2_ref[...], 0.0)

    # ---- stage 3: 1x1 conv (BN folded) + bias + ReLU -------------------------
    y = jnp.dot(h2.astype(w3_ref.dtype), w3_ref[...],
                preferred_element_type=jnp.float32)
    y = jnp.maximum(y + b3_ref[...], 0.0)
    feat_ref[...] = y.reshape(Bt, H, W, Cout).astype(feat_ref.dtype)

    # ---- fused global-avg-pool + reused teacher classifier (bf16 MXU, f32 acc)
    pooled = jnp.mean(y.reshape(Bt, H * W, Cout), axis=1)            # (Bt, Cout)
    pred = jnp.dot(pooled.astype(clsw_ref.dtype), clsw_ref[...],
                   preferred_element_type=jnp.float32) + clsb_ref[...]
    pred_ref[...] = pred.reshape(pred_ref.shape)


# --------------------------------- glue (JAX) ---------------------------------

def fold_bn(gamma, beta, mean, var, eps=1e-5):
    scale = gamma / jnp.sqrt(var + eps)
    return scale, beta - mean * scale


def adaptive_avg_pool_nhwc(x, out_hw):
    """F.adaptive_avg_pool2d equivalent for divisible sizes (NHWC)."""
    B, H, W, C = x.shape
    oh = ow = out_hw
    if oh == H and ow == W:
        return x
    # TODO(synk): non-divisible adaptive pooling (uneven bins) not implemented.
    assert H % oh == 0 and W % ow == 0
    kh, kw = H // oh, W // ow
    return x.reshape(B, oh, kh, ow, kw, C).mean(axis=(2, 4))


def _vmem_budget_bytes():
    """~75% of physical VMEM (48 MiB on v7x, ~96 MiB on v5e/v6e)."""
    try:
        cap = pltpu.get_tpu_info().vmem_capacity_bytes
    except Exception:
        cap = 64 * 1024 * 1024   # conservative (v7x per-core) fallback
    return int(cap * 3 // 4)


def _estimate_vmem_bytes(Bt, H, W, cin_p, mid_p, out_p, ncls_p, feat_bytes):
    """Per-step VMEM estimate: double-buffered I/O tiles, single-buffered
    weights, padded scratch, and the large f32 intermediates (h1/acc/y)."""
    M = Bt * H * W
    x_tile = 2 * M * cin_p * 2                                  # bf16, 2 bufs
    feat_tile = 2 * M * out_p * feat_bytes                      # 2 bufs
    pred_tile = 2 * Bt * ncls_p * 4
    weights = ((cin_p * mid_p + 9 * mid_p * mid_p + mid_p * out_p
                + out_p * ncls_p) * 2                           # bf16, 1 buf
               + (2 * mid_p + out_p + ncls_p) * 4)              # f32 biases
    hpad = Bt * (H + 2) * (W + 2) * mid_p * 2                   # bf16 scratch
    interm = M * (2 * mid_p + out_p) * 4                        # h1 / acc / y f32
    return x_tile + feat_tile + pred_tile + weights + hpad + interm


def _pick_batch_tile(B, H, W, cin_p, mid_p, out_p, ncls_p, feat_bytes, budget):
    """Largest batch-tile divisor of B that fits the VMEM budget, preferring
    tiles that leave an even grid length >= 2 (pipelining + v7x megacore)."""
    divisors = [d for d in range(1, B + 1) if B % d == 0]
    fitting = [d for d in divisors
               if _estimate_vmem_bytes(d, H, W, cin_p, mid_p, out_p, ncls_p,
                                       feat_bytes) <= budget] or [1]
    even_multi = [d for d in fitting if (B // d) >= 2 and (B // d) % 2 == 0]
    multi = [d for d in fitting if (B // d) >= 2]
    pool = even_multi or multi or fitting
    return max(pool)


def simkd_forward(params, feat_s_nchw, feat_t_nchw, *,
                  feat_dtype=jnp.float32, return_nchw=True):
    # NCHW -> NHWC
    feat_s = jnp.transpose(feat_s_nchw, (0, 2, 3, 1))
    feat_t = jnp.transpose(feat_t_nchw, (0, 2, 3, 1))
    s_H, t_H = feat_s.shape[1], feat_t.shape[1]
    if s_H > t_H:
        source, target = adaptive_avg_pool_nhwc(feat_s, t_H), feat_t
    else:
        source, target = feat_s, adaptive_avg_pool_nhwc(feat_t, s_H)
    trans_feat_t = target

    B, H, W, s_n = source.shape
    mid = params["w1"].shape[1]
    t_n = params["w3"].shape[1]
    ncls = params["cls_w"].shape[1]

    # lane-dense (128-aligned) channel sizes (no-op pads for real SimKD shapes)
    cin_p = _round_up(s_n, LANE)
    mid_p = _round_up(mid, LANE)
    out_p = _round_up(t_n, LANE)
    ncls_p = _round_up(ncls, LANE)

    # Fold inference-mode BN into the conv weights, zero-pad channels, bf16 cast.
    s1, b1 = fold_bn(*params["bn1"])
    s2, b2 = fold_bn(*params["bn2"])
    s3, b3 = fold_bn(*params["bn3"])

    w1 = jnp.pad(params["w1"] * s1[None, :],
                 ((0, cin_p - s_n), (0, mid_p - mid))).astype(jnp.bfloat16)
    w2 = jnp.pad(params["w2"] * s2[None, None, None, :],
                 ((0, 0), (0, 0), (0, mid_p - mid), (0, mid_p - mid)))
    w2 = w2.reshape(9, mid_p, mid_p).astype(jnp.bfloat16)     # per-tap weights
    w3 = jnp.pad(params["w3"] * s3[None, :],
                 ((0, mid_p - mid), (0, out_p - t_n))).astype(jnp.bfloat16)
    clsw = jnp.pad(params["cls_w"],
                   ((0, out_p - t_n), (0, ncls_p - ncls))).astype(jnp.bfloat16)
    b1p = jnp.pad(b1, (0, mid_p - mid)).reshape(1, mid_p)
    b2p = jnp.pad(b2, (0, mid_p - mid)).reshape(1, mid_p)
    b3p = jnp.pad(b3, (0, out_p - t_n)).reshape(1, out_p)
    clsb = jnp.pad(params["cls_b"], (0, ncls_p - ncls)).reshape(1, ncls_p)

    # Fused channel-pad + bf16 cast of the source (pad skipped when aligned).
    x = source.astype(jnp.bfloat16)
    if cin_p != s_n:
        x = jnp.pad(x, ((0, 0), (0, 0), (0, 0), (0, cin_p - s_n)))

    feat_bytes = jnp.dtype(feat_dtype).itemsize
    budget = _vmem_budget_bytes()
    Bt = _pick_batch_tile(B, H, W, cin_p, mid_p, out_p, ncls_p, feat_bytes, budget)
    grid = (B // Bt,)

    flops = int(2 * B * H * W * (cin_p * mid_p + 9 * mid_p * mid_p + mid_p * out_p)
                + 2 * B * out_p * ncls_p)
    bytes_accessed = int(
        B * H * W * cin_p * 2                                            # source bf16
        + (cin_p * mid_p + 9 * mid_p * mid_p + mid_p * out_p
           + out_p * ncls_p) * 2                                         # bf16 weights
        + (2 * mid_p + out_p + ncls_p) * 4                               # f32 biases
        + B * H * W * out_p * feat_bytes + B * ncls_p * 4)               # outputs

    const_spec = lambda shape: pl.BlockSpec(                    # single-buffered
        shape, lambda b: tuple(0 for _ in shape), pipeline_mode=pl.Buffered(1))

    feat_p, pred_p = pl.pallas_call(
        _simkd_fused_kernel,
        out_shape=(jax.ShapeDtypeStruct((B, H, W, out_p), feat_dtype),
                   jax.ShapeDtypeStruct((B, 1, ncls_p), jnp.float32)),
        grid=grid,
        in_specs=[
            pl.BlockSpec((Bt, H, W, cin_p), lambda b: (b, 0, 0, 0)),
            const_spec((cin_p, mid_p)),
            const_spec((1, mid_p)),
            const_spec((9, mid_p, mid_p)),
            const_spec((1, mid_p)),
            const_spec((mid_p, out_p)),
            const_spec((1, out_p)),
            const_spec((out_p, ncls_p)),
            const_spec((1, ncls_p)),
        ],
        out_specs=(pl.BlockSpec((Bt, H, W, out_p), lambda b: (b, 0, 0, 0)),
                   pl.BlockSpec((Bt, 1, ncls_p), lambda b: (b, 0, 0))),
        scratch_shapes=[
            pltpu.VMEM((Bt, H + 2, W + 2, mid_p), jnp.bfloat16),   # zero-padded h
        ],
        compiler_params=pltpu.CompilerParams(
            dimension_semantics=("parallel",),
            vmem_limit_bytes=budget),
        cost_estimate=pl.CostEstimate(flops=flops, transcendentals=0,
                                      bytes_accessed=bytes_accessed),
    )(x, w1, b1p, w2, b2p, w3, b3p, clsw, clsb)

    trans_feat_s = feat_p if out_p == t_n else feat_p[..., :t_n]
    pred_feat_s = pred_p[:, 0, :ncls]

    if return_nchw:     # match the PyTorch module's NCHW outputs
        return (jnp.transpose(trans_feat_s, (0, 3, 1, 2)),
                jnp.transpose(trans_feat_t, (0, 3, 1, 2)),
                pred_feat_s)
    # NHWC path: skips two full-tensor HBM transpose passes for layout-agnostic
    # consumers (e.g. the SimKD MSE loss).
    return trans_feat_s, trans_feat_t, pred_feat_s


# ----------------------------- pure-JAX reference ------------------------------

def _ref_conv3x3(x, w):  # x: (B,H,W,Cin), w: (3,3,Cin,Cout)
    B, H, W, _ = x.shape
    xp = jnp.pad(x, ((0, 0), (1, 1), (1, 1), (0, 0)))
    out = 0.0
    for ky in range(3):
        for kx in range(3):
            out = out + jnp.einsum("bhwc,cd->bhwd",
                                   xp[:, ky:ky + H, kx:kx + W, :], w[ky, kx])
    return out


def simkd_reference(params, feat_s_nchw, feat_t_nchw):
    feat_s = jnp.transpose(feat_s_nchw, (0, 2, 3, 1))
    feat_t = jnp.transpose(feat_t_nchw, (0, 2, 3, 1))
    s_H, t_H = feat_s.shape[1], feat_t.shape[1]
    if s_H > t_H:
        source, target = adaptive_avg_pool_nhwc(feat_s, t_H), feat_t
    else:
        source, target = feat_s, adaptive_avg_pool_nhwc(feat_t, s_H)
    s1, b1 = fold_bn(*params["bn1"])
    h = jnp.maximum(jnp.einsum("bhwc,cd->bhwd", source, params["w1"]) * s1 + b1, 0.0)
    s2, b2 = fold_bn(*params["bn2"])
    h = jnp.maximum(_ref_conv3x3(h, params["w2"]) * s2 + b2, 0.0)
    s3, b3 = fold_bn(*params["bn3"])
    ts = jnp.maximum(jnp.einsum("bhwc,cd->bhwd", h, params["w3"]) * s3 + b3, 0.0)
    pred = jnp.mean(ts, axis=(1, 2)) @ params["cls_w"] + params["cls_b"]
    return (jnp.transpose(ts, (0, 3, 1, 2)),
            jnp.transpose(target, (0, 3, 1, 2)),
            pred)


# ------------------------------------ main ------------------------------------

if __name__ == "__main__":
    # Small shapes consistent with SimKD: student feature (B, s_n, 16, 16),
    # teacher feature (B, t_n, 8, 8), factor=2, teacher classifier t_n -> 10.
    B, s_n, t_n, factor, num_classes = 2, 16, 32, 2, 10
    s_H, t_H = 16, 8
    mid = t_n // factor

    key = jax.random.PRNGKey(0)
    ks = jax.random.split(key, 16)

    def bn_params(k, c):
        kg, kb, km, kv = jax.random.split(k, 4)
        gamma = 0.5 + jax.random.uniform(kg, (c,), jnp.float32)
        beta = 0.1 * jax.random.normal(kb, (c,), jnp.float32)
        mean = 0.1 * jax.random.normal(km, (c,), jnp.float32)
        var = 0.5 + jax.random.uniform(kv, (c,), jnp.float32)
        return (gamma, beta, mean, var)

    params = {
        # conv1x1(s_n, mid): PyTorch weight (mid, s_n, 1, 1) -> stored as (s_n, mid)
        "w1": 0.1 * jax.random.normal(ks[0], (s_n, mid), jnp.float32),
        "bn1": bn_params(ks[1], mid),
        # conv3x3(mid, mid): PyTorch weight (mid, mid, 3, 3) -> stored as (3, 3, mid, mid)
        "w2": 0.1 * jax.random.normal(ks[2], (3, 3, mid, mid), jnp.float32),
        "bn2": bn_params(ks[3], mid),
        # conv1x1(mid, t_n) -> stored as (mid, t_n)
        "w3": 0.1 * jax.random.normal(ks[4], (mid, t_n), jnp.float32),
        "bn3": bn_params(ks[5], t_n),
        # cls_t ~ nn.Linear(t_n, num_classes): stored transposed as (t_n, num_classes)
        "cls_w": 0.1 * jax.random.normal(ks[6], (t_n, num_classes), jnp.float32),
        "cls_b": 0.1 * jax.random.normal(ks[7], (num_classes,), jnp.float32),
    }

    feat_s = jax.random.normal(ks[8], (B, s_n, s_H, s_H), jnp.float32)  # NCHW
    feat_t = jax.random.normal(ks[9], (B, t_n, t_H, t_H), jnp.float32)  # NCHW

    trans_feat_s, trans_feat_t, pred_feat_s = jax.block_until_ready(
        jax.jit(simkd_forward)(params, feat_s, feat_t))

    # correctness vs. pure-JAX (f32) reference; kernel uses bf16 MXU matmuls
    ref_s, ref_t, ref_p = simkd_reference(params, feat_s, feat_t)
    assert trans_feat_s.shape == (B, t_n, t_H, t_H)
    assert trans_feat_t.shape == (B, t_n, t_H, t_H)
    assert pred_feat_s.shape == (B, num_classes)
    assert jnp.allclose(trans_feat_s, ref_s, atol=2e-2, rtol=2e-2)
    assert jnp.allclose(trans_feat_t, ref_t, atol=2e-2, rtol=2e-2)
    assert jnp.allclose(pred_feat_s, ref_p, atol=2e-2, rtol=2e-2)

    print("KERNEL_OK")
</pallas_src>

<mosaic_0001>
module attributes {stable_mosaic.version = 11 : i64} {
  func.func @_simkd_fused_kernel(%arg0: i32, %arg1: memref<1x8x8x128xbf16, #tpu.memory_space<vmem>>, %arg2: memref<128x128xbf16, #tpu.memory_space<vmem>>, %arg3: memref<1x128xf32, #tpu.memory_space<vmem>>, %arg4: memref<9x128x128xbf16, #tpu.memory_space<vmem>>, %arg5: memref<1x128xf32, #tpu.memory_space<vmem>>, %arg6: memref<128x128xbf16, #tpu.memory_space<vmem>>, %arg7: memref<1x128xf32, #tpu.memory_space<vmem>>, %arg8: memref<128x128xbf16, #tpu.memory_space<vmem>>, %arg9: memref<1x128xf32, #tpu.memory_space<vmem>>, %arg10: memref<1x8x8x128xf32, #tpu.memory_space<vmem>>, %arg11: memref<1x1x128xf32, #tpu.memory_space<vmem>>, %arg12: memref<1x10x10x128xbf16, #tpu.memory_space<vmem>>) attributes {dimension_semantics = [#tpu.dimension_semantics<parallel>], iteration_bounds = array<i64: 2>, scalar_prefetch = 0 : i64, scratch_operands = 1 : i64, tpu.core_type = #tpu.core_type<tc>, window_params = [{transform_indices = @transform_0, window_bounds = array<i64: 1, 8, 8, 128>}, {pipeline_mode = #tpu.pipeline_mode<synchronous>, transform_indices = @transform_1, window_bounds = array<i64: 128, 128>}, {pipeline_mode = #tpu.pipeline_mode<synchronous>, transform_indices = @transform_2, window_bounds = array<i64: 1, 128>}, {pipeline_mode = #tpu.pipeline_mode<synchronous>, transform_indices = @transform_3, window_bounds = array<i64: 9, 128, 128>}, {pipeline_mode = #tpu.pipeline_mode<synchronous>, transform_indices = @transform_4, window_bounds = array<i64: 1, 128>}, {pipeline_mode = #tpu.pipeline_mode<synchronous>, transform_indices = @transform_5, window_bounds = array<i64: 128, 128>}, {pipeline_mode = #tpu.pipeline_mode<synchronous>, transform_indices = @transform_6, window_bounds = array<i64: 1, 128>}, {pipeline_mode = #tpu.pipeline_mode<synchronous>, transform_indices = @transform_7, window_bounds = array<i64: 128, 128>}, {pipeline_mode = #tpu.pipeline_mode<synchronous>, transform_indices = @transform_8, window_bounds = array<i64: 1, 128>}, {transform_indices = @transform_9, window_bounds = array<i64: 1, 8, 8, 128>}, {transform_indices = @transform_10, window_bounds = array<i64: 1, 1, 128>}]} {
    %c0 = arith.constant 0 : index
    %c0_0 = arith.constant 0 : index
    %c0_1 = arith.constant 0 : index
    %c0_2 = arith.constant 0 : index
    %0 = vector.load %arg1[%c0, %c0_0, %c0_1, %c0_2] : memref<1x8x8x128xbf16, #tpu.memory_space<vmem>>, vector<1x8x8x128xbf16>
    %1 = vector.shape_cast %0 : vector<1x8x8x128xbf16> to vector<64x128xbf16>
    %c0_3 = arith.constant 0 : index
    %c0_4 = arith.constant 0 : index
    %2 = vector.load %arg2[%c0_3, %c0_4] : memref<128x128xbf16, #tpu.memory_space<vmem>>, vector<128x128xbf16>
    %cst = arith.constant dense<0.000000e+00> : vector<64x128xf32>
    %3 = tpu.matmul %1, %2, %cst {dimension_numbers = #tpu.dot_dimension_numbers<[1], [0], [0], [1], [0, 0, 1, 1], [], []>} : vector<64x128xbf16>, vector<128x128xbf16>, vector<64x128xf32> -> vector<64x128xf32>
    %c0_5 = arith.constant 0 : index
    %c0_6 = arith.constant 0 : index
    %4 = vector.load %arg3[%c0_5, %c0_6] : memref<1x128xf32, #tpu.memory_space<vmem>>, vector<1x128xf32>
    %5 = vector.broadcast %4 : vector<1x128xf32> to vector<64x128xf32>
    %6 = arith.addf %3, %5 : vector<64x128xf32>
    %cst_7 = arith.constant 0.000000e+00 : f32
    %7 = vector.broadcast %cst_7 : f32 to vector<64x128xf32>
    %8 = arith.maximumf %6, %7 : vector<64x128xf32>
    %cst_8 = arith.constant 0.000000e+00 : bf16
    %9 = vector.broadcast %cst_8 : bf16 to vector<1x1x10x128xbf16>
    %cst_9 = arith.constant 0.000000e+00 : bf16
    %10 = vector.broadcast %cst_9 : bf16 to vector<1x8x1x128xbf16>
    %c0_10 = arith.constant 0 : index
    %c0_11 = arith.constant 0 : index
    %c0_12 = arith.constant 0 : index
    %c0_13 = arith.constant 0 : index
    %11 = vector.load %arg12[%c0_10, %c0_11, %c0_12, %c0_13] : memref<1x10x10x128xbf16, #tpu.memory_space<vmem>>, vector<1x1x10x128xbf16>
    tpu.vector_store %arg12[%c0_10, %c0_11, %c0_12, %c0_13], %9 {strides = array<i32>} : memref<1x10x10x128xbf16, #tpu.memory_space<vmem>>, vector<1x1x10x128xbf16>,
    %c0_14 = arith.constant 0 : index
    %c9 = arith.constant 9 : index
    %c0_15 = arith.constant 0 : index
    %c0_16 = arith.constant 0 : index
    %12 = vector.load %arg12[%c0_14, %c9, %c0_15, %c0_16] : memref<1x10x10x128xbf16, #tpu.memory_space<vmem>>, vector<1x1x10x128xbf16>
    tpu.vector_store %arg12[%c0_14, %c9, %c0_15, %c0_16], %9 {strides = array<i32>} : memref<1x10x10x128xbf16, #tpu.memory_space<vmem>>, vector<1x1x10x128xbf16>,
    %c0_17 = arith.constant 0 : index
    %c1 = arith.constant 1 : index
    %c0_18 = arith.constant 0 : index
    %c0_19 = arith.constant 0 : index
    %13 = vector.load %arg12[%c0_17, %c1, %c0_18, %c0_19] : memref<1x10x10x128xbf16, #tpu.memory_space<vmem>>, vector<1x8x1x128xbf16>
    tpu.vector_store %arg12[%c0_17, %c1, %c0_18, %c0_19], %10 {strides = array<i32>} : memref<1x10x10x128xbf16, #tpu.memory_space<vmem>>, vector<1x8x1x128xbf16>,
    %c0_20 = arith.constant 0 : index
    %c1_21 = arith.constant 1 : index
    %c9_22 = arith.constant 9 : index
    %c0_23 = arith.constant 0 : index
    %14 = vector.load %arg12[%c0_20, %c1_21, %c9_22, %c0_23] : memref<1x10x10x128xbf16, #tpu.memory_space<vmem>>, vector<1x8x1x128xbf16>
    tpu.vector_store %arg12[%c0_20, %c1_21, %c9_22, %c0_23], %10 {strides = array<i32>} : memref<1x10x10x128xbf16, #tpu.memory_space<vmem>>, vector<1x8x1x128xbf16>,
    %15 = arith.truncf %8 : vector<64x128xf32> to vector<64x128xbf16>
    %16 = vector.shape_cast %15 : vector<64x128xbf16> to vector<1x8x8x128xbf16>
    %c0_24 = arith.constant 0 : index
    %c1_25 = arith.constant 1 : index
    %c1_26 = arith.constant 1 : index
    %c0_27 = arith.constant 0 : index
    %17 = vector.load %arg12[%c0_24, %c1_25, %c1_26, %c0_27] : memref<1x10x10x128xbf16, #tpu.memory_space<vmem>>, vector<1x8x8x128xbf16>
    tpu.vector_store %arg12[%c0_24, %c1_25, %c1_26, %c0_27], %16 {strides = array<i32>} : memref<1x10x10x128xbf16, #tpu.memory_space<vmem>>, vector<1x8x8x128xbf16>,
    %cst_28 = arith.constant 0.000000e+00 : f32
    %18 = vector.broadcast %cst_28 : f32 to vector<64x128xf32>
    %c0_29 = arith.constant 0 : index
    %c0_30 = arith.constant 0 : index
    %c0_31 = arith.constant 0 : index
    %c0_32 = arith.constant 0 : index
    %19 = vector.load %arg12[%c0_29, %c0_30, %c0_31, %c0_32] : memref<1x10x10x128xbf16, #tpu.memory_space<vmem>>, vector<1x8x8x128xbf16>
    %20 = vector.shape_cast %19 : vector<1x8x8x128xbf16> to vector<64x128xbf16>
    %c0_33 = arith.constant 0 : index
    %c0_34 = arith.constant 0 : index
    %c0_35 = arith.constant 0 : index
    %21 = vector.load %arg4[%c0_33, %c0_34, %c0_35] : memref<9x128x128xbf16, #tpu.memory_space<vmem>>, vector<1x128x128xbf16>
    %22 = vector.shape_cast %21 : vector<1x128x128xbf16> to vector<128x128xbf16>
    %cst_36 = arith.constant dense<0.000000e+00> : vector<64x128xf32>
    %23 = tpu.matmul %20, %22, %cst_36 {dimension_numbers = #tpu.dot_dimension_numbers<[1], [0], [0], [1], [0, 0, 1, 1], [], []>} : vector<64x128xbf16>, vector<128x128xbf16>, vector<64x128xf32> -> vector<64x128xf32>
    %24 = arith.addf %18, %23 : vector<64x128xf32>
    %c0_37 = arith.constant 0 : index
    %c0_38 = arith.constant 0 : index
    %c1_39 = arith.constant 1 : index
    %c0_40 = arith.constant 0 : index
    %25 = vector.load %arg12[%c0_37, %c0_38, %c1_39, %c0_40] : memref<1x10x10x128xbf16, #tpu.memory_space<vmem>>, vector<1x8x8x128xbf16>
    %26 = vector.shape_cast %25 : vector<1x8x8x128xbf16> to vector<64x128xbf16>
    %c1_41 = arith.constant 1 : index
    %c0_42 = arith.constant 0 : index
    %c0_43 = arith.constant 0 : index
    %27 = vector.load %arg4[%c1_41, %c0_42, %c0_43] : memref<9x128x128xbf16, #tpu.memory_space<vmem>>, vector<1x128x128xbf16>
    %28 = vector.shape_cast %27 : vector<1x128x128xbf16> to vector<128x128xbf16>
    %cst_44 = arith.constant dense<0.000000e+00> : vector<64x128xf32>
    %29 = tpu.matmul %26, %28, %cst_44 {dimension_numbers = #tpu.dot_dimension_numbers<[1], [0], [0], [1], [0, 0, 1, 1], [], []>} : vector<64x128xbf16>, vector<128x128xbf16>, vector<64x128xf32> -> vector<64x128xf32>
    %30 = arith.addf %24, %29 : vector<64x128xf32>
    %c0_45 = arith.constant 0 : index
    %c0_46 = arith.constant 0 : index
    %c2 = arith.constant 2 : index
    %c0_47 = arith.constant 0 : index
    %31 = vector.load %arg12[%c0_45, %c0_46, %c2, %c0_47] : memref<1x10x10x128xbf16, #tpu.memory_space<vmem>>, vector<1x8x8x128xbf16>
    %32 = vector.shape_cast %31 : vector<1x8x8x128xbf16> to vector<64x128xbf16>
    %c2_48 = arith.constant 2 : index
    %c0_49 = arith.constant 0 : index
    %c0_50 = arith.constant 0 : index
    %33 = vector.load %arg4[%c2_48, %c0_49, %c0_50] : memref<9x128x128xbf16, #tpu.memory_space<vmem>>, vector<1x128x128xbf16>
    %34 = vector.shape_cast %33 : vector<1x128x128xbf16> to vector<128x128xbf16>
    %cst_51 = arith.constant dense<0.000000e+00> : vector<64x128xf32>
    %35 = tpu.matmul %32, %34, %cst_51 {dimension_numbers = #tpu.dot_dimension_numbers<[1], [0], [0], [1], [0, 0, 1, 1], [], []>} : vector<64x128xbf16>, vector<128x128xbf16>, vector<64x128xf32> -> vector<64x128xf32>
    %36 = arith.addf %30, %35 : vector<64x128xf32>
    %c0_52 = arith.constant 0 : index
    %c1_53 = arith.constant 1 : index
    %c0_54 = arith.constant 0 : index
    %c0_55 = arith.constant 0 : index
    %37 = vector.load %arg12[%c0_52, %c1_53, %c0_54, %c0_55] : memref<1x10x10x128xbf16, #tpu.memory_space<vmem>>, vector<1x8x8x128xbf16>
    %38 = vector.shape_cast %37 : vector<1x8x8x128xbf16> to vector<64x128xbf16>
    %c3 = arith.constant 3 : index
    %c0_56 = arith.constant 0 : index
    %c0_57 = arith.constant 0 : index
    %39 = vector.load %arg4[%c3, %c0_56, %c0_57] : memref<9x128x128xbf16, #tpu.memory_space<vmem>>, vector<1x128x128xbf16>
    %40 = vector.shape_cast %39 : vector<1x128x128xbf16> to vector<128x128xbf16>
    %cst_58 = arith.constant dense<0.000000e+00> : vector<64x128xf32>
    %41 = tpu.matmul %38, %40, %cst_58 {dimension_numbers = #tpu.dot_dimension_numbers<[1], [0], [0], [1], [0, 0, 1, 1], [], []>} : vector<64x128xbf16>, vector<128x128xbf16>, vector<64x128xf32> -> vector<64x128xf32>
    %42 = arith.addf %36, %41 : vector<64x128xf32>
    %c0_59 = arith.constant 0 : index
    %c1_60 = arith.constant 1 : index
    %c1_61 = arith.constant 1 : index
    %c0_62 = arith.constant 0 : index
    %43 = vector.load %arg12[%c0_59, %c1_60, %c1_61, %c0_62] : memref<1x10x10x128xbf16, #tpu.memory_space<vmem>>, vector<1x8x8x128xbf16>
    %44 = vector.shape_cast %43 : vector<1x8x8x128xbf16> to vector<64x128xbf16>
    %c4 = arith.constant 4 : index
    %c0_63 = arith.constant 0 : index
    %c0_64 = arith.constant 0 : index
    %45 = vector.load %arg4[%c4, %c0_63, %c0_64] : memref<9x128x128xbf16, #tpu.memory_space<vmem>>, vector<1x128x128xbf16>
    %46 = vector.shape_cast %45 : vector<1x128x128xbf16> to vector<128x128xbf16>
    %cst_65 = arith.constant dense<0.000000e+00> : vector<64x128xf32>
    %47 = tpu.matmul %44, %46, %cst_65 {dimension_numbers = #tpu.dot_dimension_numbers<[1], [0], [0], [1], [0, 0, 1, 1], [], []>} : vector<64x128xbf16>, vector<128x128xbf16>, vector<64x128xf32> -> vector<64x128xf32>
    %48 = arith.addf %42, %47 : vector<64x128xf32>
    %c0_66 = arith.constant 0 : index
    %c1_67 = arith.constant 1 : index
    %c2_68 = arith.constant 2 : index
    %c0_69 = arith.constant 0 : index
    %49 = vector.load %arg12[%c0_66, %c1_67, %c2_68, %c0_69] : memref<1x10x10x128xbf16, #tpu.memory_space<vmem>>, vector<1x8x8x128xbf16>
    %50 = vector.shape_cast %49 : vector<1x8x8x128xbf16> to vector<64x128xbf16>
    %c5 = arith.constant 5 : index
    %c0_70 = arith.constant 0 : index
    %c0_71 = arith.constant 0 : index
    %51 = vector.load %arg4[%c5, %c0_70, %c0_71] : memref<9x128x128xbf16, #tpu.memory_space<vmem>>, vector<1x128x128xbf16>
    %52 = vector.shape_cast %51 : vector<1x128x128xbf16> to vector<128x128xbf16>
    %cst_72 = arith.constant dense<0.000000e+00> : vector<64x128xf32>
    %53 = tpu.matmul %50, %52, %cst_72 {dimension_numbers = #tpu.dot_dimension_numbers<[1], [0], [0], [1], [0, 0, 1, 1], [], []>} : vector<64x128xbf16>, vector<128x128xbf16>, vector<64x128xf32> -> vector<64x128xf32>
    %54 = arith.addf %48, %53 : vector<64x128xf32>
    %c0_73 = arith.constant 0 : index
    %c2_74 = arith.constant 2 : index
    %c0_75 = arith.constant 0 : index
    %c0_76 = arith.constant 0 : index
    %55 = vector.load %arg12[%c0_73, %c2_74, %c0_75, %c0_76] : memref<1x10x10x128xbf16, #tpu.memory_space<vmem>>, vector<1x8x8x128xbf16>
    %56 = vector.shape_cast %55 : vector<1x8x8x128xbf16> to vector<64x128xbf16>
    %c6 = arith.constant 6 : index
    %c0_77 = arith.constant 0 : index
    %c0_78 = arith.constant 0 : index
    %57 = vector.load %arg4[%c6, %c0_77, %c0_78] : memref<9x128x128xbf16, #tpu.memory_space<vmem>>, vector<1x128x128xbf16>
    %58 = vector.shape_cast %57 : vector<1x128x128xbf16> to vector<128x128xbf16>
    %cst_79 = arith.constant dense<0.000000e+00> : vector<64x128xf32>
    %59 = tpu.matmul %56, %58, %cst_79 {dimension_numbers = #tpu.dot_dimension_numbers<[1], [0], [0], [1], [0, 0, 1, 1], [], []>} : vector<64x128xbf16>, vector<128x128xbf16>, vector<64x128xf32> -> vector<64x128xf32>
    %60 = arith.addf %54, %59 : vector<64x128xf32>
    %c0_80 = arith.constant 0 : index
    %c2_81 = arith.constant 2 : index
    %c1_82 = arith.constant 1 : index
    %c0_83 = arith.constant 0 : index
    %61 = vector.load %arg12[%c0_80, %c2_81, %c1_82, %c0_83] : memref<1x10x10x128xbf16, #tpu.memory_space<vmem>>, vector<1x8x8x128xbf16>
    %62 = vector.shape_cast %61 : vector<1x8x8x128xbf16> to vector<64x128xbf16>
    %c7 = arith.constant 7 : index
    %c0_84 = arith.constant 0 : index
    %c0_85 = arith.constant 0 : index
    %63 = vector.load %arg4[%c7, %c0_84, %c0_85] : memref<9x128x128xbf16, #tpu.memory_space<vmem>>, vector<1x128x128xbf16>
    %64 = vector.shape_cast %63 : vector<1x128x128xbf16> to vector<128x128xbf16>
    %cst_86 = arith.constant dense<0.000000e+00> : vector<64x128xf32>
    %65 = tpu.matmul %62, %64, %cst_86 {dimension_numbers = #tpu.dot_dimension_numbers<[1], [0], [0], [1], [0, 0, 1, 1], [], []>} : vector<64x128xbf16>, vector<128x128xbf16>, vector<64x128xf32> -> vector<64x128xf32>
    %66 = arith.addf %60, %65 : vector<64x128xf32>
    %c0_87 = arith.constant 0 : index
    %c2_88 = arith.constant 2 : index
    %c2_89 = arith.constant 2 : index
    %c0_90 = arith.constant 0 : index
    %67 = vector.load %arg12[%c0_87, %c2_88, %c2_89, %c0_90] : memref<1x10x10x128xbf16, #tpu.memory_space<vmem>>, vector<1x8x8x128xbf16>
    %68 = vector.shape_cast %67 : vector<1x8x8x128xbf16> to vector<64x128xbf16>
    %c8 = arith.constant 8 : index
    %c0_91 = arith.constant 0 : index
    %c0_92 = arith.constant 0 : index
    %69 = vector.load %arg4[%c8, %c0_91, %c0_92] : memref<9x128x128xbf16, #tpu.memory_space<vmem>>, vector<1x128x128xbf16>
    %70 = vector.shape_cast %69 : vector<1x128x128xbf16> to vector<128x128xbf16>
    %cst_93 = arith.constant dense<0.000000e+00> : vector<64x128xf32>
    %71 = tpu.matmul %68, %70, %cst_93 {dimension_numbers = #tpu.dot_dimension_numbers<[1], [0], [0], [1], [0, 0, 1, 1], [], []>} : vector<64x128xbf16>, vector<128x128xbf16>, vector<64x128xf32> -> vector<64x128xf32>
    %72 = arith.addf %66, %71 : vector<64x128xf32>
    %c0_94 = arith.constant 0 : index
    %c0_95 = arith.constant 0 : index
    %73 = vector.load %arg5[%c0_94, %c0_95] : memref<1x128xf32, #tpu.memory_space<vmem>>, vector<1x128xf32>
    %74 = vector.broadcast %73 : vector<1x128xf32> to vector<64x128xf32>
    %75 = arith.addf %72, %74 : vector<64x128xf32>
    %cst_96 = arith.constant 0.000000e+00 : f32
    %76 = vector.broadcast %cst_96 : f32 to vector<64x128xf32>
    %77 = arith.maximumf %75, %76 : vector<64x128xf32>
    %78 = arith.truncf %77 : vector<64x128xf32> to vector<64x128xbf16>
    %c0_97 = arith.constant 0 : index
    %c0_98 = arith.constant 0 : index
    %79 = vector.load %arg6[%c0_97, %c0_98] : memref<128x128xbf16, #tpu.memory_space<vmem>>, vector<128x128xbf16>
    %cst_99 = arith.constant dense<0.000000e+00> : vector<64x128xf32>
    %80 = tpu.matmul %78, %79, %cst_99 {dimension_numbers = #tpu.dot_dimension_numbers<[1], [0], [0], [1], [0, 0, 1, 1], [], []>} : vector<64x128xbf16>, vector<128x128xbf16>, vector<64x128xf32> -> vector<64x128xf32>
    %c0_100 = arith.constant 0 : index
    %c0_101 = arith.constant 0 : index
    %81 = vector.load %arg7[%c0_100, %c0_101] : memref<1x128xf32, #tpu.memory_space<vmem>>, vector<1x128xf32>
    %82 = vector.broadcast %81 : vector<1x128xf32> to vector<64x128xf32>
    %83 = arith.addf %80, %82 : vector<64x128xf32>
    %cst_102 = arith.constant 0.000000e+00 : f32
    %84 = vector.broadcast %cst_102 : f32 to vector<64x128xf32>
    %85 = arith.maximumf %83, %84 : vector<64x128xf32>
    %86 = vector.shape_cast %85 : vector<64x128xf32> to vector<1x8x8x128xf32>
    %c0_103 = arith.constant 0 : index
    %c0_104 = arith.constant 0 : index
    %c0_105 = arith.constant 0 : index
    %c0_106 = arith.constant 0 : index
    %87 = vector.load %arg10[%c0_103, %c0_104, %c0_105, %c0_106] : memref<1x8x8x128xf32, #tpu.memory_space<vmem>>, vector<1x8x8x128xf32>
    tpu.vector_store %arg10[%c0_103, %c0_104, %c0_105, %c0_106], %86 {strides = array<i32>} : memref<1x8x8x128xf32, #tpu.memory_space<vmem>>, vector<1x8x8x128xf32>,
    %88 = vector.shape_cast %85 : vector<64x128xf32> to vector<1x64x128xf32>
    %cst_107 = arith.constant dense<0.000000e+00> : vector<1x128xf32>
    %89 = vector.multi_reduction <add>, %88, %cst_107 [1] : vector<1x64x128xf32> to vector<1x128xf32>
    %cst_108 = arith.constant 6.400000e+01 : f32
    %90 = vector.broadcast %cst_108 : f32 to vector<1x128xf32>
    %91 = arith.divf %89, %90 : vector<1x128xf32>
    %92 = arith.truncf %91 : vector<1x128xf32> to vector<1x128xbf16>
    %c0_109 = arith.constant 0 : index
    %c0_110 = arith.constant 0 : index
    %93 = vector.load %arg8[%c0_109, %c0_110] : memref<128x128xbf16, #tpu.memory_space<vmem>>, vector<128x128xbf16>
    %cst_111 = arith.constant dense<0.000000e+00> : vector<1x128xf32>
    %94 = tpu.matmul %92, %93, %cst_111 {dimension_numbers = #tpu.dot_dimension_numbers<[1], [0], [0], [1], [0, 0, 1, 1], [], []>} : vector<1x128xbf16>, vector<128x128xbf16>, vector<1x128xf32> -> vector<1x128xf32>
    %c0_112 = arith.constant 0 : index
    %c0_113 = arith.constant 0 : index
    %95 = vector.load %arg9[%c0_112, %c0_113] : memref<1x128xf32, #tpu.memory_space<vmem>>, vector<1x128xf32>
    %96 = arith.addf %94, %95 : vector<1x128xf32>
    %97 = vector.shape_cast %96 : vector<1x128xf32> to vector<1x1x128xf32>
    %c0_114 = arith.constant 0 : index
    %c0_115 = arith.constant 0 : index
    %c0_116 = arith.constant 0 : index
    %98 = vector.load %arg11[%c0_114, %c0_115, %c0_116] : memref<1x1x128xf32, #tpu.memory_space<vmem>>, vector<1x1x128xf32>
    tpu.vector_store %arg11[%c0_114, %c0_115, %c0_116], %97 {strides = array<i32>} : memref<1x1x128xf32, #tpu.memory_space<vmem>>, vector<1x1x128xf32>,
    return
  }
  func.func @transform_0(%arg0: i32) -> (i32, i32, i32, i32) {
    %c0_i32 = arith.constant 0 : i32
    %c0_i32_0 = arith.constant 0 : i32
    %c0_i32_1 = arith.constant 0 : i32
    %c0_i32_2 = arith.constant 0 : i32
    return %arg0, %c0_i32, %c0_i32_0, %c0_i32_1 : i32, i32, i32, i32
  }
  func.func @transform_1(%arg0: i32) -> (i32, i32) {
    %c0_i32 = arith.constant 0 : i32
    %c0_i32_0 = arith.constant 0 : i32
    %c0_i32_1 = arith.constant 0 : i32
    return %c0_i32, %c0_i32_0 : i32, i32
  }
  func.func @transform_2(%arg0: i32) -> (i32, i32) {
    %c0_i32 = arith.constant 0 : i32
    %c0_i32_0 = arith.constant 0 : i32
    %c0_i32_1 = arith.constant 0 : i32
    return %c0_i32, %c0_i32_0 : i32, i32
  }
  func.func @transform_3(%arg0: i32) -> (i32, i32, i32) {
    %c0_i32 = arith.constant 0 : i32
    %c0_i32_0 = arith.constant 0 : i32
    %c0_i32_1 = arith.constant 0 : i32
    %c0_i32_2 = arith.constant 0 : i32
    return %c0_i32, %c0_i32_0, %c0_i32_1 : i32, i32, i32
  }
  func.func @transform_4(%arg0: i32) -> (i32, i32) {
    %c0_i32 = arith.constant 0 : i32
    %c0_i32_0 = arith.constant 0 : i32
    %c0_i32_1 = arith.constant 0 : i32
    return %c0_i32, %c0_i32_0 : i32, i32
  }
  func.func @transform_5(%arg0: i32) -> (i32, i32) {
    %c0_i32 = arith.constant 0 : i32
    %c0_i32_0 = arith.constant 0 : i32
    %c0_i32_1 = arith.constant 0 : i32
    return %c0_i32, %c0_i32_0 : i32, i32
  }
  func.func @transform_6(%arg0: i32) -> (i32, i32) {
    %c0_i32 = arith.constant 0 : i32
    %c0_i32_0 = arith.constant 0 : i32
    %c0_i32_1 = arith.constant 0 : i32
    return %c0_i32, %c0_i32_0 : i32, i32
  }
  func.func @transform_7(%arg0: i32) -> (i32, i32) {
    %c0_i32 = arith.constant 0 : i32
    %c0_i32_0 = arith.constant 0 : i32
    %c0_i32_1 = arith.constant 0 : i32
    return %c0_i32, %c0_i32_0 : i32, i32
  }
  func.func @transform_8(%arg0: i32) -> (i32, i32) {
    %c0_i32 = arith.constant 0 : i32
    %c0_i32_0 = arith.constant 0 : i32
    %c0_i32_1 = arith.constant 0 : i32
    return %c0_i32, %c0_i32_0 : i32, i32
  }
  func.func @transform_9(%arg0: i32) -> (i32, i32, i32, i32) {
    %c0_i32 = arith.constant 0 : i32
    %c0_i32_0 = arith.constant 0 : i32
    %c0_i32_1 = arith.constant 0 : i32
    %c0_i32_2 = arith.constant 0 : i32
    return %arg0, %c0_i32, %c0_i32_0, %c0_i32_1 : i32, i32, i32, i32
  }
  func.func @transform_10(%arg0: i32) -> (i32, i32, i32) {
    %c0_i32 = arith.constant 0 : i32
    %c0_i32_0 = arith.constant 0 : i32
    %c0_i32_1 = arith.constant 0 : i32
    return %arg0, %c0_i32, %c0_i32_0 : i32, i32, i32
  }
}

</mosaic_0001>

<llo_original>
// kernel: simkd_forward.1
$region0: #{simkd_forward.1}
  #allocation0 [shape = 'u32[]', space=smem, size = 0x4, offset = 0x4, fixed_abs, tag = 'smem constant byte address 0x4 - core index']
  #allocation1 [shape = 'u32[144,128]{1,0:T(1,128)}', space=vmem, size = 0x12000, scoped, tag = 'internal scratch']
  #allocation2 [shape = 'bf16[1,10,10,128]{3,2,1,0:T(8,128)(2,1)}', space=vmem, size = 0xa000, scoped, tag = 'scratch operand']
  %s0 = inlined_call_operand.vmem [shape: bf16[2,8,8,128], index: 0, kind: input, shape index: {}]
  %s1 = inlined_call_operand.vmem [shape: bf16[128,128], index: 1, kind: input, shape index: {}]
  %s2 = inlined_call_operand.vmem [shape: f32[1,128], index: 2, kind: input, shape index: {}]
  %s3 = inlined_call_operand.vmem [shape: bf16[9,128,128], index: 3, kind: input, shape index: {}]
  %s4 = inlined_call_operand.vmem [shape: f32[1,128], index: 4, kind: input, shape index: {}]
  %s5 = inlined_call_operand.vmem [shape: bf16[128,128], index: 5, kind: input, shape index: {}]
  %s6 = inlined_call_operand.vmem [shape: f32[1,128], index: 6, kind: input, shape index: {}]
  %s7 = inlined_call_operand.vmem [shape: bf16[128,128], index: 7, kind: input, shape index: {}]
  %s8 = inlined_call_operand.vmem [shape: f32[1,128], index: 8, kind: input, shape index: {}]
  %s9 = inlined_call_operand.vmem [shape: f32[2,8,8,128], index: 9, kind: output, shape index: {0}]
  %s10 = inlined_call_operand.hbm [shape: f32[2,1,128], index: 10, kind: output, shape index: {1}]
  %11 = xla_tuple %s9, %s10
  %s12 = sld [smem:[#allocation0]]
  $region77: #{simkd_forward.1} parent=0
    _
  %s14 = ssub.s32 1, %s12
  %s15 = scalar_select 0, %s14, %s12
  $region1: #{simkd_forward.1} parent=0
    #allocation3 [shape = 'u8[1024]{0}', space=vmem, size = 0x400, scoped, tag = 'output window, operand 1']
    #allocation4 [shape = 's32[2]{0}', space=sflag, size = 0x8, scoped, tag = 'scoped memory for simkd_forward.1']
    %16 = vsyncpa [#allocation4], 0
    %s17 = scalar_lea.sflag [#allocation4], 1
    %18 = vsyncpa %s17, 0
    loop: start=0, step=1, limit=4
    $region2: #{simkd_forward.1} parent=1 // loop_pre_header
      _
    $region3: #{simkd_forward.1} parent=1 // loop_header
      %s20 = sphi 0, %s24
      %p21 = scmp.ge.s32.totalorder %s20, 4
      %s30 = sphi 0, %s32
      %s33 = sphi 0, %s30
      %s34 = sphi 0, %s33
      %s50 = sphi 0, %s34
      %s54 = sphi 0, %s54
      %s56 = sphi 0, %s54
      %s57 = sphi 0, %s56
      %s71 = sphi 0, %s57
      %s75 = sphi 0, %s75
      %s77 = sphi 0, %s75
      %s78 = sphi 0, %s77
      %s92 = sphi 0, %s78
      %s96 = sphi 0, %s96
      %s98 = sphi 0, %s96
      %s99 = sphi 0, %s98
      %s113 = sphi 0, %s99
      %s117 = sphi 0, %s117
      %s119 = sphi 0, %s117
      %s120 = sphi 0, %s119
      %s134 = sphi 0, %s120
      %s138 = sphi 0, %s138
      %s140 = sphi 0, %s138
      %s141 = sphi 0, %s140
      %s155 = sphi 0, %s141
      %s159 = sphi 0, %s159
      %s161 = sphi 0, %s159
      %s162 = sphi 0, %s161
      %s176 = sphi 0, %s162
      %s180 = sphi 0, %s180
      %s182 = sphi 0, %s180
      %s183 = sphi 0, %s182
      %s197 = sphi 0, %s183
      %s201 = sphi 0, %s201
      %s203 = sphi 0, %s201
      %s204 = sphi 0, %s203
      %s218 = sphi 0, %s204
      %s224 = sphi 0, %s226
      %s227 = sphi 0, %s224
      %s228 = sphi 0, %s227
      %s244 = sphi 0, %s228
      %s250 = sphi 0, %s252
      %s253 = sphi 0, %s250
      %s254 = sphi 0, %s253
      %s270 = sphi 0, %s254
    $region4: #{simkd_forward.1} parent=1 // loop_header_branch
      %23 = sbr.rel (%p21) target = $region8
    $region5: #{simkd_forward.1} parent=1 // loop_body
      %s25 = ssub.s32 %s20, 1
      %s26 = ssub.s32 %s20, 2
      %s27 = sadd.s32 %s20, 1
      %s28 = ssub.s32 %s20, %s27
      %p29 = scmp.eq.s32.totalorder %s28, 0
      %s31 = sadd.s32 %s30, 1
      %s32 = scalar_select %p29, %s30, %s31
      %p35 = pneg %p29
      %p36 = scmp.eq.s32.totalorder %s20, 1
      %p37 = por %p35, %p36
      %p38 = scmp.ne.s32.totalorder %s30, %s33
      %p39 = scmp.eq.s32.totalorder %s20, 0
      %p40 = por %p38, %p39
      %p41 = scmp.ne.s32.totalorder %s30, %s33
      %p42 = scmp.eq.s32.totalorder %s25, 1
      %p43 = por %p41, %p42
      %p44 = scmp.ne.s32.totalorder %s33, %s34
      %p45 = scmp.eq.s32.totalorder %s25, 0
      %p46 = por %p44, %p45
      %p47 = scmp.ne.s32.totalorder %s33, %s34
      %p48 = scmp.eq.s32.totalorder %s26, 1
      %p49 = por %p47, %p48
      %p51 = scmp.ne.s32.totalorder %s34, %s50
      %p52 = scmp.eq.s32.totalorder %s26, 0
      %p53 = por %p51, %p52
      %s55 = sadd.s32 %s54, 1
      %p58 = scmp.eq.s32.totalorder %s20, 1
      %p59 = scmp.ne.s32.totalorder %s54, %s56
      %p60 = scmp.eq.s32.totalorder %s20, 0
      %p61 = por %p59, %p60
      %p62 = scmp.ne.s32.totalorder %s54, %s56
      %p63 = scmp.eq.s32.totalorder %s25, 1
      %p64 = por %p62, %p63
      %p65 = scmp.ne.s32.totalorder %s56, %s57
      %p66 = scmp.eq.s32.totalorder %s25, 0
      %p67 = por %p65, %p66
      %p68 = scmp.ne.s32.totalorder %s56, %s57
      %p69 = scmp.eq.s32.totalorder %s26, 1
      %p70 = por %p68, %p69
      %p72 = scmp.ne.s32.totalorder %s57, %s71
      %p73 = scmp.eq.s32.totalorder %s26, 0
      %p74 = por %p72, %p73
      %s76 = sadd.s32 %s75, 1
      %p79 = scmp.eq.s32.totalorder %s20, 1
      %p80 = scmp.ne.s32.totalorder %s75, %s77
      %p81 = scmp.eq.s32.totalorder %s20, 0
      %p82 = por %p80, %p81
      %p83 = scmp.ne.s32.totalorder %s75, %s77
      %p84 = scmp.eq.s32.totalorder %s25, 1
      %p85 = por %p83, %p84
      %p86 = scmp.ne.s32.totalorder %s77, %s78
      %p87 = scmp.eq.s32.totalorder %s25, 0
      %p88 = por %p86, %p87
      %p89 = scmp.ne.s32.totalorder %s77, %s78
      %p90 = scmp.eq.s32.totalorder %s26, 1
      %p91 = por %p89, %p90
      %p93 = scmp.ne.s32.totalorder %s78, %s92
      %p94 = scmp.eq.s32.totalorder %s26, 0
      %p95 = por %p93, %p94
      %s97 = sadd.s32 %s96, 1
      %p100 = scmp.eq.s32.totalorder %s20, 1
      %p101 = scmp.ne.s32.totalorder %s96, %s98
      %p102 = scmp.eq.s32.totalorder %s20, 0
      %p103 = por %p101, %p102
      %p104 = scmp.ne.s32.totalorder %s96, %s98
      %p105 = scmp.eq.s32.totalorder %s25, 1
      %p106 = por %p104, %p105
      %p107 = scmp.ne.s32.totalorder %s98, %s99
      %p108 = scmp.eq.s32.totalorder %s25, 0
      %p109 = por %p107, %p108
      %p110 = scmp.ne.s32.totalorder %s98, %s99
      %p111 = scmp.eq.s32.totalorder %s26, 1
      %p112 = por %p110, %p111
      %p114 = scmp.ne.s32.totalorder %s99, %s113
      %p115 = scmp.eq.s32.totalorder %s26, 0
      %p116 = por %p114, %p115
      %s118 = sadd.s32 %s117, 1
      %p121 = scmp.eq.s32.totalorder %s20, 1
      %p122 = scmp.ne.s32.totalorder %s117, %s119
      %p123 = scmp.eq.s32.totalorder %s20, 0
      %p124 = por %p122, %p123
      %p125 = scmp.ne.s32.totalorder %s117, %s119
      %p126 = scmp.eq.s32.totalorder %s25, 1
      %p127 = por %p125, %p126
      %p128 = scmp.ne.s32.totalorder %s119, %s120
      %p129 = scmp.eq.s32.totalorder %s25, 0
      %p130 = por %p128, %p129
      %p131 = scmp.ne.s32.totalorder %s119, %s120
      %p132 = scmp.eq.s32.totalorder %s26, 1
      %p133 = por %p131, %p132
      %p135 = scmp.ne.s32.totalorder %s120, %s134
      %p136 = scmp.eq.s32.totalorder %s26, 0
      %p137 = por %p135, %p136
      %s139 = sadd.s32 %s138, 1
      %p142 = scmp.eq.s32.totalorder %s20, 1
      %p143 = scmp.ne.s32.totalorder %s138, %s140
      %p144 = scmp.eq.s32.totalorder %s20, 0
      %p145 = por %p143, %p144
      %p146 = scmp.ne.s32.totalorder %s138, %s140
      %p147 = scmp.eq.s32.totalorder %s25, 1
      %p148 = por %p146, %p147
      %p149 = scmp.ne.s32.totalorder %s140, %s141
      %p150 = scmp.eq.s32.totalorder %s25, 0
      %p151 = por %p149, %p150
      %p152 = scmp.ne.s32.totalorder %s140, %s141
      %p153 = scmp.eq.s32.totalorder %s26, 1
      %p154 = por %p152, %p153
      %p156 = scmp.ne.s32.totalorder %s141, %s155
      %p157 = scmp.eq.s32.totalorder %s26, 0
      %p158 = por %p156, %p157
      %s160 = sadd.s32 %s159, 1
      %p163 = scmp.eq.s32.totalorder %s20, 1
      %p164 = scmp.ne.s32.totalorder %s159, %s161
      %p165 = scmp.eq.s32.totalorder %s20, 0
      %p166 = por %p164, %p165
      %p167 = scmp.ne.s32.totalorder %s159, %s161
      %p168 = scmp.eq.s32.totalorder %s25, 1
      %p169 = por %p167, %p168
      %p170 = scmp.ne.s32.totalorder %s161, %s162
      %p171 = scmp.eq.s32.totalorder %s25, 0
      %p172 = por %p170, %p171
      %p173 = scmp.ne.s32.totalorder %s161, %s162
      %p174 = scmp.eq.s32.totalorder %s26, 1
      %p175 = por %p173, %p174
      %p177 = scmp.ne.s32.totalorder %s162, %s176
      %p178 = scmp.eq.s32.totalorder %s26, 0
      %p179 = por %p177, %p178
      %s181 = sadd.s32 %s180, 1
      %p184 = scmp.eq.s32.totalorder %s20, 1
      %p185 = scmp.ne.s32.totalorder %s180, %s182
      %p186 = scmp.eq.s32.totalorder %s20, 0
      %p187 = por %p185, %p186
      %p188 = scmp.ne.s32.totalorder %s180, %s182
      %p189 = scmp.eq.s32.totalorder %s25, 1
      %p190 = por %p188, %p189
      %p191 = scmp.ne.s32.totalorder %s182, %s183
      %p192 = scmp.eq.s32.totalorder %s25, 0
      %p193 = por %p191, %p192
      %p194 = scmp.ne.s32.totalorder %s182, %s183
      %p195 = scmp.eq.s32.totalorder %s26, 1
      %p196 = por %p194, %p195
      %p198 = scmp.ne.s32.totalorder %s183, %s197
      %p199 = scmp.eq.s32.totalorder %s26, 0
      %p200 = por %p198, %p199
      %s202 = sadd.s32 %s201, 1
      %p205 = scmp.eq.s32.totalorder %s20, 1
      %p206 = scmp.ne.s32.totalorder %s201, %s203
      %p207 = scmp.eq.s32.totalorder %s20, 0
      %p208 = por %p206, %p207
      %p209 = scmp.ne.s32.totalorder %s201, %s203
      %p210 = scmp.eq.s32.totalorder %s25, 1
      %p211 = por %p209, %p210
      %p212 = scmp.ne.s32.totalorder %s203, %s204
      %p213 = scmp.eq.s32.totalorder %s25, 0
      %p214 = por %p212, %p213
      %p215 = scmp.ne.s32.totalorder %s203, %s204
      %p216 = scmp.eq.s32.totalorder %s26, 1
      %p217 = por %p215, %p216
      %p219 = scmp.ne.s32.totalorder %s204, %s218
      %p220 = scmp.eq.s32.totalorder %s26, 0
      %p221 = por %p219, %p220
      %s222 = ssub.s32 %s20, %s27
      %p223 = scmp.eq.s32.totalorder %s222, 0
      %s225 = sadd.s32 %s224, 1
      %s226 = scalar_select %p223, %s224, %s225
      %p229 = pneg %p223
      %p230 = scmp.eq.s32.totalorder %s20, 1
      %p231 = por %p229, %p230
      %p232 = scmp.ne.s32.totalorder %s224, %s227
      %p233 = scmp.eq.s32.totalorder %s20, 0
      %p234 = por %p232, %p233
      %p235 = scmp.ne.s32.totalorder %s224, %s227
      %p236 = scmp.eq.s32.totalorder %s25, 1
      %p237 = por %p235, %p236
      %p238 = scmp.ne.s32.totalorder %s227, %s228
      %p239 = scmp.eq.s32.totalorder %s25, 0
      %p240 = por %p238, %p239
      %p241 = scmp.ne.s32.totalorder %s227, %s228
      %p242 = scmp.eq.s32.totalorder %s26, 1
      %p243 = por %p241, %p242
      %p245 = scmp.ne.s32.totalorder %s228, %s244
      %p246 = scmp.eq.s32.totalorder %s26, 0
      %p247 = por %p245, %p246
      %s248 = ssub.s32 %s20, %s27
      %p249 = scmp.eq.s32.totalorder %s248, 0
      %s251 = sadd.s32 %s250, 1
      %s252 = scalar_select %p249, %s250, %s251
      %p255 = pneg %p249
      %p256 = scmp.eq.s32.totalorder %s20, 1
      %p257 = por %p255, %p256
      %p258 = scmp.ne.s32.totalorder %s250, %s253
      %p259 = scmp.eq.s32.totalorder %s20, 0
      %p260 = por %p258, %p259
      %p261 = scmp.ne.s32.totalorder %s250, %s253
      %p262 = scmp.eq.s32.totalorder %s25, 1
      %p263 = por %p261, %p262
      %p264 = scmp.ne.s32.totalorder %s253, %s254
      %p265 = scmp.eq.s32.totalorder %s25, 0
      %p266 = por %p264, %p265
      %p267 = scmp.ne.s32.totalorder %s253, %s254
      %p268 = scmp.eq.s32.totalorder %s26, 1
      %p269 = por %p267, %p268
      %p271 = scmp.ne.s32.totalorder %s254, %s270
      %p272 = scmp.eq.s32.totalorder %s26, 0
      %p273 = por %p271, %p272
      %p274 = scmp.le.s32.totalorder 1, %s20
      %p275 = scmp.lt.s32.totalorder %s20, 3
      %p276 = pnand %p274, %p275
      %p277 = pneg %p276
      // Predicated region
      $region9: #{simkd_forward.1} parent=5 // pred_check
        _
      $region10: #{simkd_forward.1} parent=5 // pred_check_branch
        %279 = sbr.rel (%p276) target = $region12
      $region11: #{simkd_forward.1} parent=5 // pred_region
        %s280 = ssub.s32 %s20, 1
        // Predicated region
        $region13: #{simkd_forward.1} parent=11 // pred_check
          %p281 = pneg %p67
        $region14: #{simkd_forward.1} parent=11 // pred_check_branch
          %283 = sbr.rel (%p281) target = $region16
        $region15: #{simkd_forward.1} parent=11 // pred_region
          _
        $region16: #{simkd_forward.1} parent=11 // pred_fallthru
          _
        // Predicated region
        $region17: #{simkd_forward.1} parent=11 // pred_check
          %p284 = pneg %p88
        $region18: #{simkd_forward.1} parent=11 // pred_check_branch
          %286 = sbr.rel (%p284) target = $region20
        $region19: #{simkd_forward.1} parent=11 // pred_region
          _
        $region20: #{simkd_forward.1} parent=11 // pred_fallthru
          _
        // Predicated region
        $region21: #{simkd_forward.1} parent=11 // pred_check
          %p287 = pneg %p109
        $region22: #{simkd_forward.1} parent=11 // pred_check_branch
          %289 = sbr.rel (%p287) target = $region24
        $region23: #{simkd_forward.1} parent=11 // pred_region
          _
        $region24: #{simkd_forward.1} parent=11 // pred_fallthru
          _
        // Predicated region
        $region25: #{simkd_forward.1} parent=11 // pred_check
          %p290 = pneg %p130
        $region26: #{simkd_forward.1} parent=11 // pred_check_branch
          %292 = sbr.rel (%p290) target = $region28
        $region27: #{simkd_forward.1} parent=11 // pred_region
          _
        $region28: #{simkd_forward.1} parent=11 // pred_fallthru
          _
        // Predicated region
        $region29: #{simkd_forward.1} parent=11 // pred_check
          %p293 = pneg %p151
        $region30: #{simkd_forward.1} parent=11 // pred_check_branch
          %295 = sbr.rel (%p293) target = $region32
        $region31: #{simkd_forward.1} parent=11 // pred_region
          _
        $region32: #{simkd_forward.1} parent=11 // pred_fallthru
          _
        // Predicated region
        $region33: #{simkd_forward.1} parent=11 // pred_check
          %p296 = pneg %p172
        $region34: #{simkd_forward.1} parent=11 // pred_check_branch
          %298 = sbr.rel (%p296) target = $region36
        $region35: #{simkd_forward.1} parent=11 // pred_region
          _
        $region36: #{simkd_forward.1} parent=11 // pred_fallthru
          _
        // Predicated region
        $region37: #{simkd_forward.1} parent=11 // pred_check
          %p299 = pneg %p193
        $region38: #{simkd_forward.1} parent=11 // pred_check_branch
          %301 = sbr.rel (%p299) target = $region40
        $region39: #{simkd_forward.1} parent=11 // pred_region
          _
        $region40: #{simkd_forward.1} parent=11 // pred_fallthru
          _
        // Predicated region
        $region41: #{simkd_forward.1} parent=11 // pred_check
          %p302 = pneg %p214
        $region42: #{simkd_forward.1} parent=11 // pred_check_branch
          %304 = sbr.rel (%p302) target = $region44
        $region43: #{simkd_forward.1} parent=11 // pred_region
          _
        $region44: #{simkd_forward.1} parent=11 // pred_fallthru
          _
      $region12: #{simkd_forward.1} parent=5 // pred_fallthru
        _
      %p305 = scmp.lt.s32.totalorder %s20, 2
      // Predicated region
      $region45: #{simkd_forward.1} parent=5 // pred_check
        %p306 = pneg %p305
      $region46: #{simkd_forward.1} parent=5 // pred_check_branch
        %308 = sbr.rel (%p306) target = $region48
      $region47: #{simkd_forward.1} parent=5 // pred_region
        // Predicated region
        $region49: #{simkd_forward.1} parent=47 // pred_check
          %p309 = pneg %p40
        $region50: #{simkd_forward.1} parent=47 // pred_check_branch
          %311 = sbr.rel (%p309) target = $region52
        $region51: #{simkd_forward.1} parent=47 // pred_region
          %p312 = scmp.lt.s32.totalorder %s20, 1
          %s313 = scalar_select %p312, %s20, 1
          %s314 = smul.addr %s313, 8
          %s315 = smul.addr %s314, 4
          %s316 = scalar_lea.vmem %s0, %s315
        $region52: #{simkd_forward.1} parent=47 // pred_fallthru
          _
      $region48: #{simkd_forward.1} parent=5 // pred_fallthru
        _
      %p317 = scmp.le.s32.totalorder 1, %s20
      %p318 = scmp.lt.s32.totalorder %s20, 3
      %p319 = pnand %p317, %p318
      %p320 = pneg %p319
      // Predicated region
      $region53: #{simkd_forward.1} parent=5 // pred_check
        _
      $region54: #{simkd_forward.1} parent=5 // pred_check_branch
        %322 = sbr.rel (%p319) target = $region56
      $region55: #{simkd_forward.1} parent=5 // pred_region
        %s323 = ssub.s32 %s20, 1
        %p324 = scmp.lt.s32.totalorder %s25, 1
        %s325 = scalar_select %p324, %s25, 1
        %s326 = smul.addr %s325, 8
        %s327 = smul.addr %s326, 4
        %s328 = scalar_lea.vmem %s0, %s327
        %p329 = pneg %p46
        %p330 = pneg %p43
        %p331 = pneg %p67
        %p332 = pneg %p64
        %p333 = pneg %p88
        %p334 = pneg %p85
        %p335 = pneg %p109
        %p336 = pneg %p106
        %p337 = pneg %p130
        %p338 = pneg %p127
        %p339 = pneg %p151
        %p340 = pneg %p148
        %p341 = pneg %p172
        %p342 = pneg %p169
        %p343 = pneg %p193
        %p344 = pneg %p190
        %p345 = pneg %p214
        %p346 = pneg %p211
        %p347 = pneg %p240
        %p348 = pneg %p237
        %p349 = scmp.lt.s32.totalorder %s25, 1
        %s350 = scalar_select %p349, %s25, 1
        %s351 = smul.addr %s350, 8
        %s352 = smul.addr %s351, 8
        %s353 = scalar_lea.vmem %s9, %s352
        %p354 = pneg %p266
        %p355 = pneg %p263
        %s356 = sand.u32 %s253, 1
        %s357 = scalar_lea.sflag [#allocation4], %s356
        %s358 = sand.u32 %s253, 1
        %s359 = scalar_lea.vmem [#allocation3], %s358
        %p360 = scmp.lt.s32.totalorder %s25, 1
        %s361 = scalar_select %p360, %s25, 1
        %s362 = smul.addr %s361, 8
        %s363 = smul.addr %s362, 4
        %s364 = scalar_lea.vmem %s0, %s363
        %p365 = scmp.lt.s32.totalorder %s25, 1
        %s366 = scalar_select %p365, %s25, 1
        %s367 = smul.addr %s366, 8
        %s368 = smul.addr %s367, 8
        %s369 = scalar_lea.vmem %s9, %s368
        %v371 = vld [vmem:[%s364] sm:$0xf]
        %v372 = vld [vmem:[%s364 + $0x4] sm:$0xf]
        %v373 = vld [vmem:[%s364 + $0x8] sm:$0xf]
        %v374 = vld [vmem:[%s364 + $0xc] sm:$0xf]
        %v375 = vld [vmem:[%s364 + $0x10] sm:$0xf]
        %v376 = vld [vmem:[%s364 + $0x14] sm:$0xf]
        %v377 = vld [vmem:[%s364 + $0x18] sm:$0xf]
        %v378 = vld [vmem:[%s364 + $0x1c] sm:$0xf]
        %v379 = vld [vmem:[%s1] sm:$0xf]
        %v380 = vld [vmem:[%s1 + $0x4] sm:$0xf]
        %v381 = vld [vmem:[%s1 + $0x8] sm:$0xf]
        %v382 = vld [vmem:[%s1 + $0xc] sm:$0xf]
        %v383 = vld [vmem:[%s1 + $0x10] sm:$0xf]
        %v384 = vld [vmem:[%s1 + $0x14] sm:$0xf]
        %v385 = vld [vmem:[%s1 + $0x18] sm:$0xf]
        %v386 = vld [vmem:[%s1 + $0x1c] sm:$0xf]
        %v387 = vld [vmem:[%s1 + $0x20] sm:$0xf]
        %v388 = vld [vmem:[%s1 + $0x24] sm:$0xf]
        %v389 = vld [vmem:[%s1 + $0x28] sm:$0xf]
        %v390 = vld [vmem:[%s1 + $0x2c] sm:$0xf]
        %v391 = vld [vmem:[%s1 + $0x30] sm:$0xf]
        %v392 = vld [vmem:[%s1 + $0x34] sm:$0xf]
        %v393 = vld [vmem:[%s1 + $0x38] sm:$0xf]
        %v394 = vld [vmem:[%s1 + $0x3c] sm:$0xf]
        %v395 = vld [vmem:[%s2] sm:$0x1]
        %v397 = vlaneseq
        %v398 = vshrl.u32 %v397, 7
        %v399 = vsub.s32 0, %v398
        %v400 = vrot.slane %v395, %v399
        %v410 = vunpack.c.l.b16 %v371
        %v411 = vunpack.c.l.b16 %v372
        %v412 = vunpack.c.l.b16 %v373
        %v413 = vunpack.c.l.b16 %v374
        %v414 = vunpack.c.l.b16 %v375
        %v415 = vunpack.c.l.b16 %v376
        %v416 = vunpack.c.l.b16 %v377
        %v417 = vunpack.c.l.b16 %v378
        %v418 = vpack.c.b16 %v411, %v410
        %v419 = vpack.c.b16 %v413, %v412
        %v420 = vpack.c.b16 %v415, %v414
        %v421 = vpack.c.b16 %v417, %v416
        %v442 = vunpack.c.l.b16 %v379
        %v443 = vunpack.c.l.b16 %v380
        %v444 = vunpack.c.l.b16 %v381
        %v445 = vunpack.c.l.b16 %v382
        %v446 = vunpack.c.l.b16 %v383
        %v447 = vunpack.c.l.b16 %v384
        %v448 = vunpack.c.l.b16 %v385
        %v449 = vunpack.c.l.b16 %v386
        %v450 = vunpack.c.l.b16 %v387
        %v451 = vunpack.c.l.b16 %v388
        %v452 = vunpack.c.l.b16 %v389
        %v453 = vunpack.c.l.b16 %v390
        %v454 = vunpack.c.l.b16 %v391
        %v455 = vunpack.c.l.b16 %v392
        %v456 = vunpack.c.l.b16 %v393
        %v457 = vunpack.c.l.b16 %v394
        %v458 = vpack.c.b16 %v443, %v442
        %v459 = vpack.c.b16 %v445, %v444
        %v460 = vpack.c.b16 %v447, %v446
        %v461 = vpack.c.b16 %v449, %v448
        %v462 = vpack.c.b16 %v451, %v450
        %v463 = vpack.c.b16 %v453, %v452
        %v464 = vpack.c.b16 %v455, %v454
        %v465 = vpack.c.b16 %v457, %v456
        %474 = vmatprep.subr.bf16.mxu0 0
        %475 = vmatpush1.bf16.msra.mxu0 %v458
        %476 = vmatprep.subr.bf16.mxu0 0
        %477 = vmatpush1.bf16.msra.mxu0 %v459
        %478 = vmatprep.subr.bf16.mxu0 0
        %479 = vmatpush1.bf16.msra.mxu0 %v460
        %480 = vmatprep.subr.bf16.mxu0 0
        %481 = vmatpush1.bf16.msra.mxu0 %v461
        %482 = vmatprep.subr.bf16.mxu0 0
        %483 = vmatpush1.bf16.msra.mxu0 %v462
        %484 = vmatprep.subr.bf16.mxu0 0
        %485 = vmatpush1.bf16.msra.mxu0 %v463
        %486 = vmatprep.subr.bf16.mxu0 0
        %487 = vmatpush1.bf16.msra.mxu0 %v464
        %488 = vmatprep.subr.bf16.mxu0 0
        %489 = vmatpush1.bf16.msra.mxu0 %v465
        %490 = vmatprep.subr.bf16.mxu0 0
        %491 = vmatpush1.bf16.msra.mxu0 0
        %492 = vmatprep.subr.bf16.mxu0 0
        %493 = vmatpush1.bf16.msra.mxu0 0
        %494 = vmatprep.subr.bf16.mxu0 0
        %495 = vmatpush1.bf16.msra.mxu0 0
        %496 = vmatprep.subr.bf16.mxu0 0
        %497 = vmatpush1.bf16.msra.mxu0 0
        %498 = vmatprep.subr.bf16.mxu0 0
        %499 = vmatpush1.bf16.msra.mxu0 0
        %500 = vmatprep.subr.bf16.mxu0 0
        %501 = vmatpush1.bf16.msra.mxu0 0
        %502 = vmatprep.subr.bf16.mxu0 0
        %503 = vmatpush1.bf16.msra.mxu0 0
        %504 = vmatprep.subr.bf16.mxu0 0
        %505 = vmatpush1.bf16.msra.mxu0 0
        %506 = vmatprep.mubr.bf16.mxu0 0
        %507 = vmatmul.mubr.bf16.gmra.mrb[0].mxu0 %v418
        %v508 = vpop.f32.mrb[0].mxu0
        %v509 = vadd.f32 %v400, %v508
        %v510 = vpop.f32.mrb[0].mxu0
        %v511 = vpop.f32.mrb[0].mxu0
        %v512 = vadd.f32 %v400, %v511
        %v513 = vpop.f32.mrb[0].mxu0
        %514 = vmatprep.mubr.bf16.mxu0 0
        %515 = vmatmul.mubr.bf16.gmra.mrb[0].mxu0 %v419
        %v516 = vpop.f32.mrb[0].mxu0
        %v517 = vadd.f32 %v400, %v516
        %v518 = vpop.f32.mrb[0].mxu0
        %v519 = vpop.f32.mrb[0].mxu0
        %v520 = vadd.f32 %v400, %v519
        %v521 = vpop.f32.mrb[0].mxu0
        %522 = vmatprep.mubr.bf16.mxu0 0
        %523 = vmatmul.mubr.bf16.gmra.mrb[0].mxu0 %v420
        %v524 = vpop.f32.mrb[0].mxu0
        %v525 = vadd.f32 %v400, %v524
        %v526 = vpop.f32.mrb[0].mxu0
        %v527 = vpop.f32.mrb[0].mxu0
        %v528 = vadd.f32 %v400, %v527
        %v529 = vpop.f32.mrb[0].mxu0
        %530 = vmatprep.mubr.bf16.mxu0 0
        %531 = vmatmul.mubr.bf16.gmra.mrb[0].mxu0 %v421
        %v532 = vpop.f32.mrb[0].mxu0
        %v533 = vadd.f32 %v400, %v532
        %v534 = vpop.f32.mrb[0].mxu0
        %v535 = vpop.f32.mrb[0].mxu0
        %v536 = vadd.f32 %v400, %v535
        %v537 = vpop.f32.mrb[0].mxu0
        %538 = vdwg.mxu0
        %v539 = vmax.f32 %v509, 0.0
        %v540 = vmax.f32 %v512, 0.0
        %v541 = vmax.f32 %v517, 0.0
        %v542 = vmax.f32 %v520, 0.0
        %v543 = vmax.f32 %v525, 0.0
        %v544 = vmax.f32 %v528, 0.0
        %v545 = vmax.f32 %v533, 0.0
        %v546 = vmax.f32 %v536, 0.0
        %547 = vst [vmem:[#allocation2] sm:$0xf] 0
        %548 = vst [vmem:[#allocation2 + $0x4] sm:$0x1] 0
        %s549 = scalar_lea.vmem [#allocation2], 72
        %550 = vst [vmem:[%s549] sm:$0xf] 0
        %551 = vst [vmem:[%s549 + $0x4] sm:$0x1] 0
        %s552 = scalar_lea.vmem [#allocation2], 8
        %vm553 = vcmask 1040384
        %vm554 = vsmask.f32 256
        %vm555 = vmand %vm553, %vm554
        %v556 = vld [vmem:[%s552] sm:$0x1]
        %v557 = vsel %vm555, 0, %v556
        %558 = vst [vmem:[%s552] sm:$0x1] %v557
        %v559 = vld [vmem:[%s552 + $0x8] sm:$0x1]
        %v560 = vsel %vm555, 0, %v559
        %561 = vst [vmem:[%s552 + $0x8] sm:$0x1] %v560
        %v562 = vld [vmem:[%s552 + $0x10] sm:$0x1]
        %v563 = vsel %vm555, 0, %v562
        %564 = vst [vmem:[%s552 + $0x10] sm:$0x1] %v563
        %v565 = vld [vmem:[%s552 + $0x18] sm:$0x1]
        %v566 = vsel %vm555, 0, %v565
        %567 = vst [vmem:[%s552 + $0x18] sm:$0x1] %v566
        %v568 = vld [vmem:[%s552 + $0x20] sm:$0x1]
        %v569 = vsel %vm555, 0, %v568
        %570 = vst [vmem:[%s552 + $0x20] sm:$0x1] %v569
        %v571 = vld [vmem:[%s552 + $0x28] sm:$0x1]
        %v572 = vsel %vm555, 0, %v571
        %573 = vst [vmem:[%s552 + $0x28] sm:$0x1] %v572
        %v574 = vld [vmem:[%s552 + $0x30] sm:$0x1]
        %v575 = vsel %vm555, 0, %v574
        %576 = vst [vmem:[%s552 + $0x30] sm:$0x1] %v575
        %v577 = vld [vmem:[%s552 + $0x38] sm:$0x1]
        %v578 = vsel %vm555, 0, %v577
        %579 = vst [vmem:[%s552 + $0x38] sm:$0x1] %v578
        %vm580 = vsmask.f32 7938
        %vm581 = vmand %vm553, %vm580
        %v582 = vld [vmem:[%s552 + $0x4] sm:$0x1]
        %v583 = vsel %vm581, 0, %v582
        %584 = vst [vmem:[%s552 + $0x4] sm:$0x1] %v583
        %v585 = vld [vmem:[%s552 + $0xc] sm:$0x1]
        %v586 = vsel %vm581, 0, %v585
        %587 = vst [vmem:[%s552 + $0xc] sm:$0x1] %v586
        %v588 = vld [vmem:[%s552 + $0x14] sm:$0x1]
        %v589 = vsel %vm581, 0, %v588
        %590 = vst [vmem:[%s552 + $0x14] sm:$0x1] %v589
        %v591 = vld [vmem:[%s552 + $0x1c] sm:$0x1]
        %v592 = vsel %vm581, 0, %v591
        %593 = vst [vmem:[%s552 + $0x1c] sm:$0x1] %v592
        %v594 = vld [vmem:[%s552 + $0x24] sm:$0x1]
        %v595 = vsel %vm581, 0, %v594
        %596 = vst [vmem:[%s552 + $0x24] sm:$0x1] %v595
        %v597 = vld [vmem:[%s552 + $0x2c] sm:$0x1]
        %v598 = vsel %vm581, 0, %v597
        %599 = vst [vmem:[%s552 + $0x2c] sm:$0x1] %v598
        %v600 = vld [vmem:[%s552 + $0x34] sm:$0x1]
        %v601 = vsel %vm581, 0, %v600
        %602 = vst [vmem:[%s552 + $0x34] sm:$0x1] %v601
        %v603 = vld [vmem:[%s552 + $0x3c] sm:$0x1]
        %v604 = vsel %vm581, 0, %v603
        %605 = vst [vmem:[%s552 + $0x3c] sm:$0x1] %v604
        %v606 = vpack.c.bf16 %v540, %v539
        %v607 = vpack.c.bf16 %v542, %v541
        %v608 = vpack.c.bf16 %v544, %v543
        %v609 = vpack.c.bf16 %v546, %v545
        %v614 = vunpack.c.l.b16 %v606
        %v615 = vunpack.c.h.b16 %v606
        %v616 = vunpack.c.l.b16 %v607
        %v617 = vunpack.c.h.b16 %v607
        %v618 = vunpack.c.l.b16 %v608
        %v619 = vunpack.c.h.b16 %v608
        %v620 = vunpack.c.l.b16 %v609
        %v621 = vunpack.c.h.b16 %v609
        %v622 = vpack.c.b16 %v614, %v614
        %v623 = vpack.c.b16 %v615, %v615
        %v624 = vpack.c.b16 %v616, %v616
        %v625 = vpack.c.b16 %v617, %v617
        %v626 = vpack.c.b16 %v618, %v618
        %v627 = vpack.c.b16 %v619, %v619
        %v628 = vpack.c.b16 %v620, %v620
        %v629 = vpack.c.b16 %v621, %v621
        %v631 = vshrl.u32 %v622, 16
        %v633 = vrot.slane %v631, 7
        %v634 = vshll.u32 %v622, 16
        %v636 = vor.u32 %v633, %v634
        %v637 = vrot.slane %v633, 4
        %v639 = vshrl.u32 %v623, 16
        %v641 = vrot.slane %v639, 7
        %v642 = vshll.u32 %v623, 16
        %v644 = vor.u32 %v641, %v642
        %v645 = vrot.slane %v641, 4
        %v647 = vshrl.u32 %v624, 16
        %v649 = vrot.slane %v647, 7
        %v650 = vshll.u32 %v624, 16
        %v652 = vor.u32 %v649, %v650
        %v653 = vrot.slane %v649, 4
        %v655 = vshrl.u32 %v625, 16
        %v657 = vrot.slane %v655, 7
        %v658 = vshll.u32 %v625, 16
        %v660 = vor.u32 %v657, %v658
        %v661 = vrot.slane %v657, 4
        %v663 = vshrl.u32 %v626, 16
        %v665 = vrot.slane %v663, 7
        %v666 = vshll.u32 %v626, 16
        %v668 = vor.u32 %v665, %v666
        %v669 = vrot.slane %v665, 4
        %v671 = vshrl.u32 %v627, 16
        %v673 = vrot.slane %v671, 7
        %v674 = vshll.u32 %v627, 16
        %v676 = vor.u32 %v673, %v674
        %v677 = vrot.slane %v673, 4
        %v679 = vshrl.u32 %v628, 16
        %v681 = vrot.slane %v679, 7
        %v682 = vshll.u32 %v628, 16
        %v684 = vor.u32 %v681, %v682
        %v685 = vrot.slane %v681, 4
        %v687 = vshrl.u32 %v629, 16
        %v689 = vrot.slane %v687, 7
        %v690 = vshll.u32 %v629, 16
        %v692 = vor.u32 %v689, %v690
        %v693 = vrot.slane %v689, 4
        %vm710 = vcmask 1043456
        %vm711 = vmand %vm710, %vm580
        %v712 = vld [vmem:[%s552] sm:$0xf]
        %v713 = vsel %vm711, %v636, %v712
        %714 = vst [vmem:[%s552] sm:$0xf] %v713
        %v715 = vld [vmem:[%s552 + $0x4] sm:$0x1]
        %v716 = vsel %vm555, %v637, %v715
        %717 = vst [vmem:[%s552 + $0x4] sm:$0x1] %v716
        %v718 = vld [vmem:[%s552 + $0x8] sm:$0xf]
        %v719 = vsel %vm711, %v644, %v718
        %720 = vst [vmem:[%s552 + $0x8] sm:$0xf] %v719
        %v721 = vld [vmem:[%s552 + $0xc] sm:$0x1]
        %v722 = vsel %vm555, %v645, %v721
        %723 = vst [vmem:[%s552 + $0xc] sm:$0x1] %v722
        %v724 = vld [vmem:[%s552 + $0x10] sm:$0xf]
        %v725 = vsel %vm711, %v652, %v724
        %726 = vst [vmem:[%s552 + $0x10] sm:$0xf] %v725
        %v727 = vld [vmem:[%s552 + $0x14] sm:$0x1]
        %v728 = vsel %vm555, %v653, %v727
        %729 = vst [vmem:[%s552 + $0x14] sm:$0x1] %v728
        %v730 = vld [vmem:[%s552 + $0x18] sm:$0xf]
        %v731 = vsel %vm711, %v660, %v730
        %732 = vst [vmem:[%s552 + $0x18] sm:$0xf] %v731
        %v733 = vld [vmem:[%s552 + $0x1c] sm:$0x1]
        %v734 = vsel %vm555, %v661, %v733
        %735 = vst [vmem:[%s552 + $0x1c] sm:$0x1] %v734
        %v736 = vld [vmem:[%s552 + $0x20] sm:$0xf]
        %v737 = vsel %vm711, %v668, %v736
        %738 = vst [vmem:[%s552 + $0x20] sm:$0xf] %v737
        %v739 = vld [vmem:[%s552 + $0x24] sm:$0x1]
        %v740 = vsel %vm555, %v669, %v739
        %741 = vst [vmem:[%s552 + $0x24] sm:$0x1] %v740
        %v742 = vld [vmem:[%s552 + $0x28] sm:$0xf]
        %v743 = vsel %vm711, %v676, %v742
        %744 = vst [vmem:[%s552 + $0x28] sm:$0xf] %v743
        %v745 = vld [vmem:[%s552 + $0x2c] sm:$0x1]
        %v746 = vsel %vm555, %v677, %v745
        %747 = vst [vmem:[%s552 + $0x2c] sm:$0x1] %v746
        %v748 = vld [vmem:[%s552 + $0x30] sm:$0xf]
        %v749 = vsel %vm711, %v684, %v748
        %750 = vst [vmem:[%s552 + $0x30] sm:$0xf] %v749
        %v751 = vld [vmem:[%s552 + $0x34] sm:$0x1]
        %v752 = vsel %vm555, %v685, %v751
        %753 = vst [vmem:[%s552 + $0x34] sm:$0x1] %v752
        %v754 = vld [vmem:[%s552 + $0x38] sm:$0xf]
        %v755 = vsel %vm711, %v692, %v754
        %756 = vst [vmem:[%s552 + $0x38] sm:$0xf] %v755
        %v757 = vld [vmem:[%s552 + $0x3c] sm:$0x1]
        %v758 = vsel %vm555, %v693, %v757
        %759 = vst [vmem:[%s552 + $0x3c] sm:$0x1] %v758
        %v760 = vld [vmem:[#allocation2] sm:$0xf]
        %v761 = vld [vmem:[#allocation2 + $0x8] sm:$0xf]
        %v762 = vld [vmem:[#allocation2 + $0x10] sm:$0xf]
        %v763 = vld [vmem:[#allocation2 + $0x18] sm:$0xf]
        %v764 = vld [vmem:[#allocation2 + $0x20] sm:$0xf]
        %v765 = vld [vmem:[#allocation2 + $0x28] sm:$0xf]
        %v766 = vld [vmem:[#allocation2 + $0x30] sm:$0xf]
        %v767 = vld [vmem:[#allocation2 + $0x38] sm:$0xf]
        %v768 = vld [vmem:[%s3] sm:$0xf]
        %v769 = vld [vmem:[%s3 + $0x4] sm:$0xf]
        %v770 = vld [vmem:[%s3 + $0x8] sm:$0xf]
        %v771 = vld [vmem:[%s3 + $0xc] sm:$0xf]
        %v772 = vld [vmem:[%s3 + $0x10] sm:$0xf]
        %v773 = vld [vmem:[%s3 + $0x14] sm:$0xf]
        %v774 = vld [vmem:[%s3 + $0x18] sm:$0xf]
        %v775 = vld [vmem:[%s3 + $0x1c] sm:$0xf]
        %v776 = vld [vmem:[%s3 + $0x20] sm:$0xf]
        %v777 = vld [vmem:[%s3 + $0x24] sm:$0xf]
        %v778 = vld [vmem:[%s3 + $0x28] sm:$0xf]
        %v779 = vld [vmem:[%s3 + $0x2c] sm:$0xf]
        %v780 = vld [vmem:[%s3 + $0x30] sm:$0xf]
        %v781 = vld [vmem:[%s3 + $0x34] sm:$0xf]
        %v782 = vld [vmem:[%s3 + $0x38] sm:$0xf]
        %v783 = vld [vmem:[%s3 + $0x3c] sm:$0xf]
        %v784 = vld [vmem:[#allocation2 + $0x4] sm:$0x1]
        %v785 = vld [vmem:[#allocation2 + $0xc] sm:$0x1]
        %v786 = vld [vmem:[#allocation2 + $0x14] sm:$0x1]
        %v787 = vld [vmem:[#allocation2 + $0x1c] sm:$0x1]
        %v788 = vld [vmem:[#allocation2 + $0x24] sm:$0x1]
        %v789 = vld [vmem:[#allocation2 + $0x2c] sm:$0x1]
        %v790 = vld [vmem:[#allocation2 + $0x34] sm:$0x1]
        %v791 = vld [vmem:[#allocation2 + $0x3c] sm:$0x1]
        %vm792 = vsmask.f32 3328
        %vm793 = vsmask.f32 7440
        %vm794 = vmor %vm792, %vm793
        %v796 = vshrl.u32 %v760, 16
        %v798 = vrot.slane %v796, 4
        %v799 = vshll.u32 %v760, 16
        %v801 = vrot.slane %v799, 5
        %v802 = vor.u32 %v798, %v801
        %v803 = vrot.slane %v802, 4
        %v805 = vshll.u32 %v784, 16
        %v807 = vrot.slane %v805, 5
        %v808 = vsel %vm794, %v803, %v807
        %v810 = vshrl.u32 %v761, 16
        %v812 = vrot.slane %v810, 4
        %v813 = vshll.u32 %v761, 16
        %v815 = vrot.slane %v813, 5
        %v816 = vor.u32 %v812, %v815
        %v817 = vrot.slane %v816, 4
        %v819 = vshll.u32 %v785, 16
        %v821 = vrot.slane %v819, 5
        %v822 = vsel %vm794, %v817, %v821
        %v824 = vshrl.u32 %v762, 16
        %v826 = vrot.slane %v824, 4
        %v827 = vshll.u32 %v762, 16
        %v829 = vrot.slane %v827, 5
        %v830 = vor.u32 %v826, %v829
        %v831 = vrot.slane %v830, 4
        %v833 = vshll.u32 %v786, 16
        %v835 = vrot.slane %v833, 5
        %v836 = vsel %vm794, %v831, %v835
        %v838 = vshrl.u32 %v763, 16
        %v840 = vrot.slane %v838, 4
        %v841 = vshll.u32 %v763, 16
        %v843 = vrot.slane %v841, 5
        %v844 = vor.u32 %v840, %v843
        %v845 = vrot.slane %v844, 4
        %v847 = vshll.u32 %v787, 16
        %v849 = vrot.slane %v847, 5
        %v850 = vsel %vm794, %v845, %v849
        %v852 = vshrl.u32 %v764, 16
        %v854 = vrot.slane %v852, 4
        %v855 = vshll.u32 %v764, 16
        %v857 = vrot.slane %v855, 5
        %v858 = vor.u32 %v854, %v857
        %v859 = vrot.slane %v858, 4
        %v861 = vshll.u32 %v788, 16
        %v863 = vrot.slane %v861, 5
        %v864 = vsel %vm794, %v859, %v863
        %v866 = vshrl.u32 %v765, 16
        %v868 = vrot.slane %v866, 4
        %v869 = vshll.u32 %v765, 16
        %v871 = vrot.slane %v869, 5
        %v872 = vor.u32 %v868, %v871
        %v873 = vrot.slane %v872, 4
        %v875 = vshll.u32 %v789, 16
        %v877 = vrot.slane %v875, 5
        %v878 = vsel %vm794, %v873, %v877
        %v880 = vshrl.u32 %v766, 16
        %v882 = vrot.slane %v880, 4
        %v883 = vshll.u32 %v766, 16
        %v885 = vrot.slane %v883, 5
        %v886 = vor.u32 %v882, %v885
        %v887 = vrot.slane %v886, 4
        %v889 = vshll.u32 %v790, 16
        %v891 = vrot.slane %v889, 5
        %v892 = vsel %vm794, %v887, %v891
        %v894 = vshrl.u32 %v767, 16
        %v896 = vrot.slane %v894, 4
        %v897 = vshll.u32 %v767, 16
        %v899 = vrot.slane %v897, 5
        %v900 = vor.u32 %v896, %v899
        %v901 = vrot.slane %v900, 4
        %v903 = vshll.u32 %v791, 16
        %v905 = vrot.slane %v903, 5
        %v906 = vsel %vm794, %v901, %v905
        %s907 = scalar_lea.vmem %s3, 64
        %v908 = vld [vmem:[%s907] sm:$0xf]
        %v909 = vld [vmem:[%s907 + $0x4] sm:$0xf]
        %v910 = vld [vmem:[%s907 + $0x8] sm:$0xf]
        %v911 = vld [vmem:[%s907 + $0xc] sm:$0xf]
        %v912 = vld [vmem:[%s907 + $0x10] sm:$0xf]
        %v913 = vld [vmem:[%s907 + $0x14] sm:$0xf]
        %v914 = vld [vmem:[%s907 + $0x18] sm:$0xf]
        %v915 = vld [vmem:[%s907 + $0x1c] sm:$0xf]
        %v916 = vld [vmem:[%s907 + $0x20] sm:$0xf]
        %v917 = vld [vmem:[%s907 + $0x24] sm:$0xf]
        %v918 = vld [vmem:[%s907 + $0x28] sm:$0xf]
        %v919 = vld [vmem:[%s907 + $0x2c] sm:$0xf]
        %v920 = vld [vmem:[%s907 + $0x30] sm:$0xf]
        %v921 = vld [vmem:[%s907 + $0x34] sm:$0xf]
        %v922 = vld [vmem:[%s907 + $0x38] sm:$0xf]
        %v923 = vld [vmem:[%s907 + $0x3c] sm:$0xf]
        %v924 = vunpack.c.l.b16 %v808
        %v925 = vunpack.c.l.b16 %v822
        %v926 = vunpack.c.l.b16 %v836
        %v927 = vunpack.c.l.b16 %v850
        %v928 = vunpack.c.l.b16 %v864
        %v929 = vunpack.c.l.b16 %v878
        %v930 = vunpack.c.l.b16 %v892
        %v931 = vunpack.c.l.b16 %v906
        %v932 = vpack.c.b16 %v925, %v924
        %v933 = vpack.c.b16 %v927, %v926
        %v934 = vpack.c.b16 %v929, %v928
        %v935 = vpack.c.b16 %v931, %v930
        %v956 = vunpack.c.l.b16 %v908
        %v957 = vunpack.c.l.b16 %v909
        %v958 = vunpack.c.l.b16 %v910
        %v959 = vunpack.c.l.b16 %v911
        %v960 = vunpack.c.l.b16 %v912
        %v961 = vunpack.c.l.b16 %v913
        %v962 = vunpack.c.l.b16 %v914
        %v963 = vunpack.c.l.b16 %v915
        %v964 = vunpack.c.l.b16 %v916
        %v965 = vunpack.c.l.b16 %v917
        %v966 = vunpack.c.l.b16 %v918
        %v967 = vunpack.c.l.b16 %v919
        %v968 = vunpack.c.l.b16 %v920
        %v969 = vunpack.c.l.b16 %v921
        %v970 = vunpack.c.l.b16 %v922
        %v971 = vunpack.c.l.b16 %v923
        %v972 = vpack.c.b16 %v957, %v956
        %v973 = vpack.c.b16 %v959, %v958
        %v974 = vpack.c.b16 %v961, %v960
        %v975 = vpack.c.b16 %v963, %v962
        %v976 = vpack.c.b16 %v965, %v964
        %v977 = vpack.c.b16 %v967, %v966
        %v978 = vpack.c.b16 %v969, %v968
        %v979 = vpack.c.b16 %v971, %v970
        %988 = vmatprep.subr.bf16.mxu0 0
        %989 = vmatpush1.bf16.msra.mxu0 %v972
        %990 = vmatprep.subr.bf16.mxu0 0
        %991 = vmatpush1.bf16.msra.mxu0 %v973
        %992 = vmatprep.subr.bf16.mxu0 0
        %993 = vmatpush1.bf16.msra.mxu0 %v974
        %994 = vmatprep.subr.bf16.mxu0 0
        %995 = vmatpush1.bf16.msra.mxu0 %v975
        %996 = vmatprep.subr.bf16.mxu0 0
        %997 = vmatpush1.bf16.msra.mxu0 %v976
        %998 = vmatprep.subr.bf16.mxu0 0
        %999 = vmatpush1.bf16.msra.mxu0 %v977
        %1000 = vmatprep.subr.bf16.mxu0 0
        %1001 = vmatpush1.bf16.msra.mxu0 %v978
        %1002 = vmatprep.subr.bf16.mxu0 0
        %1003 = vmatpush1.bf16.msra.mxu0 %v979
        %1004 = vmatprep.subr.bf16.mxu0 0
        %1005 = vmatpush1.bf16.msra.mxu0 0
        %1006 = vmatprep.subr.bf16.mxu0 0
        %1007 = vmatpush1.bf16.msra.mxu0 0
        %1008 = vmatprep.subr.bf16.mxu0 0
        %1009 = vmatpush1.bf16.msra.mxu0 0
        %1010 = vmatprep.subr.bf16.mxu0 0
        %1011 = vmatpush1.bf16.msra.mxu0 0
        %1012 = vmatprep.subr.bf16.mxu0 0
        %1013 = vmatpush1.bf16.msra.mxu0 0
        %1014 = vmatprep.subr.bf16.mxu0 0
        %1015 = vmatpush1.bf16.msra.mxu0 0
        %1016 = vmatprep.subr.bf16.mxu0 0
        %1017 = vmatpush1.bf16.msra.mxu0 0
        %1018 = vmatprep.subr.bf16.mxu0 0
        %1019 = vmatpush1.bf16.msra.mxu0 0
        %1020 = vmatprep.mubr.bf16.mxu0 0
        %1021 = vmatmul.mubr.bf16.gmra.mrb[0].mxu0 %v932
        %v1022 = vpop.f32.mrb[0].mxu0
        %v1023 = vadd.f32 0.0, %v1022
        %v1024 = vpop.f32.mrb[0].mxu0
        %v1025 = vpop.f32.mrb[0].mxu0
        %v1026 = vadd.f32 0.0, %v1025
        %v1027 = vpop.f32.mrb[0].mxu0
        %1028 = vmatprep.mubr.bf16.mxu0 0
        %1029 = vmatmul.mubr.bf16.gmra.mrb[0].mxu0 %v933
        %v1030 = vpop.f32.mrb[0].mxu0
        %v1031 = vadd.f32 0.0, %v1030
        %v1032 = vpop.f32.mrb[0].mxu0
        %v1033 = vpop.f32.mrb[0].mxu0
        %v1034 = vadd.f32 0.0, %v1033
        %v1035 = vpop.f32.mrb[0].mxu0
        %1036 = vmatprep.mubr.bf16.mxu0 0
        %1037 = vmatmul.mubr.bf16.gmra.mrb[0].mxu0 %v934
        %v1038 = vpop.f32.mrb[0].mxu0
        %v1039 = vadd.f32 0.0, %v1038
        %v1040 = vpop.f32.mrb[0].mxu0
        %v1041 = vpop.f32.mrb[0].mxu0
        %v1042 = vadd.f32 0.0, %v1041
        %v1043 = vpop.f32.mrb[0].mxu0
        %1044 = vmatprep.mubr.bf16.mxu0 0
        %1045 = vmatmul.mubr.bf16.gmra.mrb[0].mxu0 %v935
        %v1046 = vpop.f32.mrb[0].mxu0
        %v1047 = vadd.f32 0.0, %v1046
        %v1048 = vpop.f32.mrb[0].mxu0
        %v1049 = vpop.f32.mrb[0].mxu0
        %v1050 = vadd.f32 0.0, %v1049
        %v1051 = vpop.f32.mrb[0].mxu0
        %1052 = vdwg.mxu0
        %v1061 = vunpack.c.l.b16 %v760
        %v1062 = vunpack.c.l.b16 %v761
        %v1063 = vunpack.c.l.b16 %v762
        %v1064 = vunpack.c.l.b16 %v763
        %v1065 = vunpack.c.l.b16 %v764
        %v1066 = vunpack.c.l.b16 %v765
        %v1067 = vunpack.c.l.b16 %v766
        %v1068 = vunpack.c.l.b16 %v767
        %v1069 = vpack.c.b16 %v1062, %v1061
        %v1070 = vpack.c.b16 %v1064, %v1063
        %v1071 = vpack.c.b16 %v1066, %v1065
        %v1072 = vpack.c.b16 %v1068, %v1067
        %v1093 = vunpack.c.l.b16 %v768
        %v1094 = vunpack.c.l.b16 %v769
        %v1095 = vunpack.c.l.b16 %v770
        %v1096 = vunpack.c.l.b16 %v771
        %v1097 = vunpack.c.l.b16 %v772
        %v1098 = vunpack.c.l.b16 %v773
        %v1099 = vunpack.c.l.b16 %v774
        %v1100 = vunpack.c.l.b16 %v775
        %v1101 = vunpack.c.l.b16 %v776
        %v1102 = vunpack.c.l.b16 %v777
        %v1103 = vunpack.c.l.b16 %v778
        %v1104 = vunpack.c.l.b16 %v779
        %v1105 = vunpack.c.l.b16 %v780
        %v1106 = vunpack.c.l.b16 %v781
        %v1107 = vunpack.c.l.b16 %v782
        %v1108 = vunpack.c.l.b16 %v783
        %v1109 = vpack.c.b16 %v1094, %v1093
        %v1110 = vpack.c.b16 %v1096, %v1095
        %v1111 = vpack.c.b16 %v1098, %v1097
        %v1112 = vpack.c.b16 %v1100, %v1099
        %v1113 = vpack.c.b16 %v1102, %v1101
        %v1114 = vpack.c.b16 %v1104, %v1103
        %v1115 = vpack.c.b16 %v1106, %v1105
        %v1116 = vpack.c.b16 %v1108, %v1107
        %1125 = vmatprep.subr.bf16.mxu0 0
        %1126 = vmatpush1.bf16.msra.mxu0 %v1109
        %1127 = vmatprep.subr.bf16.mxu0 0
        %1128 = vmatpush1.bf16.msra.mxu0 %v1110
        %1129 = vmatprep.subr.bf16.mxu0 0
        %1130 = vmatpush1.bf16.msra.mxu0 %v1111
        %1131 = vmatprep.subr.bf16.mxu0 0
        %1132 = vmatpush1.bf16.msra.mxu0 %v1112
        %1133 = vmatprep.subr.bf16.mxu0 0
        %1134 = vmatpush1.bf16.msra.mxu0 %v1113
        %1135 = vmatprep.subr.bf16.mxu0 0
        %1136 = vmatpush1.bf16.msra.mxu0 %v1114
        %1137 = vmatprep.subr.bf16.mxu0 0
        %1138 = vmatpush1.bf16.msra.mxu0 %v1115
        %1139 = vmatprep.subr.bf16.mxu0 0
        %1140 = vmatpush1.bf16.msra.mxu0 %v1116
        %1141 = vmatprep.subr.bf16.mxu0 0
        %1142 = vmatpush1.bf16.msra.mxu0 0
        %1143 = vmatprep.subr.bf16.mxu0 0
        %1144 = vmatpush1.bf16.msra.mxu0 0
        %1145 = vmatprep.subr.bf16.mxu0 0
        %1146 = vmatpush1.bf16.msra.mxu0 0
        %1147 = vmatprep.subr.bf16.mxu0 0
        %1148 = vmatpush1.bf16.msra.mxu0 0
        %1149 = vmatprep.subr.bf16.mxu0 0
        %1150 = vmatpush1.bf16.msra.mxu0 0
        %1151 = vmatprep.subr.bf16.mxu0 0
        %1152 = vmatpush1.bf16.msra.mxu0 0
        %1153 = vmatprep.subr.bf16.mxu0 0
        %1154 = vmatpush1.bf16.msra.mxu0 0
        %1155 = vmatprep.subr.bf16.mxu0 0
        %1156 = vmatpush1.bf16.msra.mxu0 0
        %1157 = vmatprep.mubr.bf16.mxu0 0
        %1158 = vmatmul.mubr.bf16.gmra.mrb[0].mxu0 %v1069
        %v1159 = vpop.f32.mrb[0].mxu0
        %v1160 = vadd.f32 %v1023, %v1159
        %v1161 = vpop.f32.mrb[0].mxu0
        %v1162 = vpop.f32.mrb[0].mxu0
        %v1163 = vadd.f32 %v1026, %v1162
        %v1164 = vpop.f32.mrb[0].mxu0
        %1165 = vmatprep.mubr.bf16.mxu0 0
        %1166 = vmatmul.mubr.bf16.gmra.mrb[0].mxu0 %v1070
        %v1167 = vpop.f32.mrb[0].mxu0
        %v1168 = vadd.f32 %v1031, %v1167
        %v1169 = vpop.f32.mrb[0].mxu0
        %v1170 = vpop.f32.mrb[0].mxu0
        %v1171 = vadd.f32 %v1034, %v1170
        %v1172 = vpop.f32.mrb[0].mxu0
        %1173 = vmatprep.mubr.bf16.mxu0 0
        %1174 = vmatmul.mubr.bf16.gmra.mrb[0].mxu0 %v1071
        %v1175 = vpop.f32.mrb[0].mxu0
        %v1176 = vadd.f32 %v1039, %v1175
        %v1177 = vpop.f32.mrb[0].mxu0
        %v1178 = vpop.f32.mrb[0].mxu0
        %v1179 = vadd.f32 %v1042, %v1178
        %v1180 = vpop.f32.mrb[0].mxu0
        %1181 = vmatprep.mubr.bf16.mxu0 0
        %1182 = vmatmul.mubr.bf16.gmra.mrb[0].mxu0 %v1072
        %v1183 = vpop.f32.mrb[0].mxu0
        %v1184 = vadd.f32 %v1047, %v1183
        %v1185 = vpop.f32.mrb[0].mxu0
        %v1186 = vpop.f32.mrb[0].mxu0
        %v1187 = vadd.f32 %v1050, %v1186
        %v1188 = vpop.f32.mrb[0].mxu0
        %1189 = vdwg.mxu0
        %v1190 = vld [vmem:[#allocation2] sm:$0xe]
        %v1191 = vld [vmem:[#allocation2 + $0x8] sm:$0xe]
        %v1192 = vld [vmem:[#allocation2 + $0x10] sm:$0xe]
        %v1193 = vld [vmem:[#allocation2 + $0x18] sm:$0xe]
        %v1194 = vld [vmem:[#allocation2 + $0x20] sm:$0xe]
        %v1195 = vld [vmem:[#allocation2 + $0x28] sm:$0xe]
        %v1196 = vld [vmem:[#allocation2 + $0x30] sm:$0xe]
        %v1197 = vld [vmem:[#allocation2 + $0x38] sm:$0xe]
        %vm1214 = vcmask 1042432
        %vm1215 = vcmask 1046532
        %vm1216 = vmor %vm1214, %vm1215
        %v1217 = vrot.slane %v1190, 5
        %v1218 = vrot.slane %v1217, 4
        %v1219 = vrot.slane %v784, 5
        %v1220 = vsel %vm1216, %v1218, %v1219
        %v1221 = vrot.slane %v1191, 5
        %v1222 = vrot.slane %v1221, 4
        %v1223 = vrot.slane %v785, 5
        %v1224 = vsel %vm1216, %v1222, %v1223
        %v1225 = vrot.slane %v1192, 5
        %v1226 = vrot.slane %v1225, 4
        %v1227 = vrot.slane %v786, 5
        %v1228 = vsel %vm1216, %v1226, %v1227
        %v1229 = vrot.slane %v1193, 5
        %v1230 = vrot.slane %v1229, 4
        %v1231 = vrot.slane %v787, 5
        %v1232 = vsel %vm1216, %v1230, %v1231
        %v1233 = vrot.slane %v1194, 5
        %v1234 = vrot.slane %v1233, 4
        %v1235 = vrot.slane %v788, 5
        %v1236 = vsel %vm1216, %v1234, %v1235
        %v1237 = vrot.slane %v1195, 5
        %v1238 = vrot.slane %v1237, 4
        %v1239 = vrot.slane %v789, 5
        %v1240 = vsel %vm1216, %v1238, %v1239
        %v1241 = vrot.slane %v1196, 5
        %v1242 = vrot.slane %v1241, 4
        %v1243 = vrot.slane %v790, 5
        %v1244 = vsel %vm1216, %v1242, %v1243
        %v1245 = vrot.slane %v1197, 5
        %v1246 = vrot.slane %v1245, 4
        %v1247 = vrot.slane %v791, 5
        %v1248 = vsel %vm1216, %v1246, %v1247
        %s1249 = scalar_lea.vmem %s3, 128
        %v1250 = vld [vmem:[%s1249] sm:$0xf]
        %v1251 = vld [vmem:[%s1249 + $0x4] sm:$0xf]
        %v1252 = vld [vmem:[%s1249 + $0x8] sm:$0xf]
        %v1253 = vld [vmem:[%s1249 + $0xc] sm:$0xf]
        %v1254 = vld [vmem:[%s1249 + $0x10] sm:$0xf]
        %v1255 = vld [vmem:[%s1249 + $0x14] sm:$0xf]
        %v1256 = vld [vmem:[%s1249 + $0x18] sm:$0xf]
        %v1257 = vld [vmem:[%s1249 + $0x1c] sm:$0xf]
        %v1258 = vld [vmem:[%s1249 + $0x20] sm:$0xf]
        %v1259 = vld [vmem:[%s1249 + $0x24] sm:$0xf]
        %v1260 = vld [vmem:[%s1249 + $0x28] sm:$0xf]
        %v1261 = vld [vmem:[%s1249 + $0x2c] sm:$0xf]
        %v1262 = vld [vmem:[%s1249 + $0x30] sm:$0xf]
        %v1263 = vld [vmem:[%s1249 + $0x34] sm:$0xf]
        %v1264 = vld [vmem:[%s1249 + $0x38] sm:$0xf]
        %v1265 = vld [vmem:[%s1249 + $0x3c] sm:$0xf]
        %v1266 = vunpack.c.l.b16 %v1220
        %v1267 = vunpack.c.l.b16 %v1224
        %v1268 = vunpack.c.l.b16 %v1228
        %v1269 = vunpack.c.l.b16 %v1232
        %v1270 = vunpack.c.l.b16 %v1236
        %v1271 = vunpack.c.l.b16 %v1240
        %v1272 = vunpack.c.l.b16 %v1244
        %v1273 = vunpack.c.l.b16 %v1248
        %v1274 = vpack.c.b16 %v1267, %v1266
        %v1275 = vpack.c.b16 %v1269, %v1268
        %v1276 = vpack.c.b16 %v1271, %v1270
        %v1277 = vpack.c.b16 %v1273, %v1272
        %v1298 = vunpack.c.l.b16 %v1250
        %v1299 = vunpack.c.l.b16 %v1251
        %v1300 = vunpack.c.l.b16 %v1252
        %v1301 = vunpack.c.l.b16 %v1253
        %v1302 = vunpack.c.l.b16 %v1254
        %v1303 = vunpack.c.l.b16 %v1255
        %v1304 = vunpack.c.l.b16 %v1256
        %v1305 = vunpack.c.l.b16 %v1257
        %v1306 = vunpack.c.l.b16 %v1258
        %v1307 = vunpack.c.l.b16 %v1259
        %v1308 = vunpack.c.l.b16 %v1260
        %v1309 = vunpack.c.l.b16 %v1261
        %v1310 = vunpack.c.l.b16 %v1262
        %v1311 = vunpack.c.l.b16 %v1263
        %v1312 = vunpack.c.l.b16 %v1264
        %v1313 = vunpack.c.l.b16 %v1265
        %v1314 = vpack.c.b16 %v1299, %v1298
        %v1315 = vpack.c.b16 %v1301, %v1300
        %v1316 = vpack.c.b16 %v1303, %v1302
        %v1317 = vpack.c.b16 %v1305, %v1304
        %v1318 = vpack.c.b16 %v1307, %v1306
        %v1319 = vpack.c.b16 %v1309, %v1308
        %v1320 = vpack.c.b16 %v1311, %v1310
        %v1321 = vpack.c.b16 %v1313, %v1312
        %1330 = vmatprep.subr.bf16.mxu0 0
        %1331 = vmatpush1.bf16.msra.mxu0 %v1314
        %1332 = vmatprep.subr.bf16.mxu0 0
        %1333 = vmatpush1.bf16.msra.mxu0 %v1315
        %1334 = vmatprep.subr.bf16.mxu0 0
        %1335 = vmatpush1.bf16.msra.mxu0 %v1316
        %1336 = vmatprep.subr.bf16.mxu0 0
        %1337 = vmatpush1.bf16.msra.mxu0 %v1317
        %1338 = vmatprep.subr.bf16.mxu0 0
        %1339 = vmatpush1.bf16.msra.mxu0 %v1318
        %1340 = vmatprep.subr.bf16.mxu0 0
        %1341 = vmatpush1.bf16.msra.mxu0 %v1319
        %1342 = vmatprep.subr.bf16.mxu0 0
        %1343 = vmatpush1.bf16.msra.mxu0 %v1320
        %1344 = vmatprep.subr.bf16.mxu0 0
        %1345 = vmatpush1.bf16.msra.mxu0 %v1321
        %1346 = vmatprep.subr.bf16.mxu0 0
        %1347 = vmatpush1.bf16.msra.mxu0 0
        %1348 = vmatprep.subr.bf16.mxu0 0
        %1349 = vmatpush1.bf16.msra.mxu0 0
        %1350 = vmatprep.subr.bf16.mxu0 0
        %1351 = vmatpush1.bf16.msra.mxu0 0
        %1352 = vmatprep.subr.bf16.mxu0 0
        %1353 = vmatpush1.bf16.msra.mxu0 0
        %1354 = vmatprep.subr.bf16.mxu0 0
        %1355 = vmatpush1.bf16.msra.mxu0 0
        %1356 = vmatprep.subr.bf16.mxu0 0
        %1357 = vmatpush1.bf16.msra.mxu0 0
        %1358 = vmatprep.subr.bf16.mxu0 0
        %1359 = vmatpush1.bf16.msra.mxu0 0
        %1360 = vmatprep.subr.bf16.mxu0 0
        %1361 = vmatpush1.bf16.msra.mxu0 0
        %1362 = vmatprep.mubr.bf16.mxu0 0
        %1363 = vmatmul.mubr.bf16.gmra.mrb[0].mxu0 %v1274
        %v1364 = vpop.f32.mrb[0].mxu0
        %v1365 = vadd.f32 0.0, %v1364
        %v1366 = vpop.f32.mrb[0].mxu0
        %v1367 = vpop.f32.mrb[0].mxu0
        %v1368 = vadd.f32 0.0, %v1367
        %v1369 = vpop.f32.mrb[0].mxu0
        %1370 = vmatprep.mubr.bf16.mxu0 0
        %1371 = vmatmul.mubr.bf16.gmra.mrb[0].mxu0 %v1275
        %v1372 = vpop.f32.mrb[0].mxu0
        %v1373 = vadd.f32 0.0, %v1372
        %v1374 = vpop.f32.mrb[0].mxu0
        %v1375 = vpop.f32.mrb[0].mxu0
        %v1376 = vadd.f32 0.0, %v1375
        %v1377 = vpop.f32.mrb[0].mxu0
        %1378 = vmatprep.mubr.bf16.mxu0 0
        %1379 = vmatmul.mubr.bf16.gmra.mrb[0].mxu0 %v1276
        %v1380 = vpop.f32.mrb[0].mxu0
        %v1381 = vadd.f32 0.0, %v1380
        %v1382 = vpop.f32.mrb[0].mxu0
        %v1383 = vpop.f32.mrb[0].mxu0
        %v1384 = vadd.f32 0.0, %v1383
        %v1385 = vpop.f32.mrb[0].mxu0
        %1386 = vmatprep.mubr.bf16.mxu0 0
        %1387 = vmatmul.mubr.bf16.gmra.mrb[0].mxu0 %v1277
        %v1388 = vpop.f32.mrb[0].mxu0
        %v1389 = vadd.f32 0.0, %v1388
        %v1390 = vpop.f32.mrb[0].mxu0
        %v1391 = vpop.f32.mrb[0].mxu0
        %v1392 = vadd.f32 0.0, %v1391
        %v1393 = vpop.f32.mrb[0].mxu0
        %1394 = vdwg.mxu0
        %v1395 = vadd.f32 %v1160, %v1365
        %v1396 = vadd.f32 %v1163, %v1368
        %v1397 = vadd.f32 %v1168, %v1373
        %v1398 = vadd.f32 %v1171, %v1376
        %v1399 = vadd.f32 %v1176, %v1381
        %v1400 = vadd.f32 %v1179, %v1384
        %v1401 = vadd.f32 %v1184, %v1389
        %v1402 = vadd.f32 %v1187, %v1392
        %v1403 = vld [vmem:[%s552] sm:$0xf]
        %v1404 = vld [vmem:[%s552 + $0x8] sm:$0xf]
        %v1405 = vld [vmem:[%s552 + $0x10] sm:$0xf]
        %v1406 = vld [vmem:[%s552 + $0x18] sm:$0xf]
        %v1407 = vld [vmem:[%s552 + $0x20] sm:$0xf]
        %v1408 = vld [vmem:[%s552 + $0x28] sm:$0xf]
        %v1409 = vld [vmem:[%s552 + $0x30] sm:$0xf]
        %v1410 = vld [vmem:[%s552 + $0x38] sm:$0xf]
        %s1411 = scalar_lea.vmem %s3, 192
        %v1412 = vld [vmem:[%s1411] sm:$0xf]
        %v1413 = vld [vmem:[%s1411 + $0x4] sm:$0xf]
        %v1414 = vld [vmem:[%s1411 + $0x8] sm:$0xf]
        %v1415 = vld [vmem:[%s1411 + $0xc] sm:$0xf]
        %v1416 = vld [vmem:[%s1411 + $0x10] sm:$0xf]
        %v1417 = vld [vmem:[%s1411 + $0x14] sm:$0xf]
        %v1418 = vld [vmem:[%s1411 + $0x18] sm:$0xf]
        %v1419 = vld [vmem:[%s1411 + $0x1c] sm:$0xf]
        %v1420 = vld [vmem:[%s1411 + $0x20] sm:$0xf]
        %v1421 = vld [vmem:[%s1411 + $0x24] sm:$0xf]
        %v1422 = vld [vmem:[%s1411 + $0x28] sm:$0xf]
        %v1423 = vld [vmem:[%s1411 + $0x2c] sm:$0xf]
        %v1424 = vld [vmem:[%s1411 + $0x30] sm:$0xf]
        %v1425 = vld [vmem:[%s1411 + $0x34] sm:$0xf]
        %v1426 = vld [vmem:[%s1411 + $0x38] sm:$0xf]
        %v1427 = vld [vmem:[%s1411 + $0x3c] sm:$0xf]
        %v1436 = vunpack.c.l.b16 %v1403
        %v1437 = vunpack.c.l.b16 %v1404
        %v1438 = vunpack.c.l.b16 %v1405
        %v1439 = vunpack.c.l.b16 %v1406
        %v1440 = vunpack.c.l.b16 %v1407
        %v1441 = vunpack.c.l.b16 %v1408
        %v1442 = vunpack.c.l.b16 %v1409
        %v1443 = vunpack.c.l.b16 %v1410
        %v1444 = vpack.c.b16 %v1437, %v1436
        %v1445 = vpack.c.b16 %v1439, %v1438
        %v1446 = vpack.c.b16 %v1441, %v1440
        %v1447 = vpack.c.b16 %v1443, %v1442
        %v1468 = vunpack.c.l.b16 %v1412
        %v1469 = vunpack.c.l.b16 %v1413
        %v1470 = vunpack.c.l.b16 %v1414
        %v1471 = vunpack.c.l.b16 %v1415
        %v1472 = vunpack.c.l.b16 %v1416
        %v1473 = vunpack.c.l.b16 %v1417
        %v1474 = vunpack.c.l.b16 %v1418
        %v1475 = vunpack.c.l.b16 %v1419
        %v1476 = vunpack.c.l.b16 %v1420
        %v1477 = vunpack.c.l.b16 %v1421
        %v1478 = vunpack.c.l.b16 %v1422
        %v1479 = vunpack.c.l.b16 %v1423
        %v1480 = vunpack.c.l.b16 %v1424
        %v1481 = vunpack.c.l.b16 %v1425
        %v1482 = vunpack.c.l.b16 %v1426
        %v1483 = vunpack.c.l.b16 %v1427
        %v1484 = vpack.c.b16 %v1469, %v1468
        %v1485 = vpack.c.b16 %v1471, %v1470
        %v1486 = vpack.c.b16 %v1473, %v1472
        %v1487 = vpack.c.b16 %v1475, %v1474
        %v1488 = vpack.c.b16 %v1477, %v1476
        %v1489 = vpack.c.b16 %v1479, %v1478
        %v1490 = vpack.c.b16 %v1481, %v1480
        %v1491 = vpack.c.b16 %v1483, %v1482
        %1500 = vmatprep.subr.bf16.mxu0 0
        %1501 = vmatpush1.bf16.msra.mxu0 %v1484
        %1502 = vmatprep.subr.bf16.mxu0 0
        %1503 = vmatpush1.bf16.msra.mxu0 %v1485
        %1504 = vmatprep.subr.bf16.mxu0 0
        %1505 = vmatpush1.bf16.msra.mxu0 %v1486
        %1506 = vmatprep.subr.bf16.mxu0 0
        %1507 = vmatpush1.bf16.msra.mxu0 %v1487
        %1508 = vmatprep.subr.bf16.mxu0 0
        %1509 = vmatpush1.bf16.msra.mxu0 %v1488
        %1510 = vmatprep.subr.bf16.mxu0 0
        %1511 = vmatpush1.bf16.msra.mxu0 %v1489
        %1512 = vmatprep.subr.bf16.mxu0 0
        %1513 = vmatpush1.bf16.msra.mxu0 %v1490
        %1514 = vmatprep.subr.bf16.mxu0 0
        %1515 = vmatpush1.bf16.msra.mxu0 %v1491
        %1516 = vmatprep.subr.bf16.mxu0 0
        %1517 = vmatpush1.bf16.msra.mxu0 0
        %1518 = vmatprep.subr.bf16.mxu0 0
        %1519 = vmatpush1.bf16.msra.mxu0 0
        %1520 = vmatprep.subr.bf16.mxu0 0
        %1521 = vmatpush1.bf16.msra.mxu0 0
        %1522 = vmatprep.subr.bf16.mxu0 0
        %1523 = vmatpush1.bf16.msra.mxu0 0
        %1524 = vmatprep.subr.bf16.mxu0 0
        %1525 = vmatpush1.bf16.msra.mxu0 0
        %1526 = vmatprep.subr.bf16.mxu0 0
        %1527 = vmatpush1.bf16.msra.mxu0 0
        %1528 = vmatprep.subr.bf16.mxu0 0
        %1529 = vmatpush1.bf16.msra.mxu0 0
        %1530 = vmatprep.subr.bf16.mxu0 0
        %1531 = vmatpush1.bf16.msra.mxu0 0
        %1532 = vmatprep.mubr.bf16.mxu0 0
        %1533 = vmatmul.mubr.bf16.gmra.mrb[0].mxu0 %v1444
        %v1534 = vpop.f32.mrb[0].mxu0
        %v1535 = vadd.f32 0.0, %v1534
        %v1536 = vpop.f32.mrb[0].mxu0
        %v1537 = vpop.f32.mrb[0].mxu0
        %v1538 = vadd.f32 0.0, %v1537
        %v1539 = vpop.f32.mrb[0].mxu0
        %1540 = vmatprep.mubr.bf16.mxu0 0
        %1541 = vmatmul.mubr.bf16.gmra.mrb[0].mxu0 %v1445
        %v1542 = vpop.f32.mrb[0].mxu0
        %v1543 = vadd.f32 0.0, %v1542
        %v1544 = vpop.f32.mrb[0].mxu0
        %v1545 = vpop.f32.mrb[0].mxu0
        %v1546 = vadd.f32 0.0, %v1545
        %v1547 = vpop.f32.mrb[0].mxu0
        %1548 = vmatprep.mubr.bf16.mxu0 0
        %1549 = vmatmul.mubr.bf16.gmra.mrb[0].mxu0 %v1446
        %v1550 = vpop.f32.mrb[0].mxu0
        %v1551 = vadd.f32 0.0, %v1550
        %v1552 = vpop.f32.mrb[0].mxu0
        %v1553 = vpop.f32.mrb[0].mxu0
        %v1554 = vadd.f32 0.0, %v1553
        %v1555 = vpop.f32.mrb[0].mxu0
        %1556 = vmatprep.mubr.bf16.mxu0 0
        %1557 = vmatmul.mubr.bf16.gmra.mrb[0].mxu0 %v1447
        %v1558 = vpop.f32.mrb[0].mxu0
        %v1559 = vadd.f32 0.0, %v1558
        %v1560 = vpop.f32.mrb[0].mxu0
        %v1561 = vpop.f32.mrb[0].mxu0
        %v1562 = vadd.f32 0.0, %v1561
        %v1563 = vpop.f32.mrb[0].mxu0
        %1564 = vdwg.mxu0
        %v1565 = vadd.f32 %v1395, %v1535
        %v1566 = vadd.f32 %v1396, %v1538
        %v1567 = vadd.f32 %v1397, %v1543
        %v1568 = vadd.f32 %v1398, %v1546
        %v1569 = vadd.f32 %v1399, %v1551
        %v1570 = vadd.f32 %v1400, %v1554
        %v1571 = vadd.f32 %v1401, %v1559
        %v1572 = vadd.f32 %v1402, %v1562
        %v1573 = vld [vmem:[%s552] sm:$0xf]
        %v1574 = vld [vmem:[%s552 + $0x4] sm:$0x1]
        %v1575 = vld [vmem:[%s552 + $0x8] sm:$0xf]
        %v1576 = vld [vmem:[%s552 + $0xc] sm:$0x1]
        %v1577 = vld [vmem:[%s552 + $0x10] sm:$0xf]
        %v1578 = vld [vmem:[%s552 + $0x14] sm:$0x1]
        %v1579 = vld [vmem:[%s552 + $0x18] sm:$0xf]
        %v1580 = vld [vmem:[%s552 + $0x1c] sm:$0x1]
        %v1581 = vld [vmem:[%s552 + $0x20] sm:$0xf]
        %v1582 = vld [vmem:[%s552 + $0x24] sm:$0x1]
        %v1583 = vld [vmem:[%s552 + $0x28] sm:$0xf]
        %v1584 = vld [vmem:[%s552 + $0x2c] sm:$0x1]
        %v1585 = vld [vmem:[%s552 + $0x30] sm:$0xf]
        %v1586 = vld [vmem:[%s552 + $0x34] sm:$0x1]
        %v1587 = vld [vmem:[%s552 + $0x38] sm:$0xf]
        %v1588 = vld [vmem:[%s552 + $0x3c] sm:$0x1]
        %v1590 = vshrl.u32 %v1573, 16
        %v1592 = vrot.slane %v1590, 4
        %v1593 = vshll.u32 %v1573, 16
        %v1595 = vrot.slane %v1593, 5
        %v1596 = vor.u32 %v1592, %v1595
        %v1597 = vrot.slane %v1596, 4
        %v1599 = vshll.u32 %v1574, 16
        %v1601 = vrot.slane %v1599, 5
        %v1602 = vsel %vm794, %v1597, %v1601
        %v1604 = vshrl.u32 %v1575, 16
        %v1606 = vrot.slane %v1604, 4
        %v1607 = vshll.u32 %v1575, 16
        %v1609 = vrot.slane %v1607, 5
        %v1610 = vor.u32 %v1606, %v1609
        %v1611 = vrot.slane %v1610, 4
        %v1613 = vshll.u32 %v1576, 16
        %v1615 = vrot.slane %v1613, 5
        %v1616 = vsel %vm794, %v1611, %v1615
        %v1618 = vshrl.u32 %v1577, 16
        %v1620 = vrot.slane %v1618, 4
        %v1621 = vshll.u32 %v1577, 16
        %v1623 = vrot.slane %v1621, 5
        %v1624 = vor.u32 %v1620, %v1623
        %v1625 = vrot.slane %v1624, 4
        %v1627 = vshll.u32 %v1578, 16
        %v1629 = vrot.slane %v1627, 5
        %v1630 = vsel %vm794, %v1625, %v1629
        %v1632 = vshrl.u32 %v1579, 16
        %v1634 = vrot.slane %v1632, 4
        %v1635 = vshll.u32 %v1579, 16
        %v1637 = vrot.slane %v1635, 5
        %v1638 = vor.u32 %v1634, %v1637
        %v1639 = vrot.slane %v1638, 4
        %v1641 = vshll.u32 %v1580, 16
        %v1643 = vrot.slane %v1641, 5
        %v1644 = vsel %vm794, %v1639, %v1643
        %v1646 = vshrl.u32 %v1581, 16
        %v1648 = vrot.slane %v1646, 4
        %v1649 = vshll.u32 %v1581, 16
        %v1651 = vrot.slane %v1649, 5
        %v1652 = vor.u32 %v1648, %v1651
        %v1653 = vrot.slane %v1652, 4
        %v1655 = vshll.u32 %v1582, 16
        %v1657 = vrot.slane %v1655, 5
        %v1658 = vsel %vm794, %v1653, %v1657
        %v1660 = vshrl.u32 %v1583, 16
        %v1662 = vrot.slane %v1660, 4
        %v1663 = vshll.u32 %v1583, 16
        %v1665 = vrot.slane %v1663, 5
        %v1666 = vor.u32 %v1662, %v1665
        %v1667 = vrot.slane %v1666, 4
        %v1669 = vshll.u32 %v1584, 16
        %v1671 = vrot.slane %v1669, 5
        %v1672 = vsel %vm794, %v1667, %v1671
        %v1674 = vshrl.u32 %v1585, 16
        %v1676 = vrot.slane %v1674, 4
        %v1677 = vshll.u32 %v1585, 16
        %v1679 = vrot.slane %v1677, 5
        %v1680 = vor.u32 %v1676, %v1679
        %v1681 = vrot.slane %v1680, 4
        %v1683 = vshll.u32 %v1586, 16
        %v1685 = vrot.slane %v1683, 5
        %v1686 = vsel %vm794, %v1681, %v1685
        %v1688 = vshrl.u32 %v1587, 16
        %v1690 = vrot.slane %v1688, 4
        %v1691 = vshll.u32 %v1587, 16
        %v1693 = vrot.slane %v1691, 5
        %v1694 = vor.u32 %v1690, %v1693
        %v1695 = vrot.slane %v1694, 4
        %v1697 = vshll.u32 %v1588, 16
        %v1699 = vrot.slane %v1697, 5
        %v1700 = vsel %vm794, %v1695, %v1699
        %s1701 = scalar_lea.vmem %s3, 256
        %v1702 = vld [vmem:[%s1701] sm:$0xf]
        %v1703 = vld [vmem:[%s1701 + $0x4] sm:$0xf]
        %v1704 = vld [vmem:[%s1701 + $0x8] sm:$0xf]
        %v1705 = vld [vmem:[%s1701 + $0xc] sm:$0xf]
        %v1706 = vld [vmem:[%s1701 + $0x10] sm:$0xf]
        %v1707 = vld [vmem:[%s1701 + $0x14] sm:$0xf]
        %v1708 = vld [vmem:[%s1701 + $0x18] sm:$0xf]
        %v1709 = vld [vmem:[%s1701 + $0x1c] sm:$0xf]
        %v1710 = vld [vmem:[%s1701 + $0x20] sm:$0xf]
        %v1711 = vld [vmem:[%s1701 + $0x24] sm:$0xf]
        %v1712 = vld [vmem:[%s1701 + $0x28] sm:$0xf]
        %v1713 = vld [vmem:[%s1701 + $0x2c] sm:$0xf]
        %v1714 = vld [vmem:[%s1701 + $0x30] sm:$0xf]
        %v1715 = vld [vmem:[%s1701 + $0x34] sm:$0xf]
        %v1716 = vld [vmem:[%s1701 + $0x38] sm:$0xf]
        %v1717 = vld [vmem:[%s1701 + $0x3c] sm:$0xf]
        %v1718 = vunpack.c.l.b16 %v1602
        %v1719 = vunpack.c.l.b16 %v1616
        %v1720 = vunpack.c.l.b16 %v1630
        %v1721 = vunpack.c.l.b16 %v1644
        %v1722 = vunpack.c.l.b16 %v1658
        %v1723 = vunpack.c.l.b16 %v1672
        %v1724 = vunpack.c.l.b16 %v1686
        %v1725 = vunpack.c.l.b16 %v1700
        %v1726 = vpack.c.b16 %v1719, %v1718
        %v1727 = vpack.c.b16 %v1721, %v1720
        %v1728 = vpack.c.b16 %v1723, %v1722
        %v1729 = vpack.c.b16 %v1725, %v1724
        %v1750 = vunpack.c.l.b16 %v1702
        %v1751 = vunpack.c.l.b16 %v1703
        %v1752 = vunpack.c.l.b16 %v1704
        %v1753 = vunpack.c.l.b16 %v1705
        %v1754 = vunpack.c.l.b16 %v1706
        %v1755 = vunpack.c.l.b16 %v1707
        %v1756 = vunpack.c.l.b16 %v1708
        %v1757 = vunpack.c.l.b16 %v1709
        %v1758 = vunpack.c.l.b16 %v1710
        %v1759 = vunpack.c.l.b16 %v1711
        %v1760 = vunpack.c.l.b16 %v1712
        %v1761 = vunpack.c.l.b16 %v1713
        %v1762 = vunpack.c.l.b16 %v1714
        %v1763 = vunpack.c.l.b16 %v1715
        %v1764 = vunpack.c.l.b16 %v1716
        %v1765 = vunpack.c.l.b16 %v1717
        %v1766 = vpack.c.b16 %v1751, %v1750
        %v1767 = vpack.c.b16 %v1753, %v1752
        %v1768 = vpack.c.b16 %v1755, %v1754
        %v1769 = vpack.c.b16 %v1757, %v1756
        %v1770 = vpack.c.b16 %v1759, %v1758
        %v1771 = vpack.c.b16 %v1761, %v1760
        %v1772 = vpack.c.b16 %v1763, %v1762
        %v1773 = vpack.c.b16 %v1765, %v1764
        %1782 = vmatprep.subr.bf16.mxu0 0
        %1783 = vmatpush1.bf16.msra.mxu0 %v1766
        %1784 = vmatprep.subr.bf16.mxu0 0
        %1785 = vmatpush1.bf16.msra.mxu0 %v1767
        %1786 = vmatprep.subr.bf16.mxu0 0
        %1787 = vmatpush1.bf16.msra.mxu0 %v1768
        %1788 = vmatprep.subr.bf16.mxu0 0
        %1789 = vmatpush1.bf16.msra.mxu0 %v1769
        %1790 = vmatprep.subr.bf16.mxu0 0
        %1791 = vmatpush1.bf16.msra.mxu0 %v1770
        %1792 = vmatprep.subr.bf16.mxu0 0
        %1793 = vmatpush1.bf16.msra.mxu0 %v1771
        %1794 = vmatprep.subr.bf16.mxu0 0
        %1795 = vmatpush1.bf16.msra.mxu0 %v1772
        %1796 = vmatprep.subr.bf16.mxu0 0
        %1797 = vmatpush1.bf16.msra.mxu0 %v1773
        %1798 = vmatprep.subr.bf16.mxu0 0
        %1799 = vmatpush1.bf16.msra.mxu0 0
        %1800 = vmatprep.subr.bf16.mxu0 0
        %1801 = vmatpush1.bf16.msra.mxu0 0
        %1802 = vmatprep.subr.bf16.mxu0 0
        %1803 = vmatpush1.bf16.msra.mxu0 0
        %1804 = vmatprep.subr.bf16.mxu0 0
        %1805 = vmatpush1.bf16.msra.mxu0 0
        %1806 = vmatprep.subr.bf16.mxu0 0
        %1807 = vmatpush1.bf16.msra.mxu0 0
        %1808 = vmatprep.subr.bf16.mxu0 0
        %1809 = vmatpush1.bf16.msra.mxu0 0
        %1810 = vmatprep.subr.bf16.mxu0 0
        %1811 = vmatpush1.bf16.msra.mxu0 0
        %1812 = vmatprep.subr.bf16.mxu0 0
        %1813 = vmatpush1.bf16.msra.mxu0 0
        %1814 = vmatprep.mubr.bf16.mxu0 0
        %1815 = vmatmul.mubr.bf16.gmra.mrb[0].mxu0 %v1726
        %v1816 = vpop.f32.mrb[0].mxu0
        %v1817 = vadd.f32 0.0, %v1816
        %v1818 = vpop.f32.mrb[0].mxu0
        %v1819 = vpop.f32.mrb[0].mxu0
        %v1820 = vadd.f32 0.0, %v1819
        %v1821 = vpop.f32.mrb[0].mxu0
        %1822 = vmatprep.mubr.bf16.mxu0 0
        %1823 = vmatmul.mubr.bf16.gmra.mrb[0].mxu0 %v1727
        %v1824 = vpop.f32.mrb[0].mxu0
        %v1825 = vadd.f32 0.0, %v1824
        %v1826 = vpop.f32.mrb[0].mxu0
        %v1827 = vpop.f32.mrb[0].mxu0
        %v1828 = vadd.f32 0.0, %v1827
        %v1829 = vpop.f32.mrb[0].mxu0
        %1830 = vmatprep.mubr.bf16.mxu0 0
        %1831 = vmatmul.mubr.bf16.gmra.mrb[0].mxu0 %v1728
        %v1832 = vpop.f32.mrb[0].mxu0
        %v1833 = vadd.f32 0.0, %v1832
        %v1834 = vpop.f32.mrb[0].mxu0
        %v1835 = vpop.f32.mrb[0].mxu0
        %v1836 = vadd.f32 0.0, %v1835
        %v1837 = vpop.f32.mrb[0].mxu0
        %1838 = vmatprep.mubr.bf16.mxu0 0
        %1839 = vmatmul.mubr.bf16.gmra.mrb[0].mxu0 %v1729
        %v1840 = vpop.f32.mrb[0].mxu0
        %v1841 = vadd.f32 0.0, %v1840
        %v1842 = vpop.f32.mrb[0].mxu0
        %v1843 = vpop.f32.mrb[0].mxu0
        %v1844 = vadd.f32 0.0, %v1843
        %v1845 = vpop.f32.mrb[0].mxu0
        %1846 = vdwg.mxu0
        %v1847 = vadd.f32 %v1565, %v1817
        %v1848 = vadd.f32 %v1566, %v1820
        %v1849 = vadd.f32 %v1567, %v1825
        %v1850 = vadd.f32 %v1568, %v1828
        %v1851 = vadd.f32 %v1569, %v1833
        %v1852 = vadd.f32 %v1570, %v1836
        %v1853 = vadd.f32 %v1571, %v1841
        %v1854 = vadd.f32 %v1572, %v1844
        %v1855 = vld [vmem:[%s552] sm:$0xe]
        %v1856 = vld [vmem:[%s552 + $0x8] sm:$0xe]
        %v1857 = vld [vmem:[%s552 + $0x10] sm:$0xe]
        %v1858 = vld [vmem:[%s552 + $0x18] sm:$0xe]
        %v1859 = vld [vmem:[%s552 + $0x20] sm:$0xe]
        %v1860 = vld [vmem:[%s552 + $0x28] sm:$0xe]
        %v1861 = vld [vmem:[%s552 + $0x30] sm:$0xe]
        %v1862 = vld [vmem:[%s552 + $0x38] sm:$0xe]
        %v1879 = vrot.slane %v1855, 5
        %v1880 = vrot.slane %v1879, 4
        %v1881 = vrot.slane %v1574, 5
        %v1882 = vsel %vm1216, %v1880, %v1881
        %v1883 = vrot.slane %v1856, 5
        %v1884 = vrot.slane %v1883, 4
        %v1885 = vrot.slane %v1576, 5
        %v1886 = vsel %vm1216, %v1884, %v1885
        %v1887 = vrot.slane %v1857, 5
        %v1888 = vrot.slane %v1887, 4
        %v1889 = vrot.slane %v1578, 5
        %v1890 = vsel %vm1216, %v1888, %v1889
        %v1891 = vrot.slane %v1858, 5
        %v1892 = vrot.slane %v1891, 4
        %v1893 = vrot.slane %v1580, 5
        %v1894 = vsel %vm1216, %v1892, %v1893
        %v1895 = vrot.slane %v1859, 5
        %v1896 = vrot.slane %v1895, 4
        %v1897 = vrot.slane %v1582, 5
        %v1898 = vsel %vm1216, %v1896, %v1897
        %v1899 = vrot.slane %v1860, 5
        %v1900 = vrot.slane %v1899, 4
        %v1901 = vrot.slane %v1584, 5
        %v1902 = vsel %vm1216, %v1900, %v1901
        %v1903 = vrot.slane %v1861, 5
        %v1904 = vrot.slane %v1903, 4
        %v1905 = vrot.slane %v1586, 5
        %v1906 = vsel %vm1216, %v1904, %v1905
        %v1907 = vrot.slane %v1862, 5
        %v1908 = vrot.slane %v1907, 4
        %v1909 = vrot.slane %v1588, 5
        %v1910 = vsel %vm1216, %v1908, %v1909
        %s1911 = scalar_lea.vmem %s3, 320
        %v1912 = vld [vmem:[%s1911] sm:$0xf]
        %v1913 = vld [vmem:[%s1911 + $0x4] sm:$0xf]
        %v1914 = vld [vmem:[%s1911 + $0x8] sm:$0xf]
        %v1915 = vld [vmem:[%s1911 + $0xc] sm:$0xf]
        %v1916 = vld [vmem:[%s1911 + $0x10] sm:$0xf]
        %v1917 = vld [vmem:[%s1911 + $0x14] sm:$0xf]
        %v1918 = vld [vmem:[%s1911 + $0x18] sm:$0xf]
        %v1919 = vld [vmem:[%s1911 + $0x1c] sm:$0xf]
        %v1920 = vld [vmem:[%s1911 + $0x20] sm:$0xf]
        %v1921 = vld [vmem:[%s1911 + $0x24] sm:$0xf]
        %v1922 = vld [vmem:[%s1911 + $0x28] sm:$0xf]
        %v1923 = vld [vmem:[%s1911 + $0x2c] sm:$0xf]
        %v1924 = vld [vmem:[%s1911 + $0x30] sm:$0xf]
        %v1925 = vld [vmem:[%s1911 + $0x34] sm:$0xf]
        %v1926 = vld [vmem:[%s1911 + $0x38] sm:$0xf]
        %v1927 = vld [vmem:[%s1911 + $0x3c] sm:$0xf]
        %v1928 = vunpack.c.l.b16 %v1882
        %v1929 = vunpack.c.l.b16 %v1886
        %v1930 = vunpack.c.l.b16 %v1890
        %v1931 = vunpack.c.l.b16 %v1894
        %v1932 = vunpack.c.l.b16 %v1898
        %v1933 = vunpack.c.l.b16 %v1902
        %v1934 = vunpack.c.l.b16 %v1906
        %v1935 = vunpack.c.l.b16 %v1910
        %v1936 = vpack.c.b16 %v1929, %v1928
        %v1937 = vpack.c.b16 %v1931, %v1930
        %v1938 = vpack.c.b16 %v1933, %v1932
        %v1939 = vpack.c.b16 %v1935, %v1934
        %v1960 = vunpack.c.l.b16 %v1912
        %v1961 = vunpack.c.l.b16 %v1913
        %v1962 = vunpack.c.l.b16 %v1914
        %v1963 = vunpack.c.l.b16 %v1915
        %v1964 = vunpack.c.l.b16 %v1916
        %v1965 = vunpack.c.l.b16 %v1917
        %v1966 = vunpack.c.l.b16 %v1918
        %v1967 = vunpack.c.l.b16 %v1919
        %v1968 = vunpack.c.l.b16 %v1920
        %v1969 = vunpack.c.l.b16 %v1921
        %v1970 = vunpack.c.l.b16 %v1922
        %v1971 = vunpack.c.l.b16 %v1923
        %v1972 = vunpack.c.l.b16 %v1924
        %v1973 = vunpack.c.l.b16 %v1925
        %v1974 = vunpack.c.l.b16 %v1926
        %v1975 = vunpack.c.l.b16 %v1927
        %v1976 = vpack.c.b16 %v1961, %v1960
        %v1977 = vpack.c.b16 %v1963, %v1962
        %v1978 = vpack.c.b16 %v1965, %v1964
        %v1979 = vpack.c.b16 %v1967, %v1966
        %v1980 = vpack.c.b16 %v1969, %v1968
        %v1981 = vpack.c.b16 %v1971, %v1970
        %v1982 = vpack.c.b16 %v1973, %v1972
        %v1983 = vpack.c.b16 %v1975, %v1974
        %1992 = vmatprep.subr.bf16.mxu0 0
        %1993 = vmatpush1.bf16.msra.mxu0 %v1976
        %1994 = vmatprep.subr.bf16.mxu0 0
        %1995 = vmatpush1.bf16.msra.mxu0 %v1977
        %1996 = vmatprep.subr.bf16.mxu0 0
        %1997 = vmatpush1.bf16.msra.mxu0 %v1978
        %1998 = vmatprep.subr.bf16.mxu0 0
        %1999 = vmatpush1.bf16.msra.mxu0 %v1979
        %2000 = vmatprep.subr.bf16.mxu0 0
        %2001 = vmatpush1.bf16.msra.mxu0 %v1980
        %2002 = vmatprep.subr.bf16.mxu0 0
        %2003 = vmatpush1.bf16.msra.mxu0 %v1981
        %2004 = vmatprep.subr.bf16.mxu0 0
        %2005 = vmatpush1.bf16.msra.mxu0 %v1982
        %2006 = vmatprep.subr.bf16.mxu0 0
        %2007 = vmatpush1.bf16.msra.mxu0 %v1983
        %2008 = vmatprep.subr.bf16.mxu0 0
        %2009 = vmatpush1.bf16.msra.mxu0 0
        %2010 = vmatprep.subr.bf16.mxu0 0
        %2011 = vmatpush1.bf16.msra.mxu0 0
        %2012 = vmatprep.subr.bf16.mxu0 0
        %2013 = vmatpush1.bf16.msra.mxu0 0
        %2014 = vmatprep.subr.bf16.mxu0 0
        %2015 = vmatpush1.bf16.msra.mxu0 0
        %2016 = vmatprep.subr.bf16.mxu0 0
        %2017 = vmatpush1.bf16.msra.mxu0 0
        %2018 = vmatprep.subr.bf16.mxu0 0
        %2019 = vmatpush1.bf16.msra.mxu0 0
        %2020 = vmatprep.subr.bf16.mxu0 0
        %2021 = vmatpush1.bf16.msra.mxu0 0
        %2022 = vmatprep.subr.bf16.mxu0 0
        %2023 = vmatpush1.bf16.msra.mxu0 0
        %2024 = vmatprep.mubr.bf16.mxu0 0
        %2025 = vmatmul.mubr.bf16.gmra.mrb[0].mxu0 %v1936
        %v2026 = vpop.f32.mrb[0].mxu0
        %v2027 = vadd.f32 0.0, %v2026
        %v2028 = vpop.f32.mrb[0].mxu0
        %v2029 = vpop.f32.mrb[0].mxu0
        %v2030 = vadd.f32 0.0, %v2029
        %v2031 = vpop.f32.mrb[0].mxu0
        %2032 = vmatprep.mubr.bf16.mxu0 0
        %2033 = vmatmul.mubr.bf16.gmra.mrb[0].mxu0 %v1937
        %v2034 = vpop.f32.mrb[0].mxu0
        %v2035 = vadd.f32 0.0, %v2034
        %v2036 = vpop.f32.mrb[0].mxu0
        %v2037 = vpop.f32.mrb[0].mxu0
        %v2038 = vadd.f32 0.0, %v2037
        %v2039 = vpop.f32.mrb[0].mxu0
        %2040 = vmatprep.mubr.bf16.mxu0 0
        %2041 = vmatmul.mubr.bf16.gmra.mrb[0].mxu0 %v1938
        %v2042 = vpop.f32.mrb[0].mxu0
        %v2043 = vadd.f32 0.0, %v2042
        %v2044 = vpop.f32.mrb[0].mxu0
        %v2045 = vpop.f32.mrb[0].mxu0
        %v2046 = vadd.f32 0.0, %v2045
        %v2047 = vpop.f32.mrb[0].mxu0
        %2048 = vmatprep.mubr.bf16.mxu0 0
        %2049 = vmatmul.mubr.bf16.gmra.mrb[0].mxu0 %v1939
        %v2050 = vpop.f32.mrb[0].mxu0
        %v2051 = vadd.f32 0.0, %v2050
        %v2052 = vpop.f32.mrb[0].mxu0
        %v2053 = vpop.f32.mrb[0].mxu0
        %v2054 = vadd.f32 0.0, %v2053
        %v2055 = vpop.f32.mrb[0].mxu0
        %2056 = vdwg.mxu0
        %v2057 = vadd.f32 %v1847, %v2027
        %v2058 = vadd.f32 %v1848, %v2030
        %v2059 = vadd.f32 %v1849, %v2035
        %v2060 = vadd.f32 %v1850, %v2038
        %v2061 = vadd.f32 %v1851, %v2043
        %v2062 = vadd.f32 %v1852, %v2046
        %v2063 = vadd.f32 %v1853, %v2051
        %v2064 = vadd.f32 %v1854, %v2054
        %s2065 = scalar_lea.vmem [#allocation2], 16
        %v2066 = vld [vmem:[%s2065] sm:$0xf]
        %v2067 = vld [vmem:[%s2065 + $0x8] sm:$0xf]
        %v2068 = vld [vmem:[%s2065 + $0x10] sm:$0xf]
        %v2069 = vld [vmem:[%s2065 + $0x18] sm:$0xf]
        %v2070 = vld [vmem:[%s2065 + $0x20] sm:$0xf]
        %v2071 = vld [vmem:[%s2065 + $0x28] sm:$0xf]
        %v2072 = vld [vmem:[%s2065 + $0x30] sm:$0xf]
        %v2073 = vld [vmem:[%s2065 + $0x38] sm:$0xf]
        %s2074 = scalar_lea.vmem %s3, 384
        %v2075 = vld [vmem:[%s2074] sm:$0xf]
        %v2076 = vld [vmem:[%s2074 + $0x4] sm:$0xf]
        %v2077 = vld [vmem:[%s2074 + $0x8] sm:$0xf]
        %v2078 = vld [vmem:[%s2074 + $0xc] sm:$0xf]
        %v2079 = vld [vmem:[%s2074 + $0x10] sm:$0xf]
        %v2080 = vld [vmem:[%s2074 + $0x14] sm:$0xf]
        %v2081 = vld [vmem:[%s2074 + $0x18] sm:$0xf]
        %v2082 = vld [vmem:[%s2074 + $0x1c] sm:$0xf]
        %v2083 = vld [vmem:[%s2074 + $0x20] sm:$0xf]
        %v2084 = vld [vmem:[%s2074 + $0x24] sm:$0xf]
        %v2085 = vld [vmem:[%s2074 + $0x28] sm:$0xf]
        %v2086 = vld [vmem:[%s2074 + $0x2c] sm:$0xf]
        %v2087 = vld [vmem:[%s2074 + $0x30] sm:$0xf]
        %v2088 = vld [vmem:[%s2074 + $0x34] sm:$0xf]
        %v2089 = vld [vmem:[%s2074 + $0x38] sm:$0xf]
        %v2090 = vld [vmem:[%s2074 + $0x3c] sm:$0xf]
        %v2099 = vunpack.c.l.b16 %v2066
        %v2100 = vunpack.c.l.b16 %v2067
        %v2101 = vunpack.c.l.b16 %v2068
        %v2102 = vunpack.c.l.b16 %v2069
        %v2103 = vunpack.c.l.b16 %v2070
        %v2104 = vunpack.c.l.b16 %v2071
        %v2105 = vunpack.c.l.b16 %v2072
        %v2106 = vunpack.c.l.b16 %v2073
        %v2107 = vpack.c.b16 %v2100, %v2099
        %v2108 = vpack.c.b16 %v2102, %v2101
        %v2109 = vpack.c.b16 %v2104, %v2103
        %v2110 = vpack.c.b16 %v2106, %v2105
        %v2131 = vunpack.c.l.b16 %v2075
        %v2132 = vunpack.c.l.b16 %v2076
        %v2133 = vunpack.c.l.b16 %v2077
        %v2134 = vunpack.c.l.b16 %v2078
        %v2135 = vunpack.c.l.b16 %v2079
        %v2136 = vunpack.c.l.b16 %v2080
        %v2137 = vunpack.c.l.b16 %v2081
        %v2138 = vunpack.c.l.b16 %v2082
        %v2139 = vunpack.c.l.b16 %v2083
        %v2140 = vunpack.c.l.b16 %v2084
        %v2141 = vunpack.c.l.b16 %v2085
        %v2142 = vunpack.c.l.b16 %v2086
        %v2143 = vunpack.c.l.b16 %v2087
        %v2144 = vunpack.c.l.b16 %v2088
        %v2145 = vunpack.c.l.b16 %v2089
        %v2146 = vunpack.c.l.b16 %v2090
        %v2147 = vpack.c.b16 %v2132, %v2131
        %v2148 = vpack.c.b16 %v2134, %v2133
        %v2149 = vpack.c.b16 %v2136, %v2135
        %v2150 = vpack.c.b16 %v2138, %v2137
        %v2151 = vpack.c.b16 %v2140, %v2139
        %v2152 = vpack.c.b16 %v2142, %v2141
        %v2153 = vpack.c.b16 %v2144, %v2143
        %v2154 = vpack.c.b16 %v2146, %v2145
        %2163 = vmatprep.subr.bf16.mxu0 0
        %2164 = vmatpush1.bf16.msra.mxu0 %v2147
        %2165 = vmatprep.subr.bf16.mxu0 0
        %2166 = vmatpush1.bf16.msra.mxu0 %v2148
        %2167 = vmatprep.subr.bf16.mxu0 0
        %2168 = vmatpush1.bf16.msra.mxu0 %v2149
        %2169 = vmatprep.subr.bf16.mxu0 0
        %2170 = vmatpush1.bf16.msra.mxu0 %v2150
        %2171 = vmatprep.subr.bf16.mxu0 0
        %2172 = vmatpush1.bf16.msra.mxu0 %v2151
        %2173 = vmatprep.subr.bf16.mxu0 0
        %2174 = vmatpush1.bf16.msra.mxu0 %v2152
        %2175 = vmatprep.subr.bf16.mxu0 0
        %2176 = vmatpush1.bf16.msra.mxu0 %v2153
        %2177 = vmatprep.subr.bf16.mxu0 0
        %2178 = vmatpush1.bf16.msra.mxu0 %v2154
        %2179 = vmatprep.subr.bf16.mxu0 0
        %2180 = vmatpush1.bf16.msra.mxu0 0
        %2181 = vmatprep.subr.bf16.mxu0 0
        %2182 = vmatpush1.bf16.msra.mxu0 0
        %2183 = vmatprep.subr.bf16.mxu0 0
        %2184 = vmatpush1.bf16.msra.mxu0 0
        %2185 = vmatprep.subr.bf16.mxu0 0
        %2186 = vmatpush1.bf16.msra.mxu0 0
        %2187 = vmatprep.subr.bf16.mxu0 0
        %2188 = vmatpush1.bf16.msra.mxu0 0
        %2189 = vmatprep.subr.bf16.mxu0 0
        %2190 = vmatpush1.bf16.msra.mxu0 0
        %2191 = vmatprep.subr.bf16.mxu0 0
        %2192 = vmatpush1.bf16.msra.mxu0 0
        %2193 = vmatprep.subr.bf16.mxu0 0
        %2194 = vmatpush1.bf16.msra.mxu0 0
        %2195 = vmatprep.mubr.bf16.mxu0 0
        %2196 = vmatmul.mubr.bf16.gmra.mrb[0].mxu0 %v2107
        %v2197 = vpop.f32.mrb[0].mxu0
        %v2198 = vadd.f32 0.0, %v2197
        %v2199 = vpop.f32.mrb[0].mxu0
        %v2200 = vpop.f32.mrb[0].mxu0
        %v2201 = vadd.f32 0.0, %v2200
        %v2202 = vpop.f32.mrb[0].mxu0
        %2203 = vmatprep.mubr.bf16.mxu0 0
        %2204 = vmatmul.mubr.bf16.gmra.mrb[0].mxu0 %v2108
        %v2205 = vpop.f32.mrb[0].mxu0
        %v2206 = vadd.f32 0.0, %v2205
        %v2207 = vpop.f32.mrb[0].mxu0
        %v2208 = vpop.f32.mrb[0].mxu0
        %v2209 = vadd.f32 0.0, %v2208
        %v2210 = vpop.f32.mrb[0].mxu0
        %2211 = vmatprep.mubr.bf16.mxu0 0
        %2212 = vmatmul.mubr.bf16.gmra.mrb[0].mxu0 %v2109
        %v2213 = vpop.f32.mrb[0].mxu0
        %v2214 = vadd.f32 0.0, %v2213
        %v2215 = vpop.f32.mrb[0].mxu0
        %v2216 = vpop.f32.mrb[0].mxu0
        %v2217 = vadd.f32 0.0, %v2216
        %v2218 = vpop.f32.mrb[0].mxu0
        %2219 = vmatprep.mubr.bf16.mxu0 0
        %2220 = vmatmul.mubr.bf16.gmra.mrb[0].mxu0 %v2110
        %v2221 = vpop.f32.mrb[0].mxu0
        %v2222 = vadd.f32 0.0, %v2221
        %v2223 = vpop.f32.mrb[0].mxu0
        %v2224 = vpop.f32.mrb[0].mxu0
        %v2225 = vadd.f32 0.0, %v2224
        %v2226 = vpop.f32.mrb[0].mxu0
        %2227 = vdwg.mxu0
        %v2228 = vadd.f32 %v2057, %v2198
        %v2229 = vadd.f32 %v2058, %v2201
        %v2230 = vadd.f32 %v2059, %v2206
        %v2231 = vadd.f32 %v2060, %v2209
        %v2232 = vadd.f32 %v2061, %v2214
        %v2233 = vadd.f32 %v2062, %v2217
        %v2234 = vadd.f32 %v2063, %v2222
        %v2235 = vadd.f32 %v2064, %v2225
        %v2236 = vld [vmem:[%s2065] sm:$0xf]
        %v2237 = vld [vmem:[%s2065 + $0x4] sm:$0x1]
        %v2238 = vld [vmem:[%s2065 + $0x8] sm:$0xf]
        %v2239 = vld [vmem:[%s2065 + $0xc] sm:$0x1]
        %v2240 = vld [vmem:[%s2065 + $0x10] sm:$0xf]
        %v2241 = vld [vmem:[%s2065 + $0x14] sm:$0x1]
        %v2242 = vld [vmem:[%s2065 + $0x18] sm:$0xf]
        %v2243 = vld [vmem:[%s2065 + $0x1c] sm:$0x1]
        %v2244 = vld [vmem:[%s2065 + $0x20] sm:$0xf]
        %v2245 = vld [vmem:[%s2065 + $0x24] sm:$0x1]
        %v2246 = vld [vmem:[%s2065 + $0x28] sm:$0xf]
        %v2247 = vld [vmem:[%s2065 + $0x2c] sm:$0x1]
        %v2248 = vld [vmem:[%s2065 + $0x30] sm:$0xf]
        %v2249 = vld [vmem:[%s2065 + $0x34] sm:$0x1]
        %v2250 = vld [vmem:[%s2065 + $0x38] sm:$0xf]
        %v2251 = vld [vmem:[%s2065 + $0x3c] sm:$0x1]
        %v2253 = vshrl.u32 %v2236, 16
        %v2255 = vrot.slane %v2253, 4
        %v2256 = vshll.u32 %v2236, 16
        %v2258 = vrot.slane %v2256, 5
        %v2259 = vor.u32 %v2255, %v2258
        %v2260 = vrot.slane %v2259, 4
        %v2262 = vshll.u32 %v2237, 16
        %v2264 = vrot.slane %v2262, 5
        %v2265 = vsel %vm794, %v2260, %v2264
        %v2267 = vshrl.u32 %v2238, 16
        %v2269 = vrot.slane %v2267, 4
        %v2270 = vshll.u32 %v2238, 16
        %v2272 = vrot.slane %v2270, 5
        %v2273 = vor.u32 %v2269, %v2272
        %v2274 = vrot.slane %v2273, 4
        %v2276 = vshll.u32 %v2239, 16
        %v2278 = vrot.slane %v2276, 5
        %v2279 = vsel %vm794, %v2274, %v2278
        %v2281 = vshrl.u32 %v2240, 16
        %v2283 = vrot.slane %v2281, 4
        %v2284 = vshll.u32 %v2240, 16
        %v2286 = vrot.slane %v2284, 5
        %v2287 = vor.u32 %v2283, %v2286
        %v2288 = vrot.slane %v2287, 4
        %v2290 = vshll.u32 %v2241, 16
        %v2292 = vrot.slane %v2290, 5
        %v2293 = vsel %vm794, %v2288, %v2292
        %v2295 = vshrl.u32 %v2242, 16
        %v2297 = vrot.slane %v2295, 4
        %v2298 = vshll.u32 %v2242, 16
        %v2300 = vrot.slane %v2298, 5
        %v2301 = vor.u32 %v2297, %v2300
        %v2302 = vrot.slane %v2301, 4
        %v2304 = vshll.u32 %v2243, 16
        %v2306 = vrot.slane %v2304, 5
        %v2307 = vsel %vm794, %v2302, %v2306
        %v2309 = vshrl.u32 %v2244, 16
        %v2311 = vrot.slane %v2309, 4
        %v2312 = vshll.u32 %v2244, 16
        %v2314 = vrot.slane %v2312, 5
        %v2315 = vor.u32 %v2311, %v2314
        %v2316 = vrot.slane %v2315, 4
        %v2318 = vshll.u32 %v2245, 16
        %v2320 = vrot.slane %v2318, 5
        %v2321 = vsel %vm794, %v2316, %v2320
        %v2323 = vshrl.u32 %v2246, 16
        %v2325 = vrot.slane %v2323, 4
        %v2326 = vshll.u32 %v2246, 16
        %v2328 = vrot.slane %v2326, 5
        %v2329 = vor.u32 %v2325, %v2328
        %v2330 = vrot.slane %v2329, 4
        %v2332 = vshll.u32 %v2247, 16
        %v2334 = vrot.slane %v2332, 5
        %v2335 = vsel %vm794, %v2330, %v2334
        %v2337 = vshrl.u32 %v2248, 16
        %v2339 = vrot.slane %v2337, 4
        %v2340 = vshll.u32 %v2248, 16
        %v2342 = vrot.slane %v2340, 5
        %v2343 = vor.u32 %v2339, %v2342
        %v2344 = vrot.slane %v2343, 4
        %v2346 = vshll.u32 %v2249, 16
        %v2348 = vrot.slane %v2346, 5
        %v2349 = vsel %vm794, %v2344, %v2348
        %v2351 = vshrl.u32 %v2250, 16
        %v2353 = vrot.slane %v2351, 4
        %v2354 = vshll.u32 %v2250, 16
        %v2356 = vrot.slane %v2354, 5
        %v2357 = vor.u32 %v2353, %v2356
        %v2358 = vrot.slane %v2357, 4
        %v2360 = vshll.u32 %v2251, 16
        %v2362 = vrot.slane %v2360, 5
        %v2363 = vsel %vm794, %v2358, %v2362
        %s2364 = scalar_lea.vmem %s3, 448
        %v2365 = vld [vmem:[%s2364] sm:$0xf]
        %v2366 = vld [vmem:[%s2364 + $0x4] sm:$0xf]
        %v2367 = vld [vmem:[%s2364 + $0x8] sm:$0xf]
        %v2368 = vld [vmem:[%s2364 + $0xc] sm:$0xf]
        %v2369 = vld [vmem:[%s2364 + $0x10] sm:$0xf]
        %v2370 = vld [vmem:[%s2364 + $0x14] sm:$0xf]
        %v2371 = vld [vmem:[%s2364 + $0x18] sm:$0xf]
        %v2372 = vld [vmem:[%s2364 + $0x1c] sm:$0xf]
        %v2373 = vld [vmem:[%s2364 + $0x20] sm:$0xf]
        %v2374 = vld [vmem:[%s2364 + $0x24] sm:$0xf]
        %v2375 = vld [vmem:[%s2364 + $0x28] sm:$0xf]
        %v2376 = vld [vmem:[%s2364 + $0x2c] sm:$0xf]
        %v2377 = vld [vmem:[%s2364 + $0x30] sm:$0xf]
        %v2378 = vld [vmem:[%s2364 + $0x34] sm:$0xf]
        %v2379 = vld [vmem:[%s2364 + $0x38] sm:$0xf]
        %v2380 = vld [vmem:[%s2364 + $0x3c] sm:$0xf]
        %v2381 = vunpack.c.l.b16 %v2265
        %v2382 = vunpack.c.l.b16 %v2279
        %v2383 = vunpack.c.l.b16 %v2293
        %v2384 = vunpack.c.l.b16 %v2307
        %v2385 = vunpack.c.l.b16 %v2321
        %v2386 = vunpack.c.l.b16 %v2335
        %v2387 = vunpack.c.l.b16 %v2349
        %v2388 = vunpack.c.l.b16 %v2363
        %v2389 = vpack.c.b16 %v2382, %v2381
        %v2390 = vpack.c.b16 %v2384, %v2383
        %v2391 = vpack.c.b16 %v2386, %v2385
        %v2392 = vpack.c.b16 %v2388, %v2387
        %v2413 = vunpack.c.l.b16 %v2365
        %v2414 = vunpack.c.l.b16 %v2366
        %v2415 = vunpack.c.l.b16 %v2367
        %v2416 = vunpack.c.l.b16 %v2368
        %v2417 = vunpack.c.l.b16 %v2369
        %v2418 = vunpack.c.l.b16 %v2370
        %v2419 = vunpack.c.l.b16 %v2371
        %v2420 = vunpack.c.l.b16 %v2372
        %v2421 = vunpack.c.l.b16 %v2373
        %v2422 = vunpack.c.l.b16 %v2374
        %v2423 = vunpack.c.l.b16 %v2375
        %v2424 = vunpack.c.l.b16 %v2376
        %v2425 = vunpack.c.l.b16 %v2377
        %v2426 = vunpack.c.l.b16 %v2378
        %v2427 = vunpack.c.l.b16 %v2379
        %v2428 = vunpack.c.l.b16 %v2380
        %v2429 = vpack.c.b16 %v2414, %v2413
        %v2430 = vpack.c.b16 %v2416, %v2415
        %v2431 = vpack.c.b16 %v2418, %v2417
        %v2432 = vpack.c.b16 %v2420, %v2419
        %v2433 = vpack.c.b16 %v2422, %v2421
        %v2434 = vpack.c.b16 %v2424, %v2423
        %v2435 = vpack.c.b16 %v2426, %v2425
        %v2436 = vpack.c.b16 %v2428, %v2427
        %2445 = vmatprep.subr.bf16.mxu0 0
        %2446 = vmatpush1.bf16.msra.mxu0 %v2429
        %2447 = vmatprep.subr.bf16.mxu0 0
        %2448 = vmatpush1.bf16.msra.mxu0 %v2430
        %2449 = vmatprep.subr.bf16.mxu0 0
        %2450 = vmatpush1.bf16.msra.mxu0 %v2431
        %2451 = vmatprep.subr.bf16.mxu0 0
        %2452 = vmatpush1.bf16.msra.mxu0 %v2432
        %2453 = vmatprep.subr.bf16.mxu0 0
        %2454 = vmatpush1.bf16.msra.mxu0 %v2433
        %2455 = vmatprep.subr.bf16.mxu0 0
        %2456 = vmatpush1.bf16.msra.mxu0 %v2434
        %2457 = vmatprep.subr.bf16.mxu0 0
        %2458 = vmatpush1.bf16.msra.mxu0 %v2435
        %2459 = vmatprep.subr.bf16.mxu0 0
        %2460 = vmatpush1.bf16.msra.mxu0 %v2436
        %2461 = vmatprep.subr.bf16.mxu0 0
        %2462 = vmatpush1.bf16.msra.mxu0 0
        %2463 = vmatprep.subr.bf16.mxu0 0
        %2464 = vmatpush1.bf16.msra.mxu0 0
        %2465 = vmatprep.subr.bf16.mxu0 0
        %2466 = vmatpush1.bf16.msra.mxu0 0
        %2467 = vmatprep.subr.bf16.mxu0 0
        %2468 = vmatpush1.bf16.msra.mxu0 0
        %2469 = vmatprep.subr.bf16.mxu0 0
        %2470 = vmatpush1.bf16.msra.mxu0 0
        %2471 = vmatprep.subr.bf16.mxu0 0
        %2472 = vmatpush1.bf16.msra.mxu0 0
        %2473 = vmatprep.subr.bf16.mxu0 0
        %2474 = vmatpush1.bf16.msra.mxu0 0
        %2475 = vmatprep.subr.bf16.mxu0 0
        %2476 = vmatpush1.bf16.msra.mxu0 0
        %2477 = vmatprep.mubr.bf16.mxu0 0
        %2478 = vmatmul.mubr.bf16.gmra.mrb[0].mxu0 %v2389
        %v2479 = vpop.f32.mrb[0].mxu0
        %v2480 = vadd.f32 0.0, %v2479
        %v2481 = vpop.f32.mrb[0].mxu0
        %v2482 = vpop.f32.mrb[0].mxu0
        %v2483 = vadd.f32 0.0, %v2482
        %v2484 = vpop.f32.mrb[0].mxu0
        %2485 = vmatprep.mubr.bf16.mxu0 0
        %2486 = vmatmul.mubr.bf16.gmra.mrb[0].mxu0 %v2390
        %v2487 = vpop.f32.mrb[0].mxu0
        %v2488 = vadd.f32 0.0, %v2487
        %v2489 = vpop.f32.mrb[0].mxu0
        %v2490 = vpop.f32.mrb[0].mxu0
        %v2491 = vadd.f32 0.0, %v2490
        %v2492 = vpop.f32.mrb[0].mxu0
        %2493 = vmatprep.mubr.bf16.mxu0 0
        %2494 = vmatmul.mubr.bf16.gmra.mrb[0].mxu0 %v2391
        %v2495 = vpop.f32.mrb[0].mxu0
        %v2496 = vadd.f32 0.0, %v2495
        %v2497 = vpop.f32.mrb[0].mxu0
        %v2498 = vpop.f32.mrb[0].mxu0
        %v2499 = vadd.f32 0.0, %v2498
        %v2500 = vpop.f32.mrb[0].mxu0
        %2501 = vmatprep.mubr.bf16.mxu0 0
        %2502 = vmatmul.mubr.bf16.gmra.mrb[0].mxu0 %v2392
        %v2503 = vpop.f32.mrb[0].mxu0
        %v2504 = vadd.f32 0.0, %v2503
        %v2505 = vpop.f32.mrb[0].mxu0
        %v2506 = vpop.f32.mrb[0].mxu0
        %v2507 = vadd.f32 0.0, %v2506
        %v2508 = vpop.f32.mrb[0].mxu0
        %2509 = vdwg.mxu0
        %v2510 = vadd.f32 %v2228, %v2480
        %v2511 = vadd.f32 %v2229, %v2483
        %v2512 = vadd.f32 %v2230, %v2488
        %v2513 = vadd.f32 %v2231, %v2491
        %v2514 = vadd.f32 %v2232, %v2496
        %v2515 = vadd.f32 %v2233, %v2499
        %v2516 = vadd.f32 %v2234, %v2504
        %v2517 = vadd.f32 %v2235, %v2507
        %v2518 = vld [vmem:[%s2065] sm:$0xe]
        %v2519 = vld [vmem:[%s2065 + $0x8] sm:$0xe]
        %v2520 = vld [vmem:[%s2065 + $0x10] sm:$0xe]
        %v2521 = vld [vmem:[%s2065 + $0x18] sm:$0xe]
        %v2522 = vld [vmem:[%s2065 + $0x20] sm:$0xe]
        %v2523 = vld [vmem:[%s2065 + $0x28] sm:$0xe]
        %v2524 = vld [vmem:[%s2065 + $0x30] sm:$0xe]
        %v2525 = vld [vmem:[%s2065 + $0x38] sm:$0xe]
        %v2542 = vrot.slane %v2518, 5
        %v2543 = vrot.slane %v2542, 4
        %v2544 = vrot.slane %v2237, 5
        %v2545 = vsel %vm1216, %v2543, %v2544
        %v2546 = vrot.slane %v2519, 5
        %v2547 = vrot.slane %v2546, 4
        %v2548 = vrot.slane %v2239, 5
        %v2549 = vsel %vm1216, %v2547, %v2548
        %v2550 = vrot.slane %v2520, 5
        %v2551 = vrot.slane %v2550, 4
        %v2552 = vrot.slane %v2241, 5
        %v2553 = vsel %vm1216, %v2551, %v2552
        %v2554 = vrot.slane %v2521, 5
        %v2555 = vrot.slane %v2554, 4
        %v2556 = vrot.slane %v2243, 5
        %v2557 = vsel %vm1216, %v2555, %v2556
        %v2558 = vrot.slane %v2522, 5
        %v2559 = vrot.slane %v2558, 4
        %v2560 = vrot.slane %v2245, 5
        %v2561 = vsel %vm1216, %v2559, %v2560
        %v2562 = vrot.slane %v2523, 5
        %v2563 = vrot.slane %v2562, 4
        %v2564 = vrot.slane %v2247, 5
        %v2565 = vsel %vm1216, %v2563, %v2564
        %v2566 = vrot.slane %v2524, 5
        %v2567 = vrot.slane %v2566, 4
        %v2568 = vrot.slane %v2249, 5
        %v2569 = vsel %vm1216, %v2567, %v2568
        %v2570 = vrot.slane %v2525, 5
        %v2571 = vrot.slane %v2570, 4
        %v2572 = vrot.slane %v2251, 5
        %v2573 = vsel %vm1216, %v2571, %v2572
        %s2574 = scalar_lea.vmem %s3, 512
        %v2575 = vld [vmem:[%s2574] sm:$0xf]
        %v2576 = vld [vmem:[%s2574 + $0x4] sm:$0xf]
        %v2577 = vld [vmem:[%s2574 + $0x8] sm:$0xf]
        %v2578 = vld [vmem:[%s2574 + $0xc] sm:$0xf]
        %v2579 = vld [vmem:[%s2574 + $0x10] sm:$0xf]
        %v2580 = vld [vmem:[%s2574 + $0x14] sm:$0xf]
        %v2581 = vld [vmem:[%s2574 + $0x18] sm:$0xf]
        %v2582 = vld [vmem:[%s2574 + $0x1c] sm:$0xf]
        %v2583 = vld [vmem:[%s2574 + $0x20] sm:$0xf]
        %v2584 = vld [vmem:[%s2574 + $0x24] sm:$0xf]
        %v2585 = vld [vmem:[%s2574 + $0x28] sm:$0xf]
        %v2586 = vld [vmem:[%s2574 + $0x2c] sm:$0xf]
        %v2587 = vld [vmem:[%s2574 + $0x30] sm:$0xf]
        %v2588 = vld [vmem:[%s2574 + $0x34] sm:$0xf]
        %v2589 = vld [vmem:[%s2574 + $0x38] sm:$0xf]
        %v2590 = vld [vmem:[%s2574 + $0x3c] sm:$0xf]
        %v2591 = vunpack.c.l.b16 %v2545
        %v2592 = vunpack.c.l.b16 %v2549
        %v2593 = vunpack.c.l.b16 %v2553
        %v2594 = vunpack.c.l.b16 %v2557
        %v2595 = vunpack.c.l.b16 %v2561
        %v2596 = vunpack.c.l.b16 %v2565
        %v2597 = vunpack.c.l.b16 %v2569
        %v2598 = vunpack.c.l.b16 %v2573
        %v2599 = vpack.c.b16 %v2592, %v2591
        %v2600 = vpack.c.b16 %v2594, %v2593
        %v2601 = vpack.c.b16 %v2596, %v2595
        %v2602 = vpack.c.b16 %v2598, %v2597
        %v2623 = vunpack.c.l.b16 %v2575
        %v2624 = vunpack.c.l.b16 %v2576
        %v2625 = vunpack.c.l.b16 %v2577
        %v2626 = vunpack.c.l.b16 %v2578
        %v2627 = vunpack.c.l.b16 %v2579
        %v2628 = vunpack.c.l.b16 %v2580
        %v2629 = vunpack.c.l.b16 %v2581
        %v2630 = vunpack.c.l.b16 %v2582
        %v2631 = vunpack.c.l.b16 %v2583
        %v2632 = vunpack.c.l.b16 %v2584
        %v2633 = vunpack.c.l.b16 %v2585
        %v2634 = vunpack.c.l.b16 %v2586
        %v2635 = vunpack.c.l.b16 %v2587
        %v2636 = vunpack.c.l.b16 %v2588
        %v2637 = vunpack.c.l.b16 %v2589
        %v2638 = vunpack.c.l.b16 %v2590
        %v2639 = vpack.c.b16 %v2624, %v2623
        %v2640 = vpack.c.b16 %v2626, %v2625
        %v2641 = vpack.c.b16 %v2628, %v2627
        %v2642 = vpack.c.b16 %v2630, %v2629
        %v2643 = vpack.c.b16 %v2632, %v2631
        %v2644 = vpack.c.b16 %v2634, %v2633
        %v2645 = vpack.c.b16 %v2636, %v2635
        %v2646 = vpack.c.b16 %v2638, %v2637
        %2655 = vmatprep.subr.bf16.mxu0 0
        %2656 = vmatpush1.bf16.msra.mxu0 %v2639
        %2657 = vmatprep.subr.bf16.mxu0 0
        %2658 = vmatpush1.bf16.msra.mxu0 %v2640
        %2659 = vmatprep.subr.bf16.mxu0 0
        %2660 = vmatpush1.bf16.msra.mxu0 %v2641
        %2661 = vmatprep.subr.bf16.mxu0 0
        %2662 = vmatpush1.bf16.msra.mxu0 %v2642
        %2663 = vmatprep.subr.bf16.mxu0 0
        %2664 = vmatpush1.bf16.msra.mxu0 %v2643
        %2665 = vmatprep.subr.bf16.mxu0 0
        %2666 = vmatpush1.bf16.msra.mxu0 %v2644
        %2667 = vmatprep.subr.bf16.mxu0 0
        %2668 = vmatpush1.bf16.msra.mxu0 %v2645
        %2669 = vmatprep.subr.bf16.mxu0 0
        %2670 = vmatpush1.bf16.msra.mxu0 %v2646
        %2671 = vmatprep.subr.bf16.mxu0 0
        %2672 = vmatpush1.bf16.msra.mxu0 0
        %2673 = vmatprep.subr.bf16.mxu0 0
        %2674 = vmatpush1.bf16.msra.mxu0 0
        %2675 = vmatprep.subr.bf16.mxu0 0
        %2676 = vmatpush1.bf16.msra.mxu0 0
        %2677 = vmatprep.subr.bf16.mxu0 0
        %2678 = vmatpush1.bf16.msra.mxu0 0
        %2679 = vmatprep.subr.bf16.mxu0 0
        %2680 = vmatpush1.bf16.msra.mxu0 0
        %2681 = vmatprep.subr.bf16.mxu0 0
        %2682 = vmatpush1.bf16.msra.mxu0 0
        %2683 = vmatprep.subr.bf16.mxu0 0
        %2684 = vmatpush1.bf16.msra.mxu0 0
        %2685 = vmatprep.subr.bf16.mxu0 0
        %2686 = vmatpush1.bf16.msra.mxu0 0
        %2687 = vmatprep.mubr.bf16.mxu0 0
        %2688 = vmatmul.mubr.bf16.gmra.mrb[0].mxu0 %v2599
        %v2689 = vpop.f32.mrb[0].mxu0
        %v2690 = vadd.f32 0.0, %v2689
        %v2691 = vpop.f32.mrb[0].mxu0
        %v2692 = vpop.f32.mrb[0].mxu0
        %v2693 = vadd.f32 0.0, %v2692
        %v2694 = vpop.f32.mrb[0].mxu0
        %2695 = vmatprep.mubr.bf16.mxu0 0
        %2696 = vmatmul.mubr.bf16.gmra.mrb[0].mxu0 %v2600
        %v2697 = vpop.f32.mrb[0].mxu0
        %v2698 = vadd.f32 0.0, %v2697
        %v2699 = vpop.f32.mrb[0].mxu0
        %v2700 = vpop.f32.mrb[0].mxu0
        %v2701 = vadd.f32 0.0, %v2700
        %v2702 = vpop.f32.mrb[0].mxu0
        %2703 = vmatprep.mubr.bf16.mxu0 0
        %2704 = vmatmul.mubr.bf16.gmra.mrb[0].mxu0 %v2601
        %v2705 = vpop.f32.mrb[0].mxu0
        %v2706 = vadd.f32 0.0, %v2705
        %v2707 = vpop.f32.mrb[0].mxu0
        %v2708 = vpop.f32.mrb[0].mxu0
        %v2709 = vadd.f32 0.0, %v2708
        %v2710 = vpop.f32.mrb[0].mxu0
        %2711 = vmatprep.mubr.bf16.mxu0 0
        %2712 = vmatmul.mubr.bf16.gmra.mrb[0].mxu0 %v2602
        %v2713 = vpop.f32.mrb[0].mxu0
        %v2714 = vadd.f32 0.0, %v2713
        %v2715 = vpop.f32.mrb[0].mxu0
        %v2716 = vpop.f32.mrb[0].mxu0
        %v2717 = vadd.f32 0.0, %v2716
        %v2718 = vpop.f32.mrb[0].mxu0
        %2719 = vdwg.mxu0
        %v2720 = vadd.f32 %v2510, %v2690
        %v2721 = vadd.f32 %v2511, %v2693
        %v2722 = vadd.f32 %v2512, %v2698
        %v2723 = vadd.f32 %v2513, %v2701
        %v2724 = vadd.f32 %v2514, %v2706
        %v2725 = vadd.f32 %v2515, %v2709
        %v2726 = vadd.f32 %v2516, %v2714
        %v2727 = vadd.f32 %v2517, %v2717
        %v2728 = vld [vmem:[%s4] sm:$0x1]
        %v2730 = vlaneseq
        %v2731 = vshrl.u32 %v2730, 7
        %v2732 = vsub.s32 0, %v2731
        %v2733 = vrot.slane %v2728, %v2732
        %v2735 = vadd.f32 %v2720, %v2733
        %v2736 = vadd.f32 %v2721, %v2733
        %v2737 = vadd.f32 %v2722, %v2733
        %v2738 = vadd.f32 %v2723, %v2733
        %v2739 = vadd.f32 %v2724, %v2733
        %v2740 = vadd.f32 %v2725, %v2733
        %v2741 = vadd.f32 %v2726, %v2733
        %v2742 = vadd.f32 %v2727, %v2733
        %v2743 = vmax.f32 %v2735, 0.0
        %v2744 = vmax.f32 %v2736, 0.0
        %v2745 = vmax.f32 %v2737, 0.0
        %v2746 = vmax.f32 %v2738, 0.0
        %v2747 = vmax.f32 %v2739, 0.0
        %v2748 = vmax.f32 %v2740, 0.0
        %v2749 = vmax.f32 %v2741, 0.0
        %v2750 = vmax.f32 %v2742, 0.0
        %v2751 = vpack.c.bf16 %v2744, %v2743
        %v2752 = vpack.c.bf16 %v2746, %v2745
        %v2753 = vpack.c.bf16 %v2748, %v2747
        %v2754 = vpack.c.bf16 %v2750, %v2749
        %v2755 = vld [vmem:[%s5] sm:$0xf]
        %v2756 = vld [vmem:[%s5 + $0x4] sm:$0xf]
        %v2757 = vld [vmem:[%s5 + $0x8] sm:$0xf]
        %v2758 = vld [vmem:[%s5 + $0xc] sm:$0xf]
        %v2759 = vld [vmem:[%s5 + $0x10] sm:$0xf]
        %v2760 = vld [vmem:[%s5 + $0x14] sm:$0xf]
        %v2761 = vld [vmem:[%s5 + $0x18] sm:$0xf]
        %v2762 = vld [vmem:[%s5 + $0x1c] sm:$0xf]
        %v2763 = vld [vmem:[%s5 + $0x20] sm:$0xf]
        %v2764 = vld [vmem:[%s5 + $0x24] sm:$0xf]
        %v2765 = vld [vmem:[%s5 + $0x28] sm:$0xf]
        %v2766 = vld [vmem:[%s5 + $0x2c] sm:$0xf]
        %v2767 = vld [vmem:[%s5 + $0x30] sm:$0xf]
        %v2768 = vld [vmem:[%s5 + $0x34] sm:$0xf]
        %v2769 = vld [vmem:[%s5 + $0x38] sm:$0xf]
        %v2770 = vld [vmem:[%s5 + $0x3c] sm:$0xf]
        %v2771 = vld [vmem:[%s6] sm:$0x1]
        %v2773 = vlaneseq
        %v2774 = vshrl.u32 %v2773, 7
        %v2775 = vsub.s32 0, %v2774
        %v2776 = vrot.slane %v2771, %v2775
        %v2794 = vunpack.c.l.b16 %v2755
        %v2795 = vunpack.c.l.b16 %v2756
        %v2796 = vunpack.c.l.b16 %v2757
        %v2797 = vunpack.c.l.b16 %v2758
        %v2798 = vunpack.c.l.b16 %v2759
        %v2799 = vunpack.c.l.b16 %v2760
        %v2800 = vunpack.c.l.b16 %v2761
        %v2801 = vunpack.c.l.b16 %v2762
        %v2802 = vunpack.c.l.b16 %v2763
        %v2803 = vunpack.c.l.b16 %v2764
        %v2804 = vunpack.c.l.b16 %v2765
        %v2805 = vunpack.c.l.b16 %v2766
        %v2806 = vunpack.c.l.b16 %v2767
        %v2807 = vunpack.c.l.b16 %v2768
        %v2808 = vunpack.c.l.b16 %v2769
        %v2809 = vunpack.c.l.b16 %v2770
        %v2810 = vpack.c.b16 %v2795, %v2794
        %v2811 = vpack.c.b16 %v2797, %v2796
        %v2812 = vpack.c.b16 %v2799, %v2798
        %v2813 = vpack.c.b16 %v2801, %v2800
        %v2814 = vpack.c.b16 %v2803, %v2802
        %v2815 = vpack.c.b16 %v2805, %v2804
        %v2816 = vpack.c.b16 %v2807, %v2806
        %v2817 = vpack.c.b16 %v2809, %v2808
        %2826 = vmatprep.subr.bf16.mxu0 0
        %2827 = vmatpush1.bf16.msra.mxu0 %v2810
        %2828 = vmatprep.subr.bf16.mxu0 0
        %2829 = vmatpush1.bf16.msra.mxu0 %v2811
        %2830 = vmatprep.subr.bf16.mxu0 0
        %2831 = vmatpush1.bf16.msra.mxu0 %v2812
        %2832 = vmatprep.subr.bf16.mxu0 0
        %2833 = vmatpush1.bf16.msra.mxu0 %v2813
        %2834 = vmatprep.subr.bf16.mxu0 0
        %2835 = vmatpush1.bf16.msra.mxu0 %v2814
        %2836 = vmatprep.subr.bf16.mxu0 0
        %2837 = vmatpush1.bf16.msra.mxu0 %v2815
        %2838 = vmatprep.subr.bf16.mxu0 0
        %2839 = vmatpush1.bf16.msra.mxu0 %v2816
        %2840 = vmatprep.subr.bf16.mxu0 0
        %2841 = vmatpush1.bf16.msra.mxu0 %v2817
        %2842 = vmatprep.subr.bf16.mxu0 0
        %2843 = vmatpush1.bf16.msra.mxu0 0
        %2844 = vmatprep.subr.bf16.mxu0 0
        %2845 = vmatpush1.bf16.msra.mxu0 0
        %2846 = vmatprep.subr.bf16.mxu0 0
        %2847 = vmatpush1.bf16.msra.mxu0 0
        %2848 = vmatprep.subr.bf16.mxu0 0
        %2849 = vmatpush1.bf16.msra.mxu0 0
        %2850 = vmatprep.subr.bf16.mxu0 0
        %2851 = vmatpush1.bf16.msra.mxu0 0
        %2852 = vmatprep.subr.bf16.mxu0 0
        %2853 = vmatpush1.bf16.msra.mxu0 0
        %2854 = vmatprep.subr.bf16.mxu0 0
        %2855 = vmatpush1.bf16.msra.mxu0 0
        %2856 = vmatprep.subr.bf16.mxu0 0
        %2857 = vmatpush1.bf16.msra.mxu0 0
        %2858 = vmatprep.mubr.bf16.mxu0 0
        %2859 = vmatmul.mubr.bf16.gmra.mrb[0].mxu0 %v2751
        %v2860 = vpop.f32.mrb[0].mxu0
        %v2861 = vadd.f32 %v2776, %v2860
        %v2862 = vpop.f32.mrb[0].mxu0
        %v2863 = vpop.f32.mrb[0].mxu0
        %v2864 = vadd.f32 %v2776, %v2863
        %v2865 = vpop.f32.mrb[0].mxu0
        %2866 = vmatprep.mubr.bf16.mxu0 0
        %2867 = vmatmul.mubr.bf16.gmra.mrb[0].mxu0 %v2752
        %v2868 = vpop.f32.mrb[0].mxu0
        %v2869 = vadd.f32 %v2776, %v2868
        %v2870 = vpop.f32.mrb[0].mxu0
        %v2871 = vpop.f32.mrb[0].mxu0
        %v2872 = vadd.f32 %v2776, %v2871
        %v2873 = vpop.f32.mrb[0].mxu0
        %2874 = vmatprep.mubr.bf16.mxu0 0
        %2875 = vmatmul.mubr.bf16.gmra.mrb[0].mxu0 %v2753
        %v2876 = vpop.f32.mrb[0].mxu0
        %v2877 = vadd.f32 %v2776, %v2876
        %v2878 = vpop.f32.mrb[0].mxu0
        %v2879 = vpop.f32.mrb[0].mxu0
        %v2880 = vadd.f32 %v2776, %v2879
        %v2881 = vpop.f32.mrb[0].mxu0
        %2882 = vmatprep.mubr.bf16.mxu0 0
        %2883 = vmatmul.mubr.bf16.gmra.mrb[0].mxu0 %v2754
        %v2884 = vpop.f32.mrb[0].mxu0
        %v2885 = vadd.f32 %v2776, %v2884
        %v2886 = vpop.f32.mrb[0].mxu0
        %v2887 = vpop.f32.mrb[0].mxu0
        %v2888 = vadd.f32 %v2776, %v2887
        %v2889 = vpop.f32.mrb[0].mxu0
        %2890 = vdwg.mxu0
        %v2891 = vmax.f32 %v2861, 0.0
        %v2892 = vmax.f32 %v2864, 0.0
        %v2893 = vmax.f32 %v2869, 0.0
        %v2894 = vmax.f32 %v2872, 0.0
        %v2895 = vmax.f32 %v2877, 0.0
        %v2896 = vmax.f32 %v2880, 0.0
        %v2897 = vmax.f32 %v2885, 0.0
        %v2898 = vmax.f32 %v2888, 0.0
        %2899 = vst [vmem:[%s369] sm:$0xff] %v2891
        %2900 = vst [vmem:[%s369 + $0x8] sm:$0xff] %v2892
        %2901 = vst [vmem:[%s369 + $0x10] sm:$0xff] %v2893
        %2902 = vst [vmem:[%s369 + $0x18] sm:$0xff] %v2894
        %2903 = vst [vmem:[%s369 + $0x20] sm:$0xff] %v2895
        %2904 = vst [vmem:[%s369 + $0x28] sm:$0xff] %v2896
        %2905 = vst [vmem:[%s369 + $0x30] sm:$0xff] %v2897
        %2906 = vst [vmem:[%s369 + $0x38] sm:$0xff] %v2898
        %v2907 = vadd.f32 %v2891, %v2892
        %v2908 = vadd.f32 %v2907, %v2893
        %v2909 = vadd.f32 %v2908, %v2894
        %v2910 = vadd.f32 %v2909, %v2895
        %v2911 = vadd.f32 %v2910, %v2896
        %v2912 = vadd.f32 %v2911, %v2897
        %v2913 = vadd.f32 %v2912, %v2898
        %v2914 = vrot.slane %v2913, 4
        %v2915 = vadd.f32 %v2913, %v2914
        %v2916 = vrot.slane %v2915, 2
        %v2917 = vadd.f32 %v2915, %v2916
        %v2918 = vrot.slane %v2917, 1
        %v2919 = vadd.f32 %v2917, %v2918
        %v2920 = vrcp.pop 64.0
        %v2921 = vmul.f32 %v2919, %v2920
        %v2922 = vpack.c.bf16 %v2921, %v2921
        %v2923 = vld [vmem:[%s7] sm:$0xf]
        %v2924 = vld [vmem:[%s7 + $0x4] sm:$0xf]
        %v2925 = vld [vmem:[%s7 + $0x8] sm:$0xf]
        %v2926 = vld [vmem:[%s7 + $0xc] sm:$0xf]
        %v2927 = vld [vmem:[%s7 + $0x10] sm:$0xf]
        %v2928 = vld [vmem:[%s7 + $0x14] sm:$0xf]
        %v2929 = vld [vmem:[%s7 + $0x18] sm:$0xf]
        %v2930 = vld [vmem:[%s7 + $0x1c] sm:$0xf]
        %v2931 = vld [vmem:[%s7 + $0x20] sm:$0xf]
        %v2932 = vld [vmem:[%s7 + $0x24] sm:$0xf]
        %v2933 = vld [vmem:[%s7 + $0x28] sm:$0xf]
        %v2934 = vld [vmem:[%s7 + $0x2c] sm:$0xf]
        %v2935 = vld [vmem:[%s7 + $0x30] sm:$0xf]
        %v2936 = vld [vmem:[%s7 + $0x34] sm:$0xf]
        %v2937 = vld [vmem:[%s7 + $0x38] sm:$0xf]
        %v2938 = vld [vmem:[%s7 + $0x3c] sm:$0xf]
        %v2939 = vld [vmem:[%s8] sm:$0x1]
        %v2956 = vunpack.c.l.b16 %v2923
        %v2957 = vunpack.c.l.b16 %v2924
        %v2958 = vunpack.c.l.b16 %v2925
        %v2959 = vunpack.c.l.b16 %v2926
        %v2960 = vunpack.c.l.b16 %v2927
        %v2961 = vunpack.c.l.b16 %v2928
        %v2962 = vunpack.c.l.b16 %v2929
        %v2963 = vunpack.c.l.b16 %v2930
        %v2964 = vunpack.c.l.b16 %v2931
        %v2965 = vunpack.c.l.b16 %v2932
        %v2966 = vunpack.c.l.b16 %v2933
        %v2967 = vunpack.c.l.b16 %v2934
        %v2968 = vunpack.c.l.b16 %v2935
        %v2969 = vunpack.c.l.b16 %v2936
        %v2970 = vunpack.c.l.b16 %v2937
        %v2971 = vunpack.c.l.b16 %v2938
        %v2972 = vpack.c.b16 %v2957, %v2956
        %v2973 = vpack.c.b16 %v2959, %v2958
        %v2974 = vpack.c.b16 %v2961, %v2960
        %v2975 = vpack.c.b16 %v2963, %v2962
        %v2976 = vpack.c.b16 %v2965, %v2964
        %v2977 = vpack.c.b16 %v2967, %v2966
        %v2978 = vpack.c.b16 %v2969, %v2968
        %v2979 = vpack.c.b16 %v2971, %v2970
        %2988 = vmatprep.subr.bf16.mxu0 0
        %2989 = vmatpush1.bf16.msra.mxu0 %v2972
        %2990 = vmatprep.subr.bf16.mxu0 0
        %2991 = vmatpush1.bf16.msra.mxu0 %v2973
        %2992 = vmatprep.subr.bf16.mxu0 0
        %2993 = vmatpush1.bf16.msra.mxu0 %v2974
        %2994 = vmatprep.subr.bf16.mxu0 0
        %2995 = vmatpush1.bf16.msra.mxu0 %v2975
        %2996 = vmatprep.subr.bf16.mxu0 0
        %2997 = vmatpush1.bf16.msra.mxu0 %v2976
        %2998 = vmatprep.subr.bf16.mxu0 0
        %2999 = vmatpush1.bf16.msra.mxu0 %v2977
        %3000 = vmatprep.subr.bf16.mxu0 0
        %3001 = vmatpush1.bf16.msra.mxu0 %v2978
        %3002 = vmatprep.subr.bf16.mxu0 0
        %3003 = vmatpush1.bf16.msra.mxu0 %v2979
        %3004 = vmatprep.subr.bf16.mxu0 0
        %3005 = vmatpush1.bf16.msra.mxu0 0
        %3006 = vmatprep.subr.bf16.mxu0 0
        %3007 = vmatpush1.bf16.msra.mxu0 0
        %3008 = vmatprep.subr.bf16.mxu0 0
        %3009 = vmatpush1.bf16.msra.mxu0 0
        %3010 = vmatprep.subr.bf16.mxu0 0
        %3011 = vmatpush1.bf16.msra.mxu0 0
        %3012 = vmatprep.subr.bf16.mxu0 0
        %3013 = vmatpush1.bf16.msra.mxu0 0
        %3014 = vmatprep.subr.bf16.mxu0 0
        %3015 = vmatpush1.bf16.msra.mxu0 0
        %3016 = vmatprep.subr.bf16.mxu0 0
        %3017 = vmatpush1.bf16.msra.mxu0 0
        %3018 = vmatprep.subr.bf16.mxu0 0
        %3019 = vmatpush1.bf16.msra.mxu0 0
        %3020 = vmatprep.mubr.bf16.mxu0 0
        %3021 = vmatmul.mubr.bf16.gmra.mrb[0].mxu0 %v2922
        %v3022 = vpop.f32.mrb[0].mxu0
        %v3023 = vadd.f32 %v2939, %v3022
        %v3024 = vpop.f32.mrb[0].mxu0
        %v3025 = vpop.f32.mrb[0].mxu0
        %v3026 = vpop.f32.mrb[0].mxu0
        %3027 = vdwg.mxu0
        %3028 = vst [vmem:[%s359] sm:$0x1] %v3023
        %p3029 = scmp.lt.s32.totalorder %s25, 1
        %s3030 = scalar_select %p3029, %s25, 1
        %s3031 = smul.addr %s3030, 8
        %s3032 = smul.addr %s3031, 8
        %s3033 = scalar_lea.vmem %s9, %s3032
        %s3034 = sand.u32 %s253, 1
        %s3035 = scalar_lea.sflag [#allocation4], %s3034
        %s3036 = sand.u32 %s253, 1
        %s3037 = scalar_lea.vmem [#allocation3], %s3036
        // Predicated region
        $region57: #{simkd_forward.1} parent=55 // pred_check
          %p3038 = pneg %p237
        $region58: #{simkd_forward.1} parent=55 // pred_check_branch
          %3040 = sbr.rel (%p3038) target = $region60
        $region59: #{simkd_forward.1} parent=55 // pred_region
          _
        $region60: #{simkd_forward.1} parent=55 // pred_fallthru
          _
        // Predicated region
        $region61: #{simkd_forward.1} parent=55 // pred_check
          %p3041 = pneg %p263
        $region62: #{simkd_forward.1} parent=55 // pred_check_branch
          %3043 = sbr.rel (%p3041) target = $region64
        $region63: #{simkd_forward.1} parent=55 // pred_region
          %s3045 = ssub.s32 16, 16
          %3046 = vsyncadd %s3035, %s3045
          %s3047 = smul.addr %s25, 16
          %s3048 = scalar_lea.hbm %s10, %s3047
          %s3050 = sshll.u32 %s3037, 4
          %s3051 = int_to_ptr.vmem [resolvable:$true] %s3050
          %3053 = dma.vmem_to_hbm [thread:$0]  %s3051, 16, %s3048, %s3035
        $region64: #{simkd_forward.1} parent=55 // pred_fallthru
          _
      $region56: #{simkd_forward.1} parent=5 // pred_fallthru
        _
      %p3054 = scmp.le.s32.totalorder 2, %s20
      // Predicated region
      $region65: #{simkd_forward.1} parent=5 // pred_check
        %p3055 = pneg %p3054
      $region66: #{simkd_forward.1} parent=5 // pred_check_branch
        %3057 = sbr.rel (%p3055) target = $region68
      $region67: #{simkd_forward.1} parent=5 // pred_region
        %s3058 = ssub.s32 %s20, 2
        // Predicated region
        $region69: #{simkd_forward.1} parent=67 // pred_check
          %p3059 = pneg %p243
        $region70: #{simkd_forward.1} parent=67 // pred_check_branch
          %3061 = sbr.rel (%p3059) target = $region72
        $region71: #{simkd_forward.1} parent=67 // pred_region
          %p3062 = scmp.lt.s32.totalorder %s26, 1
          %s3063 = scalar_select %p3062, %s26, 1
          %s3064 = smul.addr %s3063, 8
          %s3065 = smul.addr %s3064, 8
          %s3066 = scalar_lea.vmem %s9, %s3065
        $region72: #{simkd_forward.1} parent=67 // pred_fallthru
          _
        // Predicated region
        $region73: #{simkd_forward.1} parent=67 // pred_check
          %p3067 = pneg %p269
        $region74: #{simkd_forward.1} parent=67 // pred_check_branch
          %3069 = sbr.rel (%p3067) target = $region76
        $region75: #{simkd_forward.1} parent=67 // pred_region
          %s3070 = sand.u32 %s254, 1
          %s3071 = scalar_lea.sflag [#allocation4], %s3070
          %s3072 = sand.u32 %s254, 1
          %s3073 = scalar_lea.vmem [#allocation3], %s3072
          %3074 = dma.done %s3071, 16
        $region76: #{simkd_forward.1} parent=67 // pred_fallthru
          _
      $region68: #{simkd_forward.1} parent=5 // pred_fallthru
        _
    $region6: #{simkd_forward.1} parent=1 // loop_footer
      %s24 = sadd.s32 1, %s20
    $region7: #{simkd_forward.1} parent=1 // loop_footer_branch
      %19 = sbr.rel target = $region3
    $region8: #{simkd_forward.1} parent=1 // loop_exit
      _
    %3075 = vsyncpa [#allocation4], 1
    %s3076 = scalar_lea.sflag [#allocation4], 1
    %3077 = vsyncpa %s3076, 1

</llo_original>
